<compile_context>
chip_gen: v5e
topology: v5e:2x2
jax: 0.10.0
libtpu: 0.0.40
codegen_flags: <defaults>
</compile_context>

<pallas_src>
import functools

import jax
import jax.numpy as jnp
from jax import lax
from jax.experimental import pallas as pl
from jax.experimental.pallas import tpu as pltpu

EPS = 1e-5
LANE = 128                      # channel slab width (lane-dense loads/stores)
TM = 256                        # pixel rows per grid tile; 512-2048 for production shapes
_VMEM_LIMIT = 32 * 1024 * 1024  # safe on v5e / v6e / v7x


# ----------------------- pass 1: conv3x3 + BN partial stats -----------------------
def _conv_stats_kernel(x_hbm, w_ref, m_ref, y_ref, st_ref, xbuf, sem,
                       *, tm, off, lead, taps):
    """3x3 conv over flattened padded pixel rows + per-tile BN partial statistics.

    x_hbm : (lead + Mp_r + lead, LANE) f32 slab left in HBM (manual halo DMA)
    w_ref : (9, LANE, LANE) f32 per-tap weights (zero outside [:Cin, :Cout])
    m_ref : (tm, 1)    f32 row-validity mask for this tile
    y_ref : (tm, LANE) conv output tile (doubles as the f32 accumulator)
    st_ref: (8, LANE)  per-tile stats block (row 0 = sum, row 1 = sum of squares)
    xbuf  : (tm + 2*off, LANE) VMEM scratch: row tile + halo
    """
    i = pl.program_id(0)
    tin = tm + 2 * off

    # Fetch this tile's rows plus an `off`-row halo on each side.  The copy is
    # self-contained per step, so the grid axis stays "parallel" (megacore safe);
    # Pallas still overlaps it with the previous step's output write-back DMA.
    cp = pltpu.make_async_copy(
        x_hbm.at[pl.ds(i * tm + (lead - off), tin)], xbuf, sem)
    cp.start()
    cp.wait()

    # 9 statically shifted matmuls instead of im2col: tap (dh, dw) of the 3x3 kernel
    # is a row shift of dh*(W+2)+dw in the flattened padded layout.
    y_ref[...] = jnp.zeros_like(y_ref)
    for t, o in enumerate(taps):
        y_ref[...] += jnp.dot(xbuf[off + o: off + o + tm, :], w_ref[t],
                              preferred_element_type=jnp.float32)

    # One-pass partial batch statistics over the *valid* rows of this tile only
    # (spatial-pad / tail rows are excluded by the mask); reduced across tiles in JAX.
    y = y_ref[...]
    ym = y * m_ref[...]
    st_ref[...] = jnp.zeros_like(st_ref)
    st_ref[0:1, :] = jnp.sum(ym, axis=0, keepdims=True)
    st_ref[1:2, :] = jnp.sum(ym * y, axis=0, keepdims=True)


def _conv_pass(x_slab, w9, mask, *, n_tiles, off, taps):
    mp_r = n_tiles * TM
    kernel = functools.partial(_conv_stats_kernel, tm=TM, off=off, lead=TM, taps=taps)
    return pl.pallas_call(
        kernel,
        grid=(n_tiles,),
        in_specs=[
            pl.BlockSpec(memory_space=pl.ANY),                    # x slab stays in HBM
            pl.BlockSpec((9, LANE, LANE), lambda i: (0, 0, 0)),   # weights (fetched once)
            pl.BlockSpec((TM, 1), lambda i: (i, 0)),              # row-validity mask
        ],
        out_specs=[
            pl.BlockSpec((TM, LANE), lambda i: (i, 0)),           # conv output tile
            pl.BlockSpec((None, 8, LANE), lambda i: (i, 0, 0)),   # per-tile stats
        ],
        out_shape=[
            jax.ShapeDtypeStruct((mp_r, LANE), jnp.float32),
            jax.ShapeDtypeStruct((n_tiles, 8, LANE), jnp.float32),
        ],
        scratch_shapes=[
            pltpu.VMEM((TM + 2 * off, LANE), jnp.float32),
            pltpu.SemaphoreType.DMA,
        ],
        compiler_params=pltpu.CompilerParams(
            dimension_semantics=("parallel",),
            vmem_limit_bytes=_VMEM_LIMIT),
    )(x_slab, w9, mask)


# ----------------------- pass 2: normalize + ReLU (tiled, parallel) ----------------
def _bn_relu_kernel(y_ref, s_ref, b_ref, m_ref, o_ref):
    j = pl.program_id(0)
    edge = jnp.logical_or(j == 0, j == pl.num_programs(0) - 1)

    @pl.when(edge)
    def _():
        # Lead / tail halo rows of the output slab: must be zero for the next conv.
        o_ref[...] = jnp.zeros_like(o_ref)

    @pl.when(jnp.logical_not(edge))
    def _():
        y = y_ref[...]
        # Mask re-zeroes spatial-padding rows so the slab can feed the next conv directly.
        o_ref[...] = jnp.maximum(y * s_ref[...] + b_ref[...], 0.0) * m_ref[...]


def _bn_relu_pass(y, scale, shift, mask, *, n_tiles):
    core = lambda j: (jnp.maximum(jnp.minimum(j - 1, n_tiles - 1), 0), 0)
    return pl.pallas_call(
        _bn_relu_kernel,
        grid=(n_tiles + 2,),   # +2 edge steps write the zero lead/tail halo rows
        in_specs=[
            pl.BlockSpec((TM, LANE), core),
            pl.BlockSpec((1, LANE), lambda j: (0, 0)),
            pl.BlockSpec((1, LANE), lambda j: (0, 0)),
            pl.BlockSpec((TM, 1), core),
        ],
        out_specs=pl.BlockSpec((TM, LANE), lambda j: (j, 0)),
        out_shape=jax.ShapeDtypeStruct(((n_tiles + 2) * TM, LANE), jnp.float32),
        compiler_params=pltpu.CompilerParams(
            dimension_semantics=("parallel",),
            vmem_limit_bytes=_VMEM_LIMIT),
    )(y, scale, shift, mask)


# --------------------------------- JAX glue ---------------------------------------
def _pack_weights(w_hwio):
    _, _, cin, cout = w_hwio.shape
    w = jnp.zeros((9, LANE, LANE), jnp.float32)
    return w.at[:, :cin, :cout].set(w_hwio.reshape(9, cin, cout).astype(jnp.float32))


def _pack_vec(v):
    return jnp.pad(v.astype(jnp.float32), (0, LANE - v.shape[0]))


def _stage(x_slab, w9, gamma_p, beta_p, mask, *, n_tiles, n_valid, off, taps):
    """One (conv3x3 -> BN(batch stats) -> ReLU) stage = conv/stats pass + normalize pass."""
    y, stats = _conv_pass(x_slab, w9, mask, n_tiles=n_tiles, off=off, taps=taps)
    s1 = jnp.sum(stats[:, 0, :], axis=0)                 # per-channel sum   (f32)
    s2 = jnp.sum(stats[:, 1, :], axis=0)                 # per-channel sumsq (f32)
    mean = s1 / n_valid
    var = s2 / n_valid - mean * mean                     # biased variance (PyTorch BN fwd)
    scale = gamma_p * lax.rsqrt(var + EPS)               # padded lanes: gamma = 0 -> scale 0
    shift = beta_p - mean * scale
    return _bn_relu_pass(y, scale[None, :], shift[None, :], mask, n_tiles=n_tiles)


def init_params(key, in_ch, out_ch):
    """Deterministic synthetic parameters (same shapes as the PyTorch module)."""
    k1, k2, k3, k4 = jax.random.split(key, 4)
    w1 = jax.random.normal(k1, (3, 3, in_ch, out_ch), jnp.float32) * 0.1   # HWIO
    b1 = jax.random.normal(k2, (out_ch,), jnp.float32) * 0.05
    w2 = jax.random.normal(k3, (3, 3, out_ch, out_ch), jnp.float32) * 0.1
    b2 = jax.random.normal(k4, (out_ch,), jnp.float32) * 0.05
    g1 = jnp.ones((out_ch,), jnp.float32)
    be1 = jnp.zeros((out_ch,), jnp.float32)
    g2 = jnp.ones((out_ch,), jnp.float32)
    be2 = jnp.zeros((out_ch,), jnp.float32)
    return dict(w1=w1, b1=b1, g1=g1, be1=be1, w2=w2, b2=b2, g2=g2, be2=be2)


@jax.jit
def in_conv_forward(x_nchw, params):
    """InConv forward. Input/output: NCHW float32."""
    B, cin, H, W = x_nchw.shape
    cout = params["w1"].shape[-1]
    mp = B * (H + 2) * (W + 2)
    n_tiles = pl.cdiv(mp, TM)
    mp_r = n_tiles * TM
    off = W + 3                                   # largest |tap shift| in flattened rows
    assert off <= TM and cin <= LANE and cout <= LANE
    taps = tuple(dh * (W + 2) + dw for dh in (-1, 0, 1) for dw in (-1, 0, 1))

    # Row-validity mask over the flattened padded layout (1 = real output pixel).
    m = jnp.zeros((H + 2, W + 2), jnp.float32).at[1:H + 1, 1:W + 1].set(1.0)
    mask = jnp.pad(jnp.tile(m.reshape(-1), (B,)), (0, mp_r - mp))[:, None]

    # NCHW -> NHWC -> spatially padded -> flattened (pixel-rows, 128-lane channel slab)
    # with a TM-row zero lead/tail so the in-kernel halo DMA never leaves the array.
    x = jnp.transpose(x_nchw, (0, 2, 3, 1)).astype(jnp.float32)
    x = jnp.pad(x, ((0, 0), (1, 1), (1, 1), (0, LANE - cin))).reshape(mp, LANE)
    x_slab = jnp.pad(x, ((TM, TM + mp_r - mp), (0, 0)))

    # NOTE: conv biases (params["b1"], params["b2"]) are intentionally *not* used here --
    # training-mode BatchNorm subtracts the per-channel batch mean, which cancels a constant
    # bias exactly.  The f32 reference below keeps the biases and still matches.
    n_valid = float(B * H * W)
    h = _stage(x_slab, _pack_weights(params["w1"]), _pack_vec(params["g1"]),
               _pack_vec(params["be1"]), mask,
               n_tiles=n_tiles, n_valid=n_valid, off=off, taps=taps)
    h = _stage(h, _pack_weights(params["w2"]), _pack_vec(params["g2"]),
               _pack_vec(params["be2"]), mask,
               n_tiles=n_tiles, n_valid=n_valid, off=off, taps=taps)

    out = h[TM:TM + mp, :cout].reshape(B, H + 2, W + 2, cout)[:, 1:H + 1, 1:W + 1, :]
    return jnp.transpose(out, (0, 3, 1, 2))


# ----------------------------- pure-JAX reference ----------------------------------
def _ref_stage(x_nhwc, w_hwio, b, g, beta):
    y = jax.lax.conv_general_dilated(
        x_nhwc, w_hwio, window_strides=(1, 1), padding=((1, 1), (1, 1)),
        dimension_numbers=("NHWC", "HWIO", "NHWC"))
    y = y + b
    mean = jnp.mean(y, axis=(0, 1, 2), keepdims=True)
    var = jnp.var(y, axis=(0, 1, 2), keepdims=True)       # biased, like PyTorch BN forward
    y = g * (y - mean) * lax.rsqrt(var + EPS) + beta
    return jnp.maximum(y, 0.0)


def in_conv_reference(x_nchw, params):
    x = jnp.transpose(x_nchw, (0, 2, 3, 1)).astype(jnp.float32)
    h = _ref_stage(x, params["w1"], params["b1"], params["g1"], params["be1"])
    h = _ref_stage(h, params["w2"], params["b2"], params["g2"], params["be2"])
    return jnp.transpose(h, (0, 3, 1, 2))


# ------------------------------------ main ------------------------------------------
if __name__ == "__main__":
    B, C_IN, C_OUT, H, W = 2, 4, 8, 16, 16

    key = jax.random.PRNGKey(0)
    kx, kp = jax.random.split(key)
    x = jax.random.normal(kx, (B, C_IN, H, W), jnp.float32)
    params = init_params(kp, C_IN, C_OUT)

    out = in_conv_forward(x, params)
    out = jax.block_until_ready(out)

    ref = in_conv_reference(x, params)
    assert out.shape == (B, C_OUT, H, W), out.shape
    err = float(jnp.max(jnp.abs(out - ref)))
    assert jnp.allclose(out, ref, atol=2e-4, rtol=2e-4), err

    print("KERNEL_OK")
</pallas_src>

<mosaic_0001>
module attributes {stable_mosaic.version = 11 : i64} {
  func.func @_conv_stats_kernel(%arg0: i32, %arg1: memref<1280x128xf32, #tpu.memory_space<any>>, %arg2: memref<9x128x128xf32, #tpu.memory_space<vmem>>, %arg3: memref<256x1xf32, #tpu.memory_space<vmem>>, %arg4: memref<256x128xf32, #tpu.memory_space<vmem>>, %arg5: memref<1x8x128xf32, #tpu.memory_space<vmem>>, %arg6: memref<294x128xf32, #tpu.memory_space<vmem>>, %arg7: memref<!tpu.dma_semaphore, #tpu.memory_space<semaphore_mem>>) attributes {dimension_semantics = [#tpu.dimension_semantics<parallel>], iteration_bounds = array<i64: 3>, scalar_prefetch = 0 : i64, scratch_operands = 2 : i64, tpu.core_type = #tpu.core_type<tc>, window_params = [{}, {pipeline_mode = #tpu.pipeline_mode<synchronous>, transform_indices = @transform_1, window_bounds = array<i64: 9, 128, 128>}, {transform_indices = @transform_2, window_bounds = array<i64: 256, 1>}, {transform_indices = @transform_3, window_bounds = array<i64: 256, 128>}, {transform_indices = @transform_4, window_bounds = array<i64: 1, 8, 128>}]} {
    %c256_i32 = arith.constant 256 : i32
    %0 = arith.muli %arg0, %c256_i32 : i32
    %c237_i32 = arith.constant 237 : i32
    %1 = arith.addi %0, %c237_i32 : i32
    %c0_i32 = arith.constant 0 : i32
    %2 = tpu.memref_slice %arg1[%1, %c0_i32] : memref<1280x128xf32, #tpu.memory_space<any>> -> memref<294x128xf32, #tpu.memory_space<any>>
    tpu.enqueue_dma source(%2 : memref<294x128xf32, #tpu.memory_space<any>>) target(%arg6 : memref<294x128xf32, #tpu.memory_space<vmem>>) target_semaphore(%arg7 : memref<!tpu.dma_semaphore, #tpu.memory_space<semaphore_mem>>)
    %c0_i32_0 = arith.constant 0 : i32
    %3 = tpu.memref_slice %arg1[%1, %c0_i32_0] : memref<1280x128xf32, #tpu.memory_space<any>> -> memref<294x128xf32, #tpu.memory_space<any>>
    tpu.wait_dma2 semaphore(%arg7 : memref<!tpu.dma_semaphore, #tpu.memory_space<semaphore_mem>>) src(%3 : memref<294x128xf32, #tpu.memory_space<any>>) dst(%arg6 : memref<294x128xf32, #tpu.memory_space<vmem>>)
    %cst = arith.constant 0.000000e+00 : f32
    %4 = vector.broadcast %cst : f32 to vector<256x128xf32>
    %c0 = arith.constant 0 : index
    %c0_1 = arith.constant 0 : index
    %5 = vector.load %arg4[%c0, %c0_1] : memref<256x128xf32, #tpu.memory_space<vmem>>, vector<256x128xf32>
    tpu.vector_store %arg4[%c0, %c0_1], %4 {strides = array<i32>} : memref<256x128xf32, #tpu.memory_space<vmem>>, vector<256x128xf32>,
    %c0_2 = arith.constant 0 : index
    %c0_3 = arith.constant 0 : index
    %6 = vector.load %arg4[%c0_2, %c0_3] : memref<256x128xf32, #tpu.memory_space<vmem>>, vector<256x128xf32>
    %c0_4 = arith.constant 0 : index
    %c0_5 = arith.constant 0 : index
    %7 = vector.load %arg6[%c0_4, %c0_5] : memref<294x128xf32, #tpu.memory_space<vmem>>, vector<256x128xf32>
    %c0_6 = arith.constant 0 : index
    %c0_7 = arith.constant 0 : index
    %c0_8 = arith.constant 0 : index
    %8 = vector.load %arg2[%c0_6, %c0_7, %c0_8] : memref<9x128x128xf32, #tpu.memory_space<vmem>>, vector<1x128x128xf32>
    %9 = vector.shape_cast %8 : vector<1x128x128xf32> to vector<128x128xf32>
    %cst_9 = arith.constant dense<0.000000e+00> : vector<256x128xf32>
    %10 = tpu.matmul %7, %9, %cst_9 {dimension_numbers = #tpu.dot_dimension_numbers<[1], [0], [0], [1], [0, 0, 1, 1], [], []>} : vector<256x128xf32>, vector<128x128xf32>, vector<256x128xf32> -> vector<256x128xf32>
    %11 = arith.addf %6, %10 : vector<256x128xf32>
    %c0_10 = arith.constant 0 : index
    %c0_11 = arith.constant 0 : index
    %12 = vector.load %arg4[%c0_10, %c0_11] : memref<256x128xf32, #tpu.memory_space<vmem>>, vector<256x128xf32>
    tpu.vector_store %arg4[%c0_10, %c0_11], %11 {strides = array<i32>} : memref<256x128xf32, #tpu.memory_space<vmem>>, vector<256x128xf32>,
    %c0_12 = arith.constant 0 : index
    %c0_13 = arith.constant 0 : index
    %13 = vector.load %arg4[%c0_12, %c0_13] : memref<256x128xf32, #tpu.memory_space<vmem>>, vector<256x128xf32>
    %c1 = arith.constant 1 : index
    %c0_14 = arith.constant 0 : index
    %14 = vector.load %arg6[%c1, %c0_14] : memref<294x128xf32, #tpu.memory_space<vmem>>, vector<256x128xf32>
    %c1_15 = arith.constant 1 : index
    %c0_16 = arith.constant 0 : index
    %c0_17 = arith.constant 0 : index
    %15 = vector.load %arg2[%c1_15, %c0_16, %c0_17] : memref<9x128x128xf32, #tpu.memory_space<vmem>>, vector<1x128x128xf32>
    %16 = vector.shape_cast %15 : vector<1x128x128xf32> to vector<128x128xf32>
    %cst_18 = arith.constant dense<0.000000e+00> : vector<256x128xf32>
    %17 = tpu.matmul %14, %16, %cst_18 {dimension_numbers = #tpu.dot_dimension_numbers<[1], [0], [0], [1], [0, 0, 1, 1], [], []>} : vector<256x128xf32>, vector<128x128xf32>, vector<256x128xf32> -> vector<256x128xf32>
    %18 = arith.addf %13, %17 : vector<256x128xf32>
    %c0_19 = arith.constant 0 : index
    %c0_20 = arith.constant 0 : index
    %19 = vector.load %arg4[%c0_19, %c0_20] : memref<256x128xf32, #tpu.memory_space<vmem>>, vector<256x128xf32>
    tpu.vector_store %arg4[%c0_19, %c0_20], %18 {strides = array<i32>} : memref<256x128xf32, #tpu.memory_space<vmem>>, vector<256x128xf32>,
    %c0_21 = arith.constant 0 : index
    %c0_22 = arith.constant 0 : index
    %20 = vector.load %arg4[%c0_21, %c0_22] : memref<256x128xf32, #tpu.memory_space<vmem>>, vector<256x128xf32>
    %c2 = arith.constant 2 : index
    %c0_23 = arith.constant 0 : index
    %21 = vector.load %arg6[%c2, %c0_23] : memref<294x128xf32, #tpu.memory_space<vmem>>, vector<256x128xf32>
    %c2_24 = arith.constant 2 : index
    %c0_25 = arith.constant 0 : index
    %c0_26 = arith.constant 0 : index
    %22 = vector.load %arg2[%c2_24, %c0_25, %c0_26] : memref<9x128x128xf32, #tpu.memory_space<vmem>>, vector<1x128x128xf32>
    %23 = vector.shape_cast %22 : vector<1x128x128xf32> to vector<128x128xf32>
    %cst_27 = arith.constant dense<0.000000e+00> : vector<256x128xf32>
    %24 = tpu.matmul %21, %23, %cst_27 {dimension_numbers = #tpu.dot_dimension_numbers<[1], [0], [0], [1], [0, 0, 1, 1], [], []>} : vector<256x128xf32>, vector<128x128xf32>, vector<256x128xf32> -> vector<256x128xf32>
    %25 = arith.addf %20, %24 : vector<256x128xf32>
    %c0_28 = arith.constant 0 : index
    %c0_29 = arith.constant 0 : index
    %26 = vector.load %arg4[%c0_28, %c0_29] : memref<256x128xf32, #tpu.memory_space<vmem>>, vector<256x128xf32>
    tpu.vector_store %arg4[%c0_28, %c0_29], %25 {strides = array<i32>} : memref<256x128xf32, #tpu.memory_space<vmem>>, vector<256x128xf32>,
    %c0_30 = arith.constant 0 : index
    %c0_31 = arith.constant 0 : index
    %27 = vector.load %arg4[%c0_30, %c0_31] : memref<256x128xf32, #tpu.memory_space<vmem>>, vector<256x128xf32>
    %c18 = arith.constant 18 : index
    %c0_32 = arith.constant 0 : index
    %28 = vector.load %arg6[%c18, %c0_32] : memref<294x128xf32, #tpu.memory_space<vmem>>, vector<256x128xf32>
    %c3 = arith.constant 3 : index
    %c0_33 = arith.constant 0 : index
    %c0_34 = arith.constant 0 : index
    %29 = vector.load %arg2[%c3, %c0_33, %c0_34] : memref<9x128x128xf32, #tpu.memory_space<vmem>>, vector<1x128x128xf32>
    %30 = vector.shape_cast %29 : vector<1x128x128xf32> to vector<128x128xf32>
    %cst_35 = arith.constant dense<0.000000e+00> : vector<256x128xf32>
    %31 = tpu.matmul %28, %30, %cst_35 {dimension_numbers = #tpu.dot_dimension_numbers<[1], [0], [0], [1], [0, 0, 1, 1], [], []>} : vector<256x128xf32>, vector<128x128xf32>, vector<256x128xf32> -> vector<256x128xf32>
    %32 = arith.addf %27, %31 : vector<256x128xf32>
    %c0_36 = arith.constant 0 : index
    %c0_37 = arith.constant 0 : index
    %33 = vector.load %arg4[%c0_36, %c0_37] : memref<256x128xf32, #tpu.memory_space<vmem>>, vector<256x128xf32>
    tpu.vector_store %arg4[%c0_36, %c0_37], %32 {strides = array<i32>} : memref<256x128xf32, #tpu.memory_space<vmem>>, vector<256x128xf32>,
    %c0_38 = arith.constant 0 : index
    %c0_39 = arith.constant 0 : index
    %34 = vector.load %arg4[%c0_38, %c0_39] : memref<256x128xf32, #tpu.memory_space<vmem>>, vector<256x128xf32>
    %c19 = arith.constant 19 : index
    %c0_40 = arith.constant 0 : index
    %35 = vector.load %arg6[%c19, %c0_40] : memref<294x128xf32, #tpu.memory_space<vmem>>, vector<256x128xf32>
    %c4 = arith.constant 4 : index
    %c0_41 = arith.constant 0 : index
    %c0_42 = arith.constant 0 : index
    %36 = vector.load %arg2[%c4, %c0_41, %c0_42] : memref<9x128x128xf32, #tpu.memory_space<vmem>>, vector<1x128x128xf32>
    %37 = vector.shape_cast %36 : vector<1x128x128xf32> to vector<128x128xf32>
    %cst_43 = arith.constant dense<0.000000e+00> : vector<256x128xf32>
    %38 = tpu.matmul %35, %37, %cst_43 {dimension_numbers = #tpu.dot_dimension_numbers<[1], [0], [0], [1], [0, 0, 1, 1], [], []>} : vector<256x128xf32>, vector<128x128xf32>, vector<256x128xf32> -> vector<256x128xf32>
    %39 = arith.addf %34, %38 : vector<256x128xf32>
    %c0_44 = arith.constant 0 : index
    %c0_45 = arith.constant 0 : index
    %40 = vector.load %arg4[%c0_44, %c0_45] : memref<256x128xf32, #tpu.memory_space<vmem>>, vector<256x128xf32>
    tpu.vector_store %arg4[%c0_44, %c0_45], %39 {strides = array<i32>} : memref<256x128xf32, #tpu.memory_space<vmem>>, vector<256x128xf32>,
    %c0_46 = arith.constant 0 : index
    %c0_47 = arith.constant 0 : index
    %41 = vector.load %arg4[%c0_46, %c0_47] : memref<256x128xf32, #tpu.memory_space<vmem>>, vector<256x128xf32>
    %c20 = arith.constant 20 : index
    %c0_48 = arith.constant 0 : index
    %42 = vector.load %arg6[%c20, %c0_48] : memref<294x128xf32, #tpu.memory_space<vmem>>, vector<256x128xf32>
    %c5 = arith.constant 5 : index
    %c0_49 = arith.constant 0 : index
    %c0_50 = arith.constant 0 : index
    %43 = vector.load %arg2[%c5, %c0_49, %c0_50] : memref<9x128x128xf32, #tpu.memory_space<vmem>>, vector<1x128x128xf32>
    %44 = vector.shape_cast %43 : vector<1x128x128xf32> to vector<128x128xf32>
    %cst_51 = arith.constant dense<0.000000e+00> : vector<256x128xf32>
    %45 = tpu.matmul %42, %44, %cst_51 {dimension_numbers = #tpu.dot_dimension_numbers<[1], [0], [0], [1], [0, 0, 1, 1], [], []>} : vector<256x128xf32>, vector<128x128xf32>, vector<256x128xf32> -> vector<256x128xf32>
    %46 = arith.addf %41, %45 : vector<256x128xf32>
    %c0_52 = arith.constant 0 : index
    %c0_53 = arith.constant 0 : index
    %47 = vector.load %arg4[%c0_52, %c0_53] : memref<256x128xf32, #tpu.memory_space<vmem>>, vector<256x128xf32>
    tpu.vector_store %arg4[%c0_52, %c0_53], %46 {strides = array<i32>} : memref<256x128xf32, #tpu.memory_space<vmem>>, vector<256x128xf32>,
    %c0_54 = arith.constant 0 : index
    %c0_55 = arith.constant 0 : index
    %48 = vector.load %arg4[%c0_54, %c0_55] : memref<256x128xf32, #tpu.memory_space<vmem>>, vector<256x128xf32>
    %c36 = arith.constant 36 : index
    %c0_56 = arith.constant 0 : index
    %49 = vector.load %arg6[%c36, %c0_56] : memref<294x128xf32, #tpu.memory_space<vmem>>, vector<256x128xf32>
    %c6 = arith.constant 6 : index
    %c0_57 = arith.constant 0 : index
    %c0_58 = arith.constant 0 : index
    %50 = vector.load %arg2[%c6, %c0_57, %c0_58] : memref<9x128x128xf32, #tpu.memory_space<vmem>>, vector<1x128x128xf32>
    %51 = vector.shape_cast %50 : vector<1x128x128xf32> to vector<128x128xf32>
    %cst_59 = arith.constant dense<0.000000e+00> : vector<256x128xf32>
    %52 = tpu.matmul %49, %51, %cst_59 {dimension_numbers = #tpu.dot_dimension_numbers<[1], [0], [0], [1], [0, 0, 1, 1], [], []>} : vector<256x128xf32>, vector<128x128xf32>, vector<256x128xf32> -> vector<256x128xf32>
    %53 = arith.addf %48, %52 : vector<256x128xf32>
    %c0_60 = arith.constant 0 : index
    %c0_61 = arith.constant 0 : index
    %54 = vector.load %arg4[%c0_60, %c0_61] : memref<256x128xf32, #tpu.memory_space<vmem>>, vector<256x128xf32>
    tpu.vector_store %arg4[%c0_60, %c0_61], %53 {strides = array<i32>} : memref<256x128xf32, #tpu.memory_space<vmem>>, vector<256x128xf32>,
    %c0_62 = arith.constant 0 : index
    %c0_63 = arith.constant 0 : index
    %55 = vector.load %arg4[%c0_62, %c0_63] : memref<256x128xf32, #tpu.memory_space<vmem>>, vector<256x128xf32>
    %c37 = arith.constant 37 : index
    %c0_64 = arith.constant 0 : index
    %56 = vector.load %arg6[%c37, %c0_64] : memref<294x128xf32, #tpu.memory_space<vmem>>, vector<256x128xf32>
    %c7 = arith.constant 7 : index
    %c0_65 = arith.constant 0 : index
    %c0_66 = arith.constant 0 : index
    %57 = vector.load %arg2[%c7, %c0_65, %c0_66] : memref<9x128x128xf32, #tpu.memory_space<vmem>>, vector<1x128x128xf32>
    %58 = vector.shape_cast %57 : vector<1x128x128xf32> to vector<128x128xf32>
    %cst_67 = arith.constant dense<0.000000e+00> : vector<256x128xf32>
    %59 = tpu.matmul %56, %58, %cst_67 {dimension_numbers = #tpu.dot_dimension_numbers<[1], [0], [0], [1], [0, 0, 1, 1], [], []>} : vector<256x128xf32>, vector<128x128xf32>, vector<256x128xf32> -> vector<256x128xf32>
    %60 = arith.addf %55, %59 : vector<256x128xf32>
    %c0_68 = arith.constant 0 : index
    %c0_69 = arith.constant 0 : index
    %61 = vector.load %arg4[%c0_68, %c0_69] : memref<256x128xf32, #tpu.memory_space<vmem>>, vector<256x128xf32>
    tpu.vector_store %arg4[%c0_68, %c0_69], %60 {strides = array<i32>} : memref<256x128xf32, #tpu.memory_space<vmem>>, vector<256x128xf32>,
    %c0_70 = arith.constant 0 : index
    %c0_71 = arith.constant 0 : index
    %62 = vector.load %arg4[%c0_70, %c0_71] : memref<256x128xf32, #tpu.memory_space<vmem>>, vector<256x128xf32>
    %c38 = arith.constant 38 : index
    %c0_72 = arith.constant 0 : index
    %63 = vector.load %arg6[%c38, %c0_72] : memref<294x128xf32, #tpu.memory_space<vmem>>, vector<256x128xf32>
    %c8 = arith.constant 8 : index
    %c0_73 = arith.constant 0 : index
    %c0_74 = arith.constant 0 : index
    %64 = vector.load %arg2[%c8, %c0_73, %c0_74] : memref<9x128x128xf32, #tpu.memory_space<vmem>>, vector<1x128x128xf32>
    %65 = vector.shape_cast %64 : vector<1x128x128xf32> to vector<128x128xf32>
    %cst_75 = arith.constant dense<0.000000e+00> : vector<256x128xf32>
    %66 = tpu.matmul %63, %65, %cst_75 {dimension_numbers = #tpu.dot_dimension_numbers<[1], [0], [0], [1], [0, 0, 1, 1], [], []>} : vector<256x128xf32>, vector<128x128xf32>, vector<256x128xf32> -> vector<256x128xf32>
    %67 = arith.addf %62, %66 : vector<256x128xf32>
    %c0_76 = arith.constant 0 : index
    %c0_77 = arith.constant 0 : index
    %68 = vector.load %arg4[%c0_76, %c0_77] : memref<256x128xf32, #tpu.memory_space<vmem>>, vector<256x128xf32>
    tpu.vector_store %arg4[%c0_76, %c0_77], %67 {strides = array<i32>} : memref<256x128xf32, #tpu.memory_space<vmem>>, vector<256x128xf32>,
    %c0_78 = arith.constant 0 : index
    %c0_79 = arith.constant 0 : index
    %69 = vector.load %arg4[%c0_78, %c0_79] : memref<256x128xf32, #tpu.memory_space<vmem>>, vector<256x128xf32>
    %c0_80 = arith.constant 0 : index
    %c0_81 = arith.constant 0 : index
    %70 = vector.load %arg3[%c0_80, %c0_81] : memref<256x1xf32, #tpu.memory_space<vmem>>, vector<256x1xf32>
    %71 = vector.broadcast %70 : vector<256x1xf32> to vector<256x128xf32>
    %72 = arith.mulf %69, %71 : vector<256x128xf32>
    %cst_82 = arith.constant 0.000000e+00 : f32
    %73 = vector.broadcast %cst_82 : f32 to vector<8x128xf32>
    %c0_83 = arith.constant 0 : index
    %c0_84 = arith.constant 0 : index
    %c0_85 = arith.constant 0 : index
    %74 = vector.load %arg5[%c0_83, %c0_84, %c0_85] : memref<1x8x128xf32, #tpu.memory_space<vmem>>, vector<1x8x128xf32>
    %75 = vector.shape_cast %74 : vector<1x8x128xf32> to vector<8x128xf32>
    %76 = vector.shape_cast %73 : vector<8x128xf32> to vector<1x8x128xf32>
    tpu.vector_store %arg5[%c0_83, %c0_84, %c0_85], %76 {strides = array<i32>} : memref<1x8x128xf32, #tpu.memory_space<vmem>>, vector<1x8x128xf32>,
    %cst_86 = arith.constant dense<0.000000e+00> : vector<128xf32>
    %77 = vector.multi_reduction <add>, %72, %cst_86 [0] : vector<256x128xf32> to vector<128xf32>
    %78 = vector.shape_cast %77 : vector<128xf32> to vector<1x128xf32>
    %c0_87 = arith.constant 0 : index
    %c0_88 = arith.constant 0 : index
    %c0_89 = arith.constant 0 : index
    %79 = vector.load %arg5[%c0_87, %c0_88, %c0_89] : memref<1x8x128xf32, #tpu.memory_space<vmem>>, vector<1x1x128xf32>
    %80 = vector.shape_cast %79 : vector<1x1x128xf32> to vector<1x128xf32>
    %81 = vector.shape_cast %78 : vector<1x128xf32> to vector<1x1x128xf32>
    tpu.vector_store %arg5[%c0_87, %c0_88, %c0_89], %81 {strides = array<i32>} : memref<1x8x128xf32, #tpu.memory_space<vmem>>, vector<1x1x128xf32>,
    %82 = arith.mulf %72, %69 : vector<256x128xf32>
    %cst_90 = arith.constant dense<0.000000e+00> : vector<128xf32>
    %83 = vector.multi_reduction <add>, %82, %cst_90 [0] : vector<256x128xf32> to vector<128xf32>
    %84 = vector.shape_cast %83 : vector<128xf32> to vector<1x128xf32>
    %c0_91 = arith.constant 0 : index
    %c1_92 = arith.constant 1 : index
    %c0_93 = arith.constant 0 : index
    %85 = vector.load %arg5[%c0_91, %c1_92, %c0_93] : memref<1x8x128xf32, #tpu.memory_space<vmem>>, vector<1x1x128xf32>
    %86 = vector.shape_cast %85 : vector<1x1x128xf32> to vector<1x128xf32>
    %87 = vector.shape_cast %84 : vector<1x128xf32> to vector<1x1x128xf32>
    tpu.vector_store %arg5[%c0_91, %c1_92, %c0_93], %87 {strides = array<i32>} : memref<1x8x128xf32, #tpu.memory_space<vmem>>, vector<1x1x128xf32>,
    return
  }
  func.func @transform_1(%arg0: i32) -> (i32, i32, i32) {
    %c0_i32 = arith.constant 0 : i32
    %c0_i32_0 = arith.constant 0 : i32
    %c0_i32_1 = arith.constant 0 : i32
    %c0_i32_2 = arith.constant 0 : i32
    return %c0_i32, %c0_i32_0, %c0_i32_1 : i32, i32, i32
  }
  func.func @transform_2(%arg0: i32) -> (i32, i32) {
    %c0_i32 = arith.constant 0 : i32
    %c0_i32_0 = arith.constant 0 : i32
    return %arg0, %c0_i32 : i32, i32
  }
  func.func @transform_3(%arg0: i32) -> (i32, i32) {
    %c0_i32 = arith.constant 0 : i32
    %c0_i32_0 = arith.constant 0 : i32
    return %arg0, %c0_i32 : i32, i32
  }
  func.func @transform_4(%arg0: i32) -> (i32, i32, i32) {
    %c0_i32 = arith.constant 0 : i32
    %c0_i32_0 = arith.constant 0 : i32
    %c0_i32_1 = arith.constant 0 : i32
    return %arg0, %c0_i32, %c0_i32_0 : i32, i32, i32
  }
}

module attributes {stable_mosaic.version = 11 : i64} {
  func.func @_bn_relu_kernel(%arg0: i32, %arg1: memref<256x128xf32, #tpu.memory_space<vmem>>, %arg2: memref<1x128xf32, #tpu.memory_space<vmem>>, %arg3: memref<1x128xf32, #tpu.memory_space<vmem>>, %arg4: memref<256x1xf32, #tpu.memory_space<vmem>>, %arg5: memref<256x128xf32, #tpu.memory_space<vmem>>) attributes {dimension_semantics = [#tpu.dimension_semantics<parallel>], iteration_bounds = array<i64: 5>, scalar_prefetch = 0 : i64, scratch_operands = 0 : i64, tpu.core_type = #tpu.core_type<tc>, window_params = [{transform_indices = @transform_0, window_bounds = array<i64: 256, 128>}, {pipeline_mode = #tpu.pipeline_mode<synchronous>, transform_indices = @transform_1, window_bounds = array<i64: 1, 128>}, {pipeline_mode = #tpu.pipeline_mode<synchronous>, transform_indices = @transform_2, window_bounds = array<i64: 1, 128>}, {transform_indices = @transform_3, window_bounds = array<i64: 256, 1>}, {transform_indices = @transform_4, window_bounds = array<i64: 256, 128>}]} {
    %c0_i32 = arith.constant 0 : i32
    %0 = arith.cmpi eq, %arg0, %c0_i32 : i32
    %c4_i32 = arith.constant 4 : i32
    %1 = arith.cmpi eq, %arg0, %c4_i32 : i32
    %2 = arith.ori %0, %1 : i1
    %3 = arith.extui %2 : i1 to i32
    %c0_i32_0 = arith.constant 0 : i32
    %4 = arith.cmpi ne, %3, %c0_i32_0 : i32
    scf.if %4 {
      %cst = arith.constant 0.000000e+00 : f32
      %8 = vector.broadcast %cst : f32 to vector<256x128xf32>
      %c0 = arith.constant 0 : index
      %c0_2 = arith.constant 0 : index
      %9 = vector.load %arg5[%c0, %c0_2] : memref<256x128xf32, #tpu.memory_space<vmem>>, vector<256x128xf32>
      tpu.vector_store %arg5[%c0, %c0_2], %8 {strides = array<i32>} : memref<256x128xf32, #tpu.memory_space<vmem>>, vector<256x128xf32>,
    } else {
    }
    %true = arith.constant true
    %5 = arith.xori %2, %true : i1
    %6 = arith.extui %5 : i1 to i32
    %c0_i32_1 = arith.constant 0 : i32
    %7 = arith.cmpi ne, %6, %c0_i32_1 : i32
    scf.if %7 {
      %c0 = arith.constant 0 : index
      %c0_2 = arith.constant 0 : index
      %8 = vector.load %arg1[%c0, %c0_2] : memref<256x128xf32, #tpu.memory_space<vmem>>, vector<256x128xf32>
      %c0_3 = arith.constant 0 : index
      %c0_4 = arith.constant 0 : index
      %9 = vector.load %arg2[%c0_3, %c0_4] : memref<1x128xf32, #tpu.memory_space<vmem>>, vector<1x128xf32>
      %10 = vector.broadcast %9 : vector<1x128xf32> to vector<256x128xf32>
      %11 = arith.mulf %8, %10 : vector<256x128xf32>
      %c0_5 = arith.constant 0 : index
      %c0_6 = arith.constant 0 : index
      %12 = vector.load %arg3[%c0_5, %c0_6] : memref<1x128xf32, #tpu.memory_space<vmem>>, vector<1x128xf32>
      %13 = vector.broadcast %12 : vector<1x128xf32> to vector<256x128xf32>
      %14 = arith.addf %11, %13 : vector<256x128xf32>
      %cst = arith.constant 0.000000e+00 : f32
      %15 = vector.broadcast %cst : f32 to vector<256x128xf32>
      %16 = arith.maximumf %14, %15 : vector<256x128xf32>
      %c0_7 = arith.constant 0 : index
      %c0_8 = arith.constant 0 : index
      %17 = vector.load %arg4[%c0_7, %c0_8] : memref<256x1xf32, #tpu.memory_space<vmem>>, vector<256x1xf32>
      %18 = vector.broadcast %17 : vector<256x1xf32> to vector<256x128xf32>
      %19 = arith.mulf %16, %18 : vector<256x128xf32>
      %c0_9 = arith.constant 0 : index
      %c0_10 = arith.constant 0 : index
      %20 = vector.load %arg5[%c0_9, %c0_10] : memref<256x128xf32, #tpu.memory_space<vmem>>, vector<256x128xf32>
      tpu.vector_store %arg5[%c0_9, %c0_10], %19 {strides = array<i32>} : memref<256x128xf32, #tpu.memory_space<vmem>>, vector<256x128xf32>,
    } else {
    }
    return
  }
  func.func @transform_0(%arg0: i32) -> (i32, i32) {
    %c1_i32 = arith.constant 1 : i32
    %0 = arith.subi %arg0, %c1_i32 : i32
    %c2_i32 = arith.constant 2 : i32
    %1 = arith.minsi %0, %c2_i32 : i32
    %c0_i32 = arith.constant 0 : i32
    %2 = arith.maxsi %1, %c0_i32 : i32
    %c0_i32_0 = arith.constant 0 : i32
    %c0_i32_1 = arith.constant 0 : i32
    return %2, %c0_i32_0 : i32, i32
  }
  func.func @transform_1(%arg0: i32) -> (i32, i32) {
    %c0_i32 = arith.constant 0 : i32
    %c0_i32_0 = arith.constant 0 : i32
    %c0_i32_1 = arith.constant 0 : i32
    return %c0_i32, %c0_i32_0 : i32, i32
  }
  func.func @transform_2(%arg0: i32) -> (i32, i32) {
    %c0_i32 = arith.constant 0 : i32
    %c0_i32_0 = arith.constant 0 : i32
    %c0_i32_1 = arith.constant 0 : i32
    return %c0_i32, %c0_i32_0 : i32, i32
  }
  func.func @transform_3(%arg0: i32) -> (i32, i32) {
    %c1_i32 = arith.constant 1 : i32
    %0 = arith.subi %arg0, %c1_i32 : i32
    %c2_i32 = arith.constant 2 : i32
    %1 = arith.minsi %0, %c2_i32 : i32
    %c0_i32 = arith.constant 0 : i32
    %2 = arith.maxsi %1, %c0_i32 : i32
    %c0_i32_0 = arith.constant 0 : i32
    %c0_i32_1 = arith.constant 0 : i32
    return %2, %c0_i32_0 : i32, i32
  }
  func.func @transform_4(%arg0: i32) -> (i32, i32) {
    %c0_i32 = arith.constant 0 : i32
    %c0_i32_0 = arith.constant 0 : i32
    return %arg0, %c0_i32 : i32, i32
  }
}

</mosaic_0001>

<llo_original>
// kernel: tile.6
$region0: #{tile.6}
  #allocation0 [shape = 's32[1]{0}', space=sflag, size = 0x4, scoped, tag = 'scoped memory for tile.6']
  %s0 = inlined_call_operand.vmem [shape: f32[324], index: 0, kind: input, shape index: {}]
  %s1 = inlined_call_operand.vmem [shape: f32[2,324], index: 1, kind: output, shape index: {}]
  // Predicated region
  $region2: #{tile.6} parent=0 // pred_check
    _
  $region3: #{tile.6} parent=0 // pred_check_branch
    %3 = sbr.rel (0) target = $region5
  $region4: #{tile.6} parent=0 // pred_region
    _
  $region5: #{tile.6} parent=0 // pred_fallthru
    _
  %v4 = vld [vmem:[%s0] ss:$0 sm:$0xff]
  %5 = vst [vmem:[%s1] sm:$0x3] %v4
  %s6 = scalar_lea.vmem %s0, 1
  %v7 = vld [vmem:[%s6] ss:$0 sm:$0xff]
  %s8 = scalar_lea.vmem %s1, 2
  %9 = vst [vmem:[%s8] sm:$0x3] %v7
  %s10 = scalar_lea.vmem %s0, 2
  %v11 = vld [vmem:[%s10] ss:$0 sm:$0xff]
  %s12 = scalar_lea.vmem %s1, 4
  %13 = vst [vmem:[%s12] sm:$0x3] %v11

// kernel: tile.5
$region0: #{tile.5}
  %s0 = inlined_call_operand.vmem [shape: f32[18,18], index: 0, kind: input, shape index: {}]
  %s1 = inlined_call_operand.vmem [shape: f32[324], index: 1, kind: output, shape index: {}]
  $region1: #{tile.5} parent=0
    #allocation0 [shape = 'u8[4096]{0}', space=vmem, size = 0x1000, scoped, tag = 'scoped mem for output reshape']
    %v2 = vld [vmem:[%s0] sm:$0x1]
    %vm3 = vcmask 146432
    %4 = vst.msk [vmem:[#allocation0] sm:$0x1] %vm3, %v2
    %s5 = scalar_lea.vmem %s0, 7
    %v6 = vld [vmem:[%s5] sm:$0x1]
    %s7 = scalar_lea.vmem %s0, 7
    %v8 = vld [vmem:[%s7] sm:$0x1]
    %vm9 = vcmask 15360
    %v10 = vsel %vm9, %v8, %v6
    %11 = vrot.lane.b32.xlu0 %v10, 126
    %v12 = vpop.permute.xlu0 %11
    %vm13 = vcmask 130048
    %s14 = scalar_lea.vmem [#allocation0], 1
    %15 = vst.msk [vmem:[%s14] sm:$0x1] %vm13, %v12
    %vm16 = vcmask 1048560
    %17 = vst.msk [vmem:[#allocation0] sm:$0x1] %vm16, %v12
    %s18 = scalar_lea.vmem %s0, 14
    %v19 = vld [vmem:[%s18] sm:$0x1]
    %s20 = scalar_lea.vmem %s0, 14
    %v21 = vld [vmem:[%s20] sm:$0x1]
    %vm22 = vcmask 31744
    %v23 = vsel %vm22, %v21, %v19
    %24 = vrot.lane.b32.xlu0 %v23, 124
    %v25 = vpop.permute.xlu0 %24
    %vm26 = vcmask 113664
    %s27 = scalar_lea.vmem [#allocation0], 2
    %28 = vst.msk [vmem:[%s27] sm:$0x1] %vm26, %v25
    %vm29 = vcmask 1048544
    %s30 = scalar_lea.vmem [#allocation0], 1
    %31 = vst.msk [vmem:[%s30] sm:$0x1] %vm29, %v25
    %s32 = scalar_lea.vmem %s0, 6
    %v33 = vld [vmem:[%s32] sm:$0x1]
    %34 = vrot.lane.b32.xlu0 %v33, 108
    %v35 = vpop.permute.xlu0 %34
    %vm36 = vcmask 1032032
    %37 = vst.msk [vmem:[#allocation0] sm:$0x1] %vm36, %v35
    %s38 = scalar_lea.vmem %s0, 13
    %v39 = vld [vmem:[%s38] sm:$0x1]
    %40 = vrot.lane.b32.xlu0 %v39, 106
    %v41 = vpop.permute.xlu0 %40
    %vm42 = vcmask 1015632
    %s43 = scalar_lea.vmem [#allocation0], 1
    %44 = vst.msk [vmem:[%s43] sm:$0x1] %vm42, %v41
    %s45 = scalar_lea.vmem %s0, 5
    %v46 = vld [vmem:[%s45] sm:$0x1]
    %47 = vrot.lane.b32.xlu0 %v46, 90
    %v48 = vpop.permute.xlu0 %47
    %vm49 = vcmask 884432
    %50 = vst.msk [vmem:[#allocation0] sm:$0x1] %vm49, %v48
    %s51 = scalar_lea.vmem %s0, 12
    %v52 = vld [vmem:[%s51] sm:$0x1]
    %53 = vrot.lane.b32.xlu0 %v52, 88
    %v54 = vpop.permute.xlu0 %53
    %vm55 = vcmask 868032
    %s56 = scalar_lea.vmem [#allocation0], 1
    %57 = vst.msk [vmem:[%s56] sm:$0x1] %vm55, %v54
    %s58 = scalar_lea.vmem %s0, 4
    %v59 = vld [vmem:[%s58] sm:$0x1]
    %60 = vrot.lane.b32.xlu0 %v59, 72
    %v61 = vpop.permute.xlu0 %60
    %vm62 = vcmask 736832
    %63 = vst.msk [vmem:[#allocation0] sm:$0x1] %vm62, %v61
    %s64 = scalar_lea.vmem %s0, 11
    %v65 = vld [vmem:[%s64] sm:$0x1]
    %66 = vrot.lane.b32.xlu0 %v65, 70
    %v67 = vpop.permute.xlu0 %66
    %vm68 = vcmask 720432
    %s69 = scalar_lea.vmem [#allocation0], 1
    %70 = vst.msk [vmem:[%s69] sm:$0x1] %vm68, %v67
    %s71 = scalar_lea.vmem %s0, 3
    %v72 = vld [vmem:[%s71] sm:$0x1]
    %73 = vrot.lane.b32.xlu0 %v72, 54
    %v74 = vpop.permute.xlu0 %73
    %vm75 = vcmask 589232
    %76 = vst.msk [vmem:[#allocation0] sm:$0x1] %vm75, %v74
    %s77 = scalar_lea.vmem %s0, 10
    %v78 = vld [vmem:[%s77] sm:$0x1]
    %79 = vrot.lane.b32.xlu0 %v78, 52
    %v80 = vpop.permute.xlu0 %79
    %vm81 = vcmask 572832
    %s82 = scalar_lea.vmem [#allocation0], 1
    %83 = vst.msk [vmem:[%s82] sm:$0x1] %vm81, %v80
    %s84 = scalar_lea.vmem %s0, 17
    %v85 = vld [vmem:[%s84] sm:$0x1]
    %86 = vrot.lane.b32.xlu0 %v85, 50
    %v87 = vpop.permute.xlu0 %86
    %vm88 = vcmask 556432
    %s89 = scalar_lea.vmem [#allocation0], 2
    %90 = vst.msk [vmem:[%s89] sm:$0x1] %vm88, %v87
    %s91 = scalar_lea.vmem %s0, 2
    %v92 = vld [vmem:[%s91] sm:$0x1]
    %93 = vrot.lane.b32.xlu0 %v92, 36
    %v94 = vpop.permute.xlu0 %93
    %vm95 = vcmask 441632
    %96 = vst.msk [vmem:[#allocation0] sm:$0x1] %vm95, %v94
    %s97 = scalar_lea.vmem %s0, 9
    %v98 = vld [vmem:[%s97] sm:$0x1]
    %99 = vrot.lane.b32.xlu0 %v98, 34
    %v100 = vpop.permute.xlu0 %99
    %vm101 = vcmask 425232
    %s102 = scalar_lea.vmem [#allocation0], 1
    %103 = vst.msk [vmem:[%s102] sm:$0x1] %vm101, %v100
    %s104 = scalar_lea.vmem %s0, 16
    %v105 = vld [vmem:[%s104] sm:$0x1]
    %106 = vrot.lane.b32.xlu0 %v105, 32
    %v107 = vpop.permute.xlu0 %106
    %vm108 = vcmask 408832
    %s109 = scalar_lea.vmem [#allocation0], 2
    %110 = vst.msk [vmem:[%s109] sm:$0x1] %vm108, %v107
    %s111 = scalar_lea.vmem %s0, 1
    %v112 = vld [vmem:[%s111] sm:$0x1]
    %113 = vrot.lane.b32.xlu0 %v112, 18
    %v114 = vpop.permute.xlu0 %113
    %vm115 = vcmask 294032
    %116 = vst.msk [vmem:[#allocation0] sm:$0x1] %vm115, %v114
    %s117 = scalar_lea.vmem %s0, 8
    %v118 = vld [vmem:[%s117] sm:$0x1]
    %119 = vrot.lane.b32.xlu0 %v118, 16
    %v120 = vpop.permute.xlu0 %119
    %vm121 = vcmask 277632
    %s122 = scalar_lea.vmem [#allocation0], 1
    %123 = vst.msk [vmem:[%s122] sm:$0x1] %vm121, %v120
    %s124 = scalar_lea.vmem %s0, 15
    %v125 = vld [vmem:[%s124] sm:$0x1]
    %126 = vrot.lane.b32.xlu0 %v125, 14
    %v127 = vpop.permute.xlu0 %126
    %vm128 = vcmask 261232
    %s129 = scalar_lea.vmem [#allocation0], 2
    %130 = vst.msk [vmem:[%s129] sm:$0x1] %vm128, %v127
    %s132 = ssub.s32 16, 1
    %v133 = vld [vmem:[#allocation0] sm:%s132]
    %s135 = ssub.s32 16, 1
    %136 = vst [vmem:[%s1] sm:%s135] %v133

// kernel: tile.7
$region0: #{tile.7}
  %s0 = inlined_call_operand.vmem [shape: f32[2,324], index: 0, kind: input, shape index: {}]
  %s1 = inlined_call_operand.vmem [shape: f32[648], index: 1, kind: output, shape index: {}]
  $region1: #{tile.7} parent=0
    #allocation0 [shape = 'u8[12288]{0}', space=vmem, size = 0x3000, scoped, tag = 'scoped mem for input reshape']
    %s3 = ssub.s32 4, 1
    %s4 = scalar_lea.vmem %s0, 4
    %v5 = vld [vmem:[%s4] sm:%s3]
    %s6 = scalar_lea.vmem [#allocation0], 16
    %7 = vst [vmem:[%s6] sm:%s3] %v5
    %s8 = scalar_lea.vmem %s0, 2
    %v9 = vld [vmem:[%s8] sm:%s3]
    %s10 = scalar_lea.vmem [#allocation0], 8
    %11 = vst [vmem:[%s10] sm:%s3] %v9
    %v12 = vld [vmem:[%s0] sm:%s3]
    %13 = vst [vmem:[#allocation0] sm:%s3] %v12
    %s14 = scalar_lea.vmem [#allocation0], 16
    %v15 = vld [vmem:[%s14] sm:$0x1]
    %vm16 = vcmask 556032
    %s17 = scalar_lea.vmem %s1, 2
    %18 = vst.msk [vmem:[%s17] sm:$0x1] %vm16, %v15
    %s19 = smov 3
    %v20 = vld [vmem:[#allocation0] ss:$8 sm:%s19]
    %21 = vst [vmem:[%s1] sm:$0x3] %v20
    %s22 = scalar_lea.vmem [#allocation0], 17
    %v23 = vld [vmem:[%s22] sm:$0x1]
    %s24 = scalar_lea.vmem [#allocation0], 1
    %v25 = vld [vmem:[%s24] ss:$8 sm:$0x7]
    %vm26 = vcmask 490496
    %v27 = vsel %vm26, %v25, %v23
    %28 = vrot.lane.b32.xlu0 %v27, 68
    %v29 = vpop.permute.xlu0 %28
    %vm30 = vcmask 64512
    %s31 = scalar_lea.vmem %s1, 5
    %32 = vst.msk [vmem:[%s31] sm:$0x1] %vm30, %v29
    %vm33 = vcmask 1048096
    %s34 = scalar_lea.vmem %s1, 2
    %35 = vst.msk [vmem:[%s34] sm:$0x7] %vm33, %v29
    %s36 = scalar_lea.vmem [#allocation0], 1
    %s37 = smov 3
    %v38 = vld [vmem:[%s36] ss:$8 sm:%s37]
    %39 = vrot.lane.b32.xlu0 %v38, 68
    %v40 = vpop.permute.xlu0 %39
    %vm41 = vcmask 556032
    %s42 = scalar_lea.vmem %s1, 3
    %43 = vst.msk [vmem:[%s42] sm:$0x3] %vm41, %v40

// kernel: in_conv_forward.5
$region0: #{in_conv_forward.5}
  #allocation0 [shape = 'u32[]', space=smem, size = 0x4, offset = 0x4, fixed_abs, tag = 'smem constant byte address 0x4 - core index']
  #allocation1 [shape = 'u32[72,128]{1,0:T(1,128)}', space=vmem, size = 0x9000, scoped, tag = 'internal scratch']
  %s0 = inlined_call_operand.vmem [shape: f32[768,128], index: 0, kind: input, shape index: {}]
  %s1 = inlined_call_operand.vmem [shape: f32[1,128], index: 1, kind: input, shape index: {}]
  %s2 = inlined_call_operand.vmem [shape: f32[1,128], index: 2, kind: input, shape index: {}]
  %s3 = inlined_call_operand.vmem [shape: f32[768,1], index: 3, kind: input, shape index: {}]
  %s4 = inlined_call_operand.vmem [shape: f32[1280,128], index: 4, kind: output, shape index: {}]
  %s5 = sld [smem:[#allocation0]]
  $region57: #{in_conv_forward.5} parent=0
    _
  %s7 = ssub.s32 1, %s5
  %s8 = scalar_select 0, %s7, %s5
  loop: start=0, step=1, limit=7
  $region2: #{in_conv_forward.5} parent=0 // loop_pre_header
    _
  $region3: #{in_conv_forward.5} parent=0 // loop_header
    %s10 = sphi 0, %s14
    %p11 = scmp.ge.s32.totalorder %s10, 7
    %s30 = sphi 0, %s32
    %s33 = sphi 0, %s30
    %s34 = sphi 0, %s33
    %s50 = sphi 0, %s34
    %s54 = sphi 0, %s54
    %s56 = sphi 0, %s54
    %s57 = sphi 0, %s56
    %s71 = sphi 0, %s57
    %s75 = sphi 0, %s75
    %s77 = sphi 0, %s75
    %s78 = sphi 0, %s77
    %s92 = sphi 0, %s78
    %s108 = sphi 0, %s110
    %s111 = sphi 0, %s108
    %s112 = sphi 0, %s111
    %s128 = sphi 0, %s112
    %s134 = sphi 0, %s136
    %s137 = sphi 0, %s134
    %s138 = sphi 0, %s137
    %s154 = sphi 0, %s138
  $region4: #{in_conv_forward.5} parent=0 // loop_header_branch
    %13 = sbr.rel (%p11) target = $region8
  $region5: #{in_conv_forward.5} parent=0 // loop_body
    %s15 = ssub.s32 %s10, 1
    %s16 = ssub.s32 %s10, 2
    %s17 = sadd.s32 %s10, 1
    %s18 = ssub.s32 %s10, 1
    %p19 = scmp.lt.s32.totalorder %s18, 2
    %s20 = scalar_select %p19, %s18, 2
    %p21 = scmp.gt.s32.totalorder %s20, 0
    %s22 = scalar_select %p21, %s20, 0
    %s23 = ssub.s32 %s17, 1
    %p24 = scmp.lt.s32.totalorder %s23, 2
    %s25 = scalar_select %p24, %s23, 2
    %p26 = scmp.gt.s32.totalorder %s25, 0
    %s27 = scalar_select %p26, %s25, 0
    %s28 = ssub.s32 %s22, %s27
    %p29 = scmp.eq.s32.totalorder %s28, 0
    %s31 = sadd.s32 %s30, 1
    %s32 = scalar_select %p29, %s30, %s31
    %p35 = pneg %p29
    %p36 = scmp.eq.s32.totalorder %s10, 4
    %p37 = por %p35, %p36
    %p38 = scmp.ne.s32.totalorder %s30, %s33
    %p39 = scmp.eq.s32.totalorder %s10, 0
    %p40 = por %p38, %p39
    %p41 = scmp.ne.s32.totalorder %s30, %s33
    %p42 = scmp.eq.s32.totalorder %s15, 4
    %p43 = por %p41, %p42
    %p44 = scmp.ne.s32.totalorder %s33, %s34
    %p45 = scmp.eq.s32.totalorder %s15, 0
    %p46 = por %p44, %p45
    %p47 = scmp.ne.s32.totalorder %s33, %s34
    %p48 = scmp.eq.s32.totalorder %s16, 4
    %p49 = por %p47, %p48
    %p51 = scmp.ne.s32.totalorder %s34, %s50
    %p52 = scmp.eq.s32.totalorder %s16, 0
    %p53 = por %p51, %p52
    %s55 = sadd.s32 %s54, 1
    %p58 = scmp.eq.s32.totalorder %s10, 4
    %p59 = scmp.ne.s32.totalorder %s54, %s56
    %p60 = scmp.eq.s32.totalorder %s10, 0
    %p61 = por %p59, %p60
    %p62 = scmp.ne.s32.totalorder %s54, %s56
    %p63 = scmp.eq.s32.totalorder %s15, 4
    %p64 = por %p62, %p63
    %p65 = scmp.ne.s32.totalorder %s56, %s57
    %p66 = scmp.eq.s32.totalorder %s15, 0
    %p67 = por %p65, %p66
    %p68 = scmp.ne.s32.totalorder %s56, %s57
    %p69 = scmp.eq.s32.totalorder %s16, 4
    %p70 = por %p68, %p69
    %p72 = scmp.ne.s32.totalorder %s57, %s71
    %p73 = scmp.eq.s32.totalorder %s16, 0
    %p74 = por %p72, %p73
    %s76 = sadd.s32 %s75, 1
    %p79 = scmp.eq.s32.totalorder %s10, 4
    %p80 = scmp.ne.s32.totalorder %s75, %s77
    %p81 = scmp.eq.s32.totalorder %s10, 0
    %p82 = por %p80, %p81
    %p83 = scmp.ne.s32.totalorder %s75, %s77
    %p84 = scmp.eq.s32.totalorder %s15, 4
    %p85 = por %p83, %p84
    %p86 = scmp.ne.s32.totalorder %s77, %s78
    %p87 = scmp.eq.s32.totalorder %s15, 0
    %p88 = por %p86, %p87
    %p89 = scmp.ne.s32.totalorder %s77, %s78
    %p90 = scmp.eq.s32.totalorder %s16, 4
    %p91 = por %p89, %p90
    %p93 = scmp.ne.s32.totalorder %s78, %s92
    %p94 = scmp.eq.s32.totalorder %s16, 0
    %p95 = por %p93, %p94
    %s96 = ssub.s32 %s10, 1
    %p97 = scmp.lt.s32.totalorder %s96, 2
    %s98 = scalar_select %p97, %s96, 2
    %p99 = scmp.gt.s32.totalorder %s98, 0
    %s100 = scalar_select %p99, %s98, 0
    %s101 = ssub.s32 %s17, 1
    %p102 = scmp.lt.s32.totalorder %s101, 2
    %s103 = scalar_select %p102, %s101, 2
    %p104 = scmp.gt.s32.totalorder %s103, 0
    %s105 = scalar_select %p104, %s103, 0
    %s106 = ssub.s32 %s100, %s105
    %p107 = scmp.eq.s32.totalorder %s106, 0
    %s109 = sadd.s32 %s108, 1
    %s110 = scalar_select %p107, %s108, %s109
    %p113 = pneg %p107
    %p114 = scmp.eq.s32.totalorder %s10, 4
    %p115 = por %p113, %p114
    %p116 = scmp.ne.s32.totalorder %s108, %s111
    %p117 = scmp.eq.s32.totalorder %s10, 0
    %p118 = por %p116, %p117
    %p119 = scmp.ne.s32.totalorder %s108, %s111
    %p120 = scmp.eq.s32.totalorder %s15, 4
    %p121 = por %p119, %p120
    %p122 = scmp.ne.s32.totalorder %s111, %s112
    %p123 = scmp.eq.s32.totalorder %s15, 0
    %p124 = por %p122, %p123
    %p125 = scmp.ne.s32.totalorder %s111, %s112
    %p126 = scmp.eq.s32.totalorder %s16, 4
    %p127 = por %p125, %p126
    %p129 = scmp.ne.s32.totalorder %s112, %s128
    %p130 = scmp.eq.s32.totalorder %s16, 0
    %p131 = por %p129, %p130
    %s132 = ssub.s32 %s10, %s17
    %p133 = scmp.eq.s32.totalorder %s132, 0
    %s135 = sadd.s32 %s134, 1
    %s136 = scalar_select %p133, %s134, %s135
    %p139 = pneg %p133
    %p140 = scmp.eq.s32.totalorder %s10, 4
    %p141 = por %p139, %p140
    %p142 = scmp.ne.s32.totalorder %s134, %s137
    %p143 = scmp.eq.s32.totalorder %s10, 0
    %p144 = por %p142, %p143
    %p145 = scmp.ne.s32.totalorder %s134, %s137
    %p146 = scmp.eq.s32.totalorder %s15, 4
    %p147 = por %p145, %p146
    %p148 = scmp.ne.s32.totalorder %s137, %s138
    %p149 = scmp.eq.s32.totalorder %s15, 0
    %p150 = por %p148, %p149
    %p151 = scmp.ne.s32.totalorder %s137, %s138
    %p152 = scmp.eq.s32.totalorder %s16, 4
    %p153 = por %p151, %p152
    %p155 = scmp.ne.s32.totalorder %s138, %s154
    %p156 = scmp.eq.s32.totalorder %s16, 0
    %p157 = por %p155, %p156
    %p158 = scmp.le.s32.totalorder 1, %s10
    %p159 = scmp.lt.s32.totalorder %s10, 6
    %p160 = pnand %p158, %p159
    %p161 = pneg %p160
    // Predicated region
    $region9: #{in_conv_forward.5} parent=5 // pred_check
      _
    $region10: #{in_conv_forward.5} parent=5 // pred_check_branch
      %163 = sbr.rel (%p160) target = $region12
    $region11: #{in_conv_forward.5} parent=5 // pred_region
      %s164 = ssub.s32 %s10, 1
      // Predicated region
      $region13: #{in_conv_forward.5} parent=11 // pred_check
        %p165 = pneg %p67
      $region14: #{in_conv_forward.5} parent=11 // pred_check_branch
        %167 = sbr.rel (%p165) target = $region16
      $region15: #{in_conv_forward.5} parent=11 // pred_region
        _
      $region16: #{in_conv_forward.5} parent=11 // pred_fallthru
        _
      // Predicated region
      $region17: #{in_conv_forward.5} parent=11 // pred_check
        %p168 = pneg %p88
      $region18: #{in_conv_forward.5} parent=11 // pred_check_branch
        %170 = sbr.rel (%p168) target = $region20
      $region19: #{in_conv_forward.5} parent=11 // pred_region
        _
      $region20: #{in_conv_forward.5} parent=11 // pred_fallthru
        _
    $region12: #{in_conv_forward.5} parent=5 // pred_fallthru
      _
    %p171 = scmp.lt.s32.totalorder %s10, 5
    // Predicated region
    $region21: #{in_conv_forward.5} parent=5 // pred_check
      %p172 = pneg %p171
    $region22: #{in_conv_forward.5} parent=5 // pred_check_branch
      %174 = sbr.rel (%p172) target = $region24
    $region23: #{in_conv_forward.5} parent=5 // pred_region
      // Predicated region
      $region25: #{in_conv_forward.5} parent=23 // pred_check
        %p175 = pneg %p40
      $region26: #{in_conv_forward.5} parent=23 // pred_check_branch
        %177 = sbr.rel (%p175) target = $region28
      $region27: #{in_conv_forward.5} parent=23 // pred_region
        %s178 = ssub.s32 %s10, 1
        %p179 = scmp.lt.s32.totalorder %s178, 2
        %s180 = scalar_select %p179, %s178, 2
        %p181 = scmp.gt.s32.totalorder %s180, 0
        %s182 = scalar_select %p181, %s180, 0
        %s183 = smul.u32 32, %s182
        %p184 = scmp.lt.s32.totalorder %s183, 95
        %s185 = scalar_select %p184, %s183, 95
        %s186 = smul.addr %s185, 8
        %s187 = scalar_lea.vmem %s0, %s186
        %s188 = ssub.s32 %s10, 1
        %p189 = scmp.lt.s32.totalorder %s188, 2
        %s190 = scalar_select %p189, %s188, 2
        %p191 = scmp.gt.s32.totalorder %s190, 0
        %s192 = scalar_select %p191, %s190, 0
        %s193 = smul.u32 32, %s192
      $region28: #{in_conv_forward.5} parent=23 // pred_fallthru
        _
      // Predicated region
      $region29: #{in_conv_forward.5} parent=23 // pred_check
        %p194 = pneg %p118
      $region30: #{in_conv_forward.5} parent=23 // pred_check_branch
        %196 = sbr.rel (%p194) target = $region32
      $region31: #{in_conv_forward.5} parent=23 // pred_region
        %s197 = ssub.s32 %s10, 1
        %p198 = scmp.lt.s32.totalorder %s197, 2
        %s199 = scalar_select %p198, %s197, 2
        %p200 = scmp.gt.s32.totalorder %s199, 0
        %s201 = scalar_select %p200, %s199, 0
        %s202 = smul.u32 32, %s201
        %p203 = scmp.lt.s32.totalorder %s202, 95
        %s204 = scalar_select %p203, %s202, 95
        %s205 = smul.addr %s204, 8
        %s206 = scalar_lea.vmem %s3, %s205
        %s207 = ssub.s32 %s10, 1
        %p208 = scmp.lt.s32.totalorder %s207, 2
        %s209 = scalar_select %p208, %s207, 2
        %p210 = scmp.gt.s32.totalorder %s209, 0
        %s211 = scalar_select %p210, %s209, 0
        %s212 = smul.u32 32, %s211
      $region32: #{in_conv_forward.5} parent=23 // pred_fallthru
        _
    $region24: #{in_conv_forward.5} parent=5 // pred_fallthru
      _
    %p213 = scmp.le.s32.totalorder 1, %s10
    %p214 = scmp.lt.s32.totalorder %s10, 6
    %p215 = pnand %p213, %p214
    %p216 = pneg %p215
    // Predicated region
    $region33: #{in_conv_forward.5} parent=5 // pred_check
      _
    $region34: #{in_conv_forward.5} parent=5 // pred_check_branch
      %218 = sbr.rel (%p215) target = $region36
    $region35: #{in_conv_forward.5} parent=5 // pred_region
      %s219 = ssub.s32 %s10, 1
      %s220 = ssub.s32 %s15, 1
      %p221 = scmp.lt.s32.totalorder %s220, 2
      %s222 = scalar_select %p221, %s220, 2
      %p223 = scmp.gt.s32.totalorder %s222, 0
      %s224 = scalar_select %p223, %s222, 0
      %s225 = smul.u32 32, %s224
      %p226 = scmp.lt.s32.totalorder %s225, 95
      %s227 = scalar_select %p226, %s225, 95
      %s228 = smul.addr %s227, 8
      %s229 = scalar_lea.vmem %s0, %s228
      %p230 = pneg %p46
      %p231 = pneg %p43
      %p232 = pneg %p67
      %p233 = pneg %p64
      %p234 = pneg %p88
      %p235 = pneg %p85
      %s236 = ssub.s32 %s15, 1
      %p237 = scmp.lt.s32.totalorder %s236, 2
      %s238 = scalar_select %p237, %s236, 2
      %p239 = scmp.gt.s32.totalorder %s238, 0
      %s240 = scalar_select %p239, %s238, 0
      %s241 = smul.u32 32, %s240
      %p242 = scmp.lt.s32.totalorder %s241, 95
      %s243 = scalar_select %p242, %s241, 95
      %s244 = smul.addr %s243, 8
      %s245 = scalar_lea.vmem %s3, %s244
      %p246 = pneg %p124
      %p247 = pneg %p121
      %p248 = pneg %p150
      %p249 = pneg %p147
      %s250 = smul.u32 32, %s15
      %p251 = scmp.lt.s32.totalorder %s250, 159
      %s252 = scalar_select %p251, %s250, 159
      %s253 = smul.addr %s252, 8
      %s254 = scalar_lea.vmem %s4, %s253
      %s255 = ssub.s32 %s15, 1
      %p256 = scmp.lt.s32.totalorder %s255, 2
      %s257 = scalar_select %p256, %s255, 2
      %p258 = scmp.gt.s32.totalorder %s257, 0
      %s259 = scalar_select %p258, %s257, 0
      %s260 = smul.u32 32, %s259
      %p261 = scmp.lt.s32.totalorder %s260, 95
      %s262 = scalar_select %p261, %s260, 95
      %s263 = smul.addr %s262, 8
      %s264 = scalar_lea.vmem %s0, %s263
      %s265 = ssub.s32 %s15, 1
      %p266 = scmp.lt.s32.totalorder %s265, 2
      %s267 = scalar_select %p266, %s265, 2
      %p268 = scmp.gt.s32.totalorder %s267, 0
      %s269 = scalar_select %p268, %s267, 0
      %s270 = smul.u32 32, %s269
      %s271 = ssub.s32 %s15, 1
      %p272 = scmp.lt.s32.totalorder %s271, 2
      %s273 = scalar_select %p272, %s271, 2
      %p274 = scmp.gt.s32.totalorder %s273, 0
      %s275 = scalar_select %p274, %s273, 0
      %s276 = smul.u32 32, %s275
      %p277 = scmp.lt.s32.totalorder %s276, 95
      %s278 = scalar_select %p277, %s276, 95
      %s279 = smul.addr %s278, 8
      %s280 = scalar_lea.vmem %s3, %s279
      %s281 = ssub.s32 %s15, 1
      %p282 = scmp.lt.s32.totalorder %s281, 2
      %s283 = scalar_select %p282, %s281, 2
      %p284 = scmp.gt.s32.totalorder %s283, 0
      %s285 = scalar_select %p284, %s283, 0
      %s286 = smul.u32 32, %s285
      %s287 = smul.u32 32, %s15
      %p288 = scmp.lt.s32.totalorder %s287, 159
      %s289 = scalar_select %p288, %s287, 159
      %s290 = smul.addr %s289, 8
      %s291 = scalar_lea.vmem %s4, %s290
      %s292 = smul.u32 32, %s15
      %p293 = scmp.eq.s32.totalorder %s15, 0
      %p294 = scmp.eq.s32.totalorder %s15, 4
      %p295 = por %p293, %p294
      // Predicated region
      $region37: #{in_conv_forward.5} parent=35 // pred_check
        %p296 = pneg %p295
      $region38: #{in_conv_forward.5} parent=35 // pred_check_branch
        %298 = sbr.rel (%p296) target = $region40
      $region39: #{in_conv_forward.5} parent=35 // pred_region
        %299 = vst [vmem:[%s291] sm:$0xff] 0.0
        %300 = vst [vmem:[%s291 + $0x8] sm:$0xff] 0.0
        %301 = vst [vmem:[%s291 + $0x10] sm:$0xff] 0.0
        %302 = vst [vmem:[%s291 + $0x18] sm:$0xff] 0.0
        %303 = vst [vmem:[%s291 + $0x20] sm:$0xff] 0.0
        %304 = vst [vmem:[%s291 + $0x28] sm:$0xff] 0.0
        %305 = vst [vmem:[%s291 + $0x30] sm:$0xff] 0.0
        %306 = vst [vmem:[%s291 + $0x38] sm:$0xff] 0.0
        %307 = vst [vmem:[%s291 + $0x40] sm:$0xff] 0.0
        %308 = vst [vmem:[%s291 + $0x48] sm:$0xff] 0.0
        %309 = vst [vmem:[%s291 + $0x50] sm:$0xff] 0.0
        %310 = vst [vmem:[%s291 + $0x58] sm:$0xff] 0.0
        %311 = vst [vmem:[%s291 + $0x60] sm:$0xff] 0.0
        %312 = vst [vmem:[%s291 + $0x68] sm:$0xff] 0.0
        %313 = vst [vmem:[%s291 + $0x70] sm:$0xff] 0.0
        %314 = vst [vmem:[%s291 + $0x78] sm:$0xff] 0.0
        %315 = vst [vmem:[%s291 + $0x80] sm:$0xff] 0.0
        %316 = vst [vmem:[%s291 + $0x88] sm:$0xff] 0.0
        %317 = vst [vmem:[%s291 + $0x90] sm:$0xff] 0.0
        %318 = vst [vmem:[%s291 + $0x98] sm:$0xff] 0.0
        %319 = vst [vmem:[%s291 + $0xa0] sm:$0xff] 0.0
        %320 = vst [vmem:[%s291 + $0xa8] sm:$0xff] 0.0
        %321 = vst [vmem:[%s291 + $0xb0] sm:$0xff] 0.0
        %322 = vst [vmem:[%s291 + $0xb8] sm:$0xff] 0.0
        %323 = vst [vmem:[%s291 + $0xc0] sm:$0xff] 0.0
        %324 = vst [vmem:[%s291 + $0xc8] sm:$0xff] 0.0
        %325 = vst [vmem:[%s291 + $0xd0] sm:$0xff] 0.0
        %326 = vst [vmem:[%s291 + $0xd8] sm:$0xff] 0.0
        %327 = vst [vmem:[%s291 + $0xe0] sm:$0xff] 0.0
        %328 = vst [vmem:[%s291 + $0xe8] sm:$0xff] 0.0
        %329 = vst [vmem:[%s291 + $0xf0] sm:$0xff] 0.0
        %330 = vst [vmem:[%s291 + $0xf8] sm:$0xff] 0.0
      $region40: #{in_conv_forward.5} parent=35 // pred_fallthru
        _
      %p331 = pneg %p295
      // Predicated region
      $region41: #{in_conv_forward.5} parent=35 // pred_check
        _
      $region42: #{in_conv_forward.5} parent=35 // pred_check_branch
        %333 = sbr.rel (%p295) target = $region44
      $region43: #{in_conv_forward.5} parent=35 // pred_region
        %v334 = vld [vmem:[%s264] sm:$0xff]
        %v335 = vld [vmem:[%s264 + $0x8] sm:$0xff]
        %v336 = vld [vmem:[%s264 + $0x10] sm:$0xff]
        %v337 = vld [vmem:[%s264 + $0x18] sm:$0xff]
        %v338 = vld [vmem:[%s264 + $0x20] sm:$0xff]
        %v339 = vld [vmem:[%s264 + $0x28] sm:$0xff]
        %v340 = vld [vmem:[%s264 + $0x30] sm:$0xff]
        %v341 = vld [vmem:[%s264 + $0x38] sm:$0xff]
        %v342 = vld [vmem:[%s264 + $0x40] sm:$0xff]
        %v343 = vld [vmem:[%s264 + $0x48] sm:$0xff]
        %v344 = vld [vmem:[%s264 + $0x50] sm:$0xff]
        %v345 = vld [vmem:[%s264 + $0x58] sm:$0xff]
        %v346 = vld [vmem:[%s264 + $0x60] sm:$0xff]
        %v347 = vld [vmem:[%s264 + $0x68] sm:$0xff]
        %v348 = vld [vmem:[%s264 + $0x70] sm:$0xff]
        %v349 = vld [vmem:[%s264 + $0x78] sm:$0xff]
        %v350 = vld [vmem:[%s264 + $0x80] sm:$0xff]
        %v351 = vld [vmem:[%s264 + $0x88] sm:$0xff]
        %v352 = vld [vmem:[%s264 + $0x90] sm:$0xff]
        %v353 = vld [vmem:[%s264 + $0x98] sm:$0xff]
        %v354 = vld [vmem:[%s264 + $0xa0] sm:$0xff]
        %v355 = vld [vmem:[%s264 + $0xa8] sm:$0xff]
        %v356 = vld [vmem:[%s264 + $0xb0] sm:$0xff]
        %v357 = vld [vmem:[%s264 + $0xb8] sm:$0xff]
        %v358 = vld [vmem:[%s264 + $0xc0] sm:$0xff]
        %v359 = vld [vmem:[%s264 + $0xc8] sm:$0xff]
        %v360 = vld [vmem:[%s264 + $0xd0] sm:$0xff]
        %v361 = vld [vmem:[%s264 + $0xd8] sm:$0xff]
        %v362 = vld [vmem:[%s264 + $0xe0] sm:$0xff]
        %v363 = vld [vmem:[%s264 + $0xe8] sm:$0xff]
        %v364 = vld [vmem:[%s264 + $0xf0] sm:$0xff]
        %v365 = vld [vmem:[%s264 + $0xf8] sm:$0xff]
        %v366 = vld [vmem:[%s1] sm:$0x1]
        %v368 = vperm.slane %v366, 0
        %v370 = vmul.f32 %v334, %v368
        %v371 = vmul.f32 %v335, %v368
        %v372 = vmul.f32 %v336, %v368
        %v373 = vmul.f32 %v337, %v368
        %v374 = vmul.f32 %v338, %v368
        %v375 = vmul.f32 %v339, %v368
        %v376 = vmul.f32 %v340, %v368
        %v377 = vmul.f32 %v341, %v368
        %v378 = vmul.f32 %v342, %v368
        %v379 = vmul.f32 %v343, %v368
        %v380 = vmul.f32 %v344, %v368
        %v381 = vmul.f32 %v345, %v368
        %v382 = vmul.f32 %v346, %v368
        %v383 = vmul.f32 %v347, %v368
        %v384 = vmul.f32 %v348, %v368
        %v385 = vmul.f32 %v349, %v368
        %v386 = vmul.f32 %v350, %v368
        %v387 = vmul.f32 %v351, %v368
        %v388 = vmul.f32 %v352, %v368
        %v389 = vmul.f32 %v353, %v368
        %v390 = vmul.f32 %v354, %v368
        %v391 = vmul.f32 %v355, %v368
        %v392 = vmul.f32 %v356, %v368
        %v393 = vmul.f32 %v357, %v368
        %v394 = vmul.f32 %v358, %v368
        %v395 = vmul.f32 %v359, %v368
        %v396 = vmul.f32 %v360, %v368
        %v397 = vmul.f32 %v361, %v368
        %v398 = vmul.f32 %v362, %v368
        %v399 = vmul.f32 %v363, %v368
        %v400 = vmul.f32 %v364, %v368
        %v401 = vmul.f32 %v365, %v368
        %v402 = vld [vmem:[%s2] sm:$0x1]
        %v404 = vperm.slane %v402, 0
        %v406 = vadd.f32 %v370, %v404
        %v407 = vadd.f32 %v371, %v404
        %v408 = vadd.f32 %v372, %v404
        %v409 = vadd.f32 %v373, %v404
        %v410 = vadd.f32 %v374, %v404
        %v411 = vadd.f32 %v375, %v404
        %v412 = vadd.f32 %v376, %v404
        %v413 = vadd.f32 %v377, %v404
        %v414 = vadd.f32 %v378, %v404
        %v415 = vadd.f32 %v379, %v404
        %v416 = vadd.f32 %v380, %v404
        %v417 = vadd.f32 %v381, %v404
        %v418 = vadd.f32 %v382, %v404
        %v419 = vadd.f32 %v383, %v404
        %v420 = vadd.f32 %v384, %v404
        %v421 = vadd.f32 %v385, %v404
        %v422 = vadd.f32 %v386, %v404
        %v423 = vadd.f32 %v387, %v404
        %v424 = vadd.f32 %v388, %v404
        %v425 = vadd.f32 %v389, %v404
        %v426 = vadd.f32 %v390, %v404
        %v427 = vadd.f32 %v391, %v404
        %v428 = vadd.f32 %v392, %v404
        %v429 = vadd.f32 %v393, %v404
        %v430 = vadd.f32 %v394, %v404
        %v431 = vadd.f32 %v395, %v404
        %v432 = vadd.f32 %v396, %v404
        %v433 = vadd.f32 %v397, %v404
        %v434 = vadd.f32 %v398, %v404
        %v435 = vadd.f32 %v399, %v404
        %v436 = vadd.f32 %v400, %v404
        %v437 = vadd.f32 %v401, %v404
        %v438 = vmax.f32 %v406, 0.0
        %v439 = vmax.f32 %v407, 0.0
        %v440 = vmax.f32 %v408, 0.0
        %v441 = vmax.f32 %v409, 0.0
        %v442 = vmax.f32 %v410, 0.0
        %v443 = vmax.f32 %v411, 0.0
        %v444 = vmax.f32 %v412, 0.0
        %v445 = vmax.f32 %v413, 0.0
        %v446 = vmax.f32 %v414, 0.0
        %v447 = vmax.f32 %v415, 0.0
        %v448 = vmax.f32 %v416, 0.0
        %v449 = vmax.f32 %v417, 0.0
        %v450 = vmax.f32 %v418, 0.0
        %v451 = vmax.f32 %v419, 0.0
        %v452 = vmax.f32 %v420, 0.0
        %v453 = vmax.f32 %v421, 0.0
        %v454 = vmax.f32 %v422, 0.0
        %v455 = vmax.f32 %v423, 0.0
        %v456 = vmax.f32 %v424, 0.0
        %v457 = vmax.f32 %v425, 0.0
        %v458 = vmax.f32 %v426, 0.0
        %v459 = vmax.f32 %v427, 0.0
        %v460 = vmax.f32 %v428, 0.0
        %v461 = vmax.f32 %v429, 0.0
        %v462 = vmax.f32 %v430, 0.0
        %v463 = vmax.f32 %v431, 0.0
        %v464 = vmax.f32 %v432, 0.0
        %v465 = vmax.f32 %v433, 0.0
        %v466 = vmax.f32 %v434, 0.0
        %v467 = vmax.f32 %v435, 0.0
        %v468 = vmax.f32 %v436, 0.0
        %v469 = vmax.f32 %v437, 0.0
        %v470 = vld [vmem:[%s280] sm:$0xff]
        %v471 = vld [vmem:[%s280 + $0x8] sm:$0xff]
        %v472 = vld [vmem:[%s280 + $0x10] sm:$0xff]
        %v473 = vld [vmem:[%s280 + $0x18] sm:$0xff]
        %v474 = vld [vmem:[%s280 + $0x20] sm:$0xff]
        %v475 = vld [vmem:[%s280 + $0x28] sm:$0xff]
        %v476 = vld [vmem:[%s280 + $0x30] sm:$0xff]
        %v477 = vld [vmem:[%s280 + $0x38] sm:$0xff]
        %v478 = vld [vmem:[%s280 + $0x40] sm:$0xff]
        %v479 = vld [vmem:[%s280 + $0x48] sm:$0xff]
        %v480 = vld [vmem:[%s280 + $0x50] sm:$0xff]
        %v481 = vld [vmem:[%s280 + $0x58] sm:$0xff]
        %v482 = vld [vmem:[%s280 + $0x60] sm:$0xff]
        %v483 = vld [vmem:[%s280 + $0x68] sm:$0xff]
        %v484 = vld [vmem:[%s280 + $0x70] sm:$0xff]
        %v485 = vld [vmem:[%s280 + $0x78] sm:$0xff]
        %v486 = vld [vmem:[%s280 + $0x80] sm:$0xff]
        %v487 = vld [vmem:[%s280 + $0x88] sm:$0xff]
        %v488 = vld [vmem:[%s280 + $0x90] sm:$0xff]
        %v489 = vld [vmem:[%s280 + $0x98] sm:$0xff]
        %v490 = vld [vmem:[%s280 + $0xa0] sm:$0xff]
        %v491 = vld [vmem:[%s280 + $0xa8] sm:$0xff]
        %v492 = vld [vmem:[%s280 + $0xb0] sm:$0xff]
        %v493 = vld [vmem:[%s280 + $0xb8] sm:$0xff]
        %v494 = vld [vmem:[%s280 + $0xc0] sm:$0xff]
        %v495 = vld [vmem:[%s280 + $0xc8] sm:$0xff]
        %v496 = vld [vmem:[%s280 + $0xd0] sm:$0xff]
        %v497 = vld [vmem:[%s280 + $0xd8] sm:$0xff]
        %v498 = vld [vmem:[%s280 + $0xe0] sm:$0xff]
        %v499 = vld [vmem:[%s280 + $0xe8] sm:$0xff]
        %v500 = vld [vmem:[%s280 + $0xf0] sm:$0xff]
        %v501 = vld [vmem:[%s280 + $0xf8] sm:$0xff]
        %503 = vset.pattern.permute.xlu0 0
        %504 = vperm.xlu0 %503, %v470
        %v505 = vpop.permute.xlu0 %504
        %508 = vset.pattern.permute.xlu0 0
        %509 = vperm.xlu0 %508, %v471
        %v510 = vpop.permute.xlu0 %509
        %513 = vset.pattern.permute.xlu0 0
        %514 = vperm.xlu0 %513, %v472
        %v515 = vpop.permute.xlu0 %514
        %518 = vset.pattern.permute.xlu0 0
        %519 = vperm.xlu0 %518, %v473
        %v520 = vpop.permute.xlu0 %519
        %523 = vset.pattern.permute.xlu0 0
        %524 = vperm.xlu0 %523, %v474
        %v525 = vpop.permute.xlu0 %524
        %528 = vset.pattern.permute.xlu0 0
        %529 = vperm.xlu0 %528, %v475
        %v530 = vpop.permute.xlu0 %529
        %533 = vset.pattern.permute.xlu0 0
        %534 = vperm.xlu0 %533, %v476
        %v535 = vpop.permute.xlu0 %534
        %538 = vset.pattern.permute.xlu0 0
        %539 = vperm.xlu0 %538, %v477
        %v540 = vpop.permute.xlu0 %539
        %543 = vset.pattern.permute.xlu0 0
        %544 = vperm.xlu0 %543, %v478
        %v545 = vpop.permute.xlu0 %544
        %548 = vset.pattern.permute.xlu0 0
        %549 = vperm.xlu0 %548, %v479
        %v550 = vpop.permute.xlu0 %549
        %553 = vset.pattern.permute.xlu0 0
        %554 = vperm.xlu0 %553, %v480
        %v555 = vpop.permute.xlu0 %554
        %558 = vset.pattern.permute.xlu0 0
        %559 = vperm.xlu0 %558, %v481
        %v560 = vpop.permute.xlu0 %559
        %563 = vset.pattern.permute.xlu0 0
        %564 = vperm.xlu0 %563, %v482
        %v565 = vpop.permute.xlu0 %564
        %568 = vset.pattern.permute.xlu0 0
        %569 = vperm.xlu0 %568, %v483
        %v570 = vpop.permute.xlu0 %569
        %573 = vset.pattern.permute.xlu0 0
        %574 = vperm.xlu0 %573, %v484
        %v575 = vpop.permute.xlu0 %574
        %578 = vset.pattern.permute.xlu0 0
        %579 = vperm.xlu0 %578, %v485
        %v580 = vpop.permute.xlu0 %579
        %583 = vset.pattern.permute.xlu0 0
        %584 = vperm.xlu0 %583, %v486
        %v585 = vpop.permute.xlu0 %584
        %588 = vset.pattern.permute.xlu0 0
        %589 = vperm.xlu0 %588, %v487
        %v590 = vpop.permute.xlu0 %589
        %593 = vset.pattern.permute.xlu0 0
        %594 = vperm.xlu0 %593, %v488
        %v595 = vpop.permute.xlu0 %594
        %598 = vset.pattern.permute.xlu0 0
        %599 = vperm.xlu0 %598, %v489
        %v600 = vpop.permute.xlu0 %599
        %603 = vset.pattern.permute.xlu0 0
        %604 = vperm.xlu0 %603, %v490
        %v605 = vpop.permute.xlu0 %604
        %608 = vset.pattern.permute.xlu0 0
        %609 = vperm.xlu0 %608, %v491
        %v610 = vpop.permute.xlu0 %609
        %613 = vset.pattern.permute.xlu0 0
        %614 = vperm.xlu0 %613, %v492
        %v615 = vpop.permute.xlu0 %614
        %618 = vset.pattern.permute.xlu0 0
        %619 = vperm.xlu0 %618, %v493
        %v620 = vpop.permute.xlu0 %619
        %623 = vset.pattern.permute.xlu0 0
        %624 = vperm.xlu0 %623, %v494
        %v625 = vpop.permute.xlu0 %624
        %628 = vset.pattern.permute.xlu0 0
        %629 = vperm.xlu0 %628, %v495
        %v630 = vpop.permute.xlu0 %629
        %633 = vset.pattern.permute.xlu0 0
        %634 = vperm.xlu0 %633, %v496
        %v635 = vpop.permute.xlu0 %634
        %638 = vset.pattern.permute.xlu0 0
        %639 = vperm.xlu0 %638, %v497
        %v640 = vpop.permute.xlu0 %639
        %643 = vset.pattern.permute.xlu0 0
        %644 = vperm.xlu0 %643, %v498
        %v645 = vpop.permute.xlu0 %644
        %648 = vset.pattern.permute.xlu0 0
        %649 = vperm.xlu0 %648, %v499
        %v650 = vpop.permute.xlu0 %649
        %653 = vset.pattern.permute.xlu0 0
        %654 = vperm.xlu0 %653, %v500
        %v655 = vpop.permute.xlu0 %654
        %658 = vset.pattern.permute.xlu0 0
        %659 = vperm.xlu0 %658, %v501
        %v660 = vpop.permute.xlu0 %659
        %v662 = vmul.f32 %v438, %v505
        %v663 = vmul.f32 %v439, %v510
        %v664 = vmul.f32 %v440, %v515
        %v665 = vmul.f32 %v441, %v520
        %v666 = vmul.f32 %v442, %v525
        %v667 = vmul.f32 %v443, %v530
        %v668 = vmul.f32 %v444, %v535
        %v669 = vmul.f32 %v445, %v540
        %v670 = vmul.f32 %v446, %v545
        %v671 = vmul.f32 %v447, %v550
        %v672 = vmul.f32 %v448, %v555
        %v673 = vmul.f32 %v449, %v560
        %v674 = vmul.f32 %v450, %v565
        %v675 = vmul.f32 %v451, %v570
        %v676 = vmul.f32 %v452, %v575
        %v677 = vmul.f32 %v453, %v580
        %v678 = vmul.f32 %v454, %v585
        %v679 = vmul.f32 %v455, %v590
        %v680 = vmul.f32 %v456, %v595
        %v681 = vmul.f32 %v457, %v600
        %v682 = vmul.f32 %v458, %v605
        %v683 = vmul.f32 %v459, %v610
        %v684 = vmul.f32 %v460, %v615
        %v685 = vmul.f32 %v461, %v620
        %v686 = vmul.f32 %v462, %v625
        %v687 = vmul.f32 %v463, %v630
        %v688 = vmul.f32 %v464, %v635
        %v689 = vmul.f32 %v465, %v640
        %v690 = vmul.f32 %v466, %v645
        %v691 = vmul.f32 %v467, %v650
        %v692 = vmul.f32 %v468, %v655
        %v693 = vmul.f32 %v469, %v660
        %694 = vst [vmem:[%s291] sm:$0xff] %v662
        %695 = vst [vmem:[%s291 + $0x8] sm:$0xff] %v663
        %696 = vst [vmem:[%s291 + $0x10] sm:$0xff] %v664
        %697 = vst [vmem:[%s291 + $0x18] sm:$0xff] %v665
        %698 = vst [vmem:[%s291 + $0x20] sm:$0xff] %v666
        %699 = vst [vmem:[%s291 + $0x28] sm:$0xff] %v667
        %700 = vst [vmem:[%s291 + $0x30] sm:$0xff] %v668
        %701 = vst [vmem:[%s291 + $0x38] sm:$0xff] %v669
        %702 = vst [vmem:[%s291 + $0x40] sm:$0xff] %v670
        %703 = vst [vmem:[%s291 + $0x48] sm:$0xff] %v671
        %704 = vst [vmem:[%s291 + $0x50] sm:$0xff] %v672
        %705 = vst [vmem:[%s291 + $0x58] sm:$0xff] %v673
        %706 = vst [vmem:[%s291 + $0x60] sm:$0xff] %v674
        %707 = vst [vmem:[%s291 + $0x68] sm:$0xff] %v675
        %708 = vst [vmem:[%s291 + $0x70] sm:$0xff] %v676
        %709 = vst [vmem:[%s291 + $0x78] sm:$0xff] %v677
        %710 = vst [vmem:[%s291 + $0x80] sm:$0xff] %v678
        %711 = vst [vmem:[%s291 + $0x88] sm:$0xff] %v679
        %712 = vst [vmem:[%s291 + $0x90] sm:$0xff] %v680
        %713 = vst [vmem:[%s291 + $0x98] sm:$0xff] %v681
        %714 = vst [vmem:[%s291 + $0xa0] sm:$0xff] %v682
        %715 = vst [vmem:[%s291 + $0xa8] sm:$0xff] %v683
        %716 = vst [vmem:[%s291 + $0xb0] sm:$0xff] %v684
        %717 = vst [vmem:[%s291 + $0xb8] sm:$0xff] %v685
        %718 = vst [vmem:[%s291 + $0xc0] sm:$0xff] %v686
        %719 = vst [vmem:[%s291 + $0xc8] sm:$0xff] %v687
        %720 = vst [vmem:[%s291 + $0xd0] sm:$0xff] %v688
        %721 = vst [vmem:[%s291 + $0xd8] sm:$0xff] %v689
        %722 = vst [vmem:[%s291 + $0xe0] sm:$0xff] %v690
        %723 = vst [vmem:[%s291 + $0xe8] sm:$0xff] %v691
        %724 = vst [vmem:[%s291 + $0xf0] sm:$0xff] %v692
        %725 = vst [vmem:[%s291 + $0xf8] sm:$0xff] %v693
      $region44: #{in_conv_forward.5} parent=35 // pred_fallthru
        _
      %s726 = smul.u32 32, %s15
      %p727 = scmp.lt.s32.totalorder %s726, 159
      %s728 = scalar_select %p727, %s726, 159
      %s729 = smul.addr %s728, 8
      %s730 = scalar_lea.vmem %s4, %s729
      // Predicated region
      $region45: #{in_conv_forward.5} parent=35 // pred_check
        %p731 = pneg %p147
      $region46: #{in_conv_forward.5} parent=35 // pred_check_branch
        %733 = sbr.rel (%p731) target = $region48
      $region47: #{in_conv_forward.5} parent=35 // pred_region
        %s734 = smul.u32 32, %s15
      $region48: #{in_conv_forward.5} parent=35 // pred_fallthru
        _
    $region36: #{in_conv_forward.5} parent=5 // pred_fallthru
      _
    %p735 = scmp.le.s32.totalorder 2, %s10
    // Predicated region
    $region49: #{in_conv_forward.5} parent=5 // pred_check
      %p736 = pneg %p735
    $region50: #{in_conv_forward.5} parent=5 // pred_check_branch
      %738 = sbr.rel (%p736) target = $region52
    $region51: #{in_conv_forward.5} parent=5 // pred_region
      %s739 = ssub.s32 %s10, 2
      // Predicated region
      $region53: #{in_conv_forward.5} parent=51 // pred_check
        %p740 = pneg %p153
      $region54: #{in_conv_forward.5} parent=51 // pred_check_branch
        %742 = sbr.rel (%p740) target = $region56
      $region55: #{in_conv_forward.5} parent=51 // pred_region
        %s743 = smul.u32 32, %s16
        %p744 = scmp.lt.s32.totalorder %s743, 159
        %s745 = scalar_select %p744, %s743, 159
        %s746 = smul.addr %s745, 8
        %s747 = scalar_lea.vmem %s4, %s746
      $region56: #{in_conv_forward.5} parent=51 // pred_fallthru
        _
    $region52: #{in_conv_forward.5} parent=5 // pred_fallthru
      _
  $region6: #{in_conv_forward.5} parent=0 // loop_footer
    %s14 = sadd.s32 1, %s10
  $region7: #{in_conv_forward.5} parent=0 // loop_footer_branch
    %9 = sbr.rel target = $region3
  $region8: #{in_conv_forward.5} parent=0 // loop_exit
    _

// kernel: in_conv_forward.4
$region0: #{in_conv_forward.4}
  #allocation0 [shape = 'u32[]', space=smem, size = 0x4, offset = 0x4, fixed_abs, tag = 'smem constant byte address 0x4 - core index']
  #allocation1 [shape = 'u32[72,128]{1,0:T(1,128)}', space=vmem, size = 0x9000, scoped, tag = 'internal scratch']
  #allocation2 [shape = 'f32[294,128]{1,0:T(8,128)}', space=vmem, size = 0x25000, scoped, tag = 'scratch operand']
  #allocation3 [shape = 's32[1]{0}', space=sflag, size = 0x4, scoped, tag = 'scratch operand']
  #allocation4 [shape = 's32[]', space=sflag, size = 0x4, offset = 0, fixed_abs, tag = 'sflag constant byte address 0x0 - dummy sync flag']
  %s0 = inlined_call_operand.vmem [shape: f32[1280,128], index: 0, kind: input, shape index: {}]
  %s1 = inlined_call_operand.vmem [shape: f32[9,128,128], index: 1, kind: input, shape index: {}]
  %s2 = inlined_call_operand.vmem [shape: f32[768,1], index: 2, kind: input, shape index: {}]
  %s3 = inlined_call_operand.vmem [shape: f32[768,128], index: 3, kind: output, shape index: {0}]
  %s4 = inlined_call_operand.vmem [shape: f32[3,8,128], index: 4, kind: output, shape index: {1}]
  %5 = xla_tuple %s3, %s4
  %s6 = sld [smem:[#allocation0]]
  $region71: #{in_conv_forward.4} parent=0
    _
  %s8 = ssub.s32 1, %s6
  %s9 = scalar_select 0, %s8, %s6
  loop: start=0, step=1, limit=5
  $region2: #{in_conv_forward.4} parent=0 // loop_pre_header
    _
  $region3: #{in_conv_forward.4} parent=0 // loop_header
    %s11 = sphi 0, %s15
    %p12 = scmp.ge.s32.totalorder %s11, 5
    %s19 = sphi 0, %s19
    %s21 = sphi 0, %s19
    %s22 = sphi 0, %s21
    %s36 = sphi 0, %s22
    %s42 = sphi 0, %s44
    %s45 = sphi 0, %s42
    %s46 = sphi 0, %s45
    %s62 = sphi 0, %s46
    %s68 = sphi 0, %s70
    %s71 = sphi 0, %s68
    %s72 = sphi 0, %s71
    %s88 = sphi 0, %s72
    %s94 = sphi 0, %s96
    %s97 = sphi 0, %s94
    %s98 = sphi 0, %s97
    %s114 = sphi 0, %s98
  $region4: #{in_conv_forward.4} parent=0 // loop_header_branch
    %14 = sbr.rel (%p12) target = $region8
  $region5: #{in_conv_forward.4} parent=0 // loop_body
    %s16 = ssub.s32 %s11, 1
    %s17 = ssub.s32 %s11, 2
    %s18 = sadd.s32 %s11, 1
    %s20 = sadd.s32 %s19, 1
    %p23 = scmp.eq.s32.totalorder %s11, 2
    %p24 = scmp.ne.s32.totalorder %s19, %s21
    %p25 = scmp.eq.s32.totalorder %s11, 0
    %p26 = por %p24, %p25
    %p27 = scmp.ne.s32.totalorder %s19, %s21
    %p28 = scmp.eq.s32.totalorder %s16, 2
    %p29 = por %p27, %p28
    %p30 = scmp.ne.s32.totalorder %s21, %s22
    %p31 = scmp.eq.s32.totalorder %s16, 0
    %p32 = por %p30, %p31
    %p33 = scmp.ne.s32.totalorder %s21, %s22
    %p34 = scmp.eq.s32.totalorder %s17, 2
    %p35 = por %p33, %p34
    %p37 = scmp.ne.s32.totalorder %s22, %s36
    %p38 = scmp.eq.s32.totalorder %s17, 0
    %p39 = por %p37, %p38
    %s40 = ssub.s32 %s11, %s18
    %p41 = scmp.eq.s32.totalorder %s40, 0
    %s43 = sadd.s32 %s42, 1
    %s44 = scalar_select %p41, %s42, %s43
    %p47 = pneg %p41
    %p48 = scmp.eq.s32.totalorder %s11, 2
    %p49 = por %p47, %p48
    %p50 = scmp.ne.s32.totalorder %s42, %s45
    %p51 = scmp.eq.s32.totalorder %s11, 0
    %p52 = por %p50, %p51
    %p53 = scmp.ne.s32.totalorder %s42, %s45
    %p54 = scmp.eq.s32.totalorder %s16, 2
    %p55 = por %p53, %p54
    %p56 = scmp.ne.s32.totalorder %s45, %s46
    %p57 = scmp.eq.s32.totalorder %s16, 0
    %p58 = por %p56, %p57
    %p59 = scmp.ne.s32.totalorder %s45, %s46
    %p60 = scmp.eq.s32.totalorder %s17, 2
    %p61 = por %p59, %p60
    %p63 = scmp.ne.s32.totalorder %s46, %s62
    %p64 = scmp.eq.s32.totalorder %s17, 0
    %p65 = por %p63, %p64
    %s66 = ssub.s32 %s11, %s18
    %p67 = scmp.eq.s32.totalorder %s66, 0
    %s69 = sadd.s32 %s68, 1
    %s70 = scalar_select %p67, %s68, %s69
    %p73 = pneg %p67
    %p74 = scmp.eq.s32.totalorder %s11, 2
    %p75 = por %p73, %p74
    %p76 = scmp.ne.s32.totalorder %s68, %s71
    %p77 = scmp.eq.s32.totalorder %s11, 0
    %p78 = por %p76, %p77
    %p79 = scmp.ne.s32.totalorder %s68, %s71
    %p80 = scmp.eq.s32.totalorder %s16, 2
    %p81 = por %p79, %p80
    %p82 = scmp.ne.s32.totalorder %s71, %s72
    %p83 = scmp.eq.s32.totalorder %s16, 0
    %p84 = por %p82, %p83
    %p85 = scmp.ne.s32.totalorder %s71, %s72
    %p86 = scmp.eq.s32.totalorder %s17, 2
    %p87 = por %p85, %p86
    %p89 = scmp.ne.s32.totalorder %s72, %s88
    %p90 = scmp.eq.s32.totalorder %s17, 0
    %p91 = por %p89, %p90
    %s92 = ssub.s32 %s11, %s18
    %p93 = scmp.eq.s32.totalorder %s92, 0
    %s95 = sadd.s32 %s94, 1
    %s96 = scalar_select %p93, %s94, %s95
    %p99 = pneg %p93
    %p100 = scmp.eq.s32.totalorder %s11, 2
    %p101 = por %p99, %p100
    %p102 = scmp.ne.s32.totalorder %s94, %s97
    %p103 = scmp.eq.s32.totalorder %s11, 0
    %p104 = por %p102, %p103
    %p105 = scmp.ne.s32.totalorder %s94, %s97
    %p106 = scmp.eq.s32.totalorder %s16, 2
    %p107 = por %p105, %p106
    %p108 = scmp.ne.s32.totalorder %s97, %s98
    %p109 = scmp.eq.s32.totalorder %s16, 0
    %p110 = por %p108, %p109
    %p111 = scmp.ne.s32.totalorder %s97, %s98
    %p112 = scmp.eq.s32.totalorder %s17, 2
    %p113 = por %p111, %p112
    %p115 = scmp.ne.s32.totalorder %s98, %s114
    %p116 = scmp.eq.s32.totalorder %s17, 0
    %p117 = por %p115, %p116
    %p118 = scmp.le.s32.totalorder 1, %s11
    %p119 = scmp.lt.s32.totalorder %s11, 4
    %p120 = pnand %p118, %p119
    %p121 = pneg %p120
    // Predicated region
    $region9: #{in_conv_forward.4} parent=5 // pred_check
      _
    $region10: #{in_conv_forward.4} parent=5 // pred_check_branch
      %123 = sbr.rel (%p120) target = $region12
    $region11: #{in_conv_forward.4} parent=5 // pred_region
      %s124 = ssub.s32 %s11, 1
      // Predicated region
      $region13: #{in_conv_forward.4} parent=11 // pred_check
        %p125 = pneg %p32
      $region14: #{in_conv_forward.4} parent=11 // pred_check_branch
        %127 = sbr.rel (%p125) target = $region16
      $region15: #{in_conv_forward.4} parent=11 // pred_region
        _
      $region16: #{in_conv_forward.4} parent=11 // pred_fallthru
        _
    $region12: #{in_conv_forward.4} parent=5 // pred_fallthru
      _
    %p128 = scmp.lt.s32.totalorder %s11, 3
    // Predicated region
    $region17: #{in_conv_forward.4} parent=5 // pred_check
      %p129 = pneg %p128
    $region18: #{in_conv_forward.4} parent=5 // pred_check_branch
      %131 = sbr.rel (%p129) target = $region20
    $region19: #{in_conv_forward.4} parent=5 // pred_region
      // Predicated region
      $region21: #{in_conv_forward.4} parent=19 // pred_check
        %p132 = pneg %p52
      $region22: #{in_conv_forward.4} parent=19 // pred_check_branch
        %134 = sbr.rel (%p132) target = $region24
      $region23: #{in_conv_forward.4} parent=19 // pred_region
        %s135 = smul.u32 32, %s11
        %p136 = scmp.lt.s32.totalorder %s135, 95
        %s137 = scalar_select %p136, %s135, 95
        %s138 = smul.addr %s137, 8
        %s139 = scalar_lea.vmem %s2, %s138
        %s140 = smul.u32 32, %s11
      $region24: #{in_conv_forward.4} parent=19 // pred_fallthru
        _
    $region20: #{in_conv_forward.4} parent=5 // pred_fallthru
      _
    %p141 = scmp.le.s32.totalorder 1, %s11
    %p142 = scmp.lt.s32.totalorder %s11, 4
    %p143 = pnand %p141, %p142
    %p144 = pneg %p143
    // Predicated region
    $region25: #{in_conv_forward.4} parent=5 // pred_check
      _
    $region26: #{in_conv_forward.4} parent=5 // pred_check_branch
      %146 = sbr.rel (%p143) target = $region28
    $region27: #{in_conv_forward.4} parent=5 // pred_region
      %s147 = ssub.s32 %s11, 1
      %p148 = pneg %p32
      %p149 = pneg %p29
      %s150 = smul.u32 32, %s16
      %p151 = scmp.lt.s32.totalorder %s150, 95
      %s152 = scalar_select %p151, %s150, 95
      %s153 = smul.addr %s152, 8
      %s154 = scalar_lea.vmem %s2, %s153
      %p155 = pneg %p58
      %p156 = pneg %p55
      %p157 = pneg %p84
      %p158 = pneg %p81
      %s159 = smul.u32 32, %s16
      %p160 = scmp.lt.s32.totalorder %s159, 95
      %s161 = scalar_select %p160, %s159, 95
      %s162 = smul.addr %s161, 8
      %s163 = scalar_lea.vmem %s3, %s162
      %p164 = pneg %p110
      %p165 = pneg %p107
      %p166 = scmp.lt.s32.totalorder %s16, 2
      %s167 = scalar_select %p166, %s16, 2
      %s168 = smul.addr %s167, 8
      %s169 = scalar_lea.vmem %s4, %s168
      %s170 = smul.u32 32, %s16
      %p171 = scmp.lt.s32.totalorder %s170, 95
      %s172 = scalar_select %p171, %s170, 95
      %s173 = smul.addr %s172, 8
      %s174 = scalar_lea.vmem %s2, %s173
      %s175 = smul.u32 32, %s16
      %s176 = smul.u32 32, %s16
      %p177 = scmp.lt.s32.totalorder %s176, 95
      %s178 = scalar_select %p177, %s176, 95
      %s179 = smul.addr %s178, 8
      %s180 = scalar_lea.vmem %s3, %s179
      %s181 = smul.u32 32, %s16
      %p182 = scmp.lt.s32.totalorder %s16, 2
      %s183 = scalar_select %p182, %s16, 2
      %s184 = smul.addr %s183, 8
      %s185 = scalar_lea.vmem %s4, %s184
      %s186 = smul.u32 %s16, 256
      %s187 = sadd.s32 %s186, 237
      %s188 = scalar_lea.vmem %s0, %s187
      // Predicated region
      $region29: #{in_conv_forward.4} parent=27 // pred_check
        _
      $region30: #{in_conv_forward.4} parent=27 // pred_check_branch
        %190 = sbr.rel (0) target = $region32
      $region31: #{in_conv_forward.4} parent=27 // pred_region
        %s191 = scalar_lea.vmem %s188, 288
        %s192 = scalar_lea.vmem [#allocation2], 288
        loop: start=0, step=1, limit=1
        $region33: #{in_conv_forward.4} parent=31 // loop_pre_header
          _
        $region34: #{in_conv_forward.4} parent=31 // loop_header
          %s194 = sphi 0, %s198
          %p195 = scmp.ge.s32.totalorder %s194, 1
          %s199 = sphi %s188, %s188
          %s200 = sphi [#allocation2], [#allocation2]
        $region35: #{in_conv_forward.4} parent=31 // loop_header_branch
          %197 = sbr.rel (%p195) target = $region39
        $region36: #{in_conv_forward.4} parent=31 // loop_body
          %v201 = vld [vmem:[%s199] sm:$0xff]
          %202 = vst [vmem:[%s200] sm:$0xff] %v201
          %v203 = vld [vmem:[%s199 + $0x8] sm:$0xff]
          %204 = vst [vmem:[%s200 + $0x8] sm:$0xff] %v203
          %v205 = vld [vmem:[%s199 + $0x10] sm:$0xff]
          %206 = vst [vmem:[%s200 + $0x10] sm:$0xff] %v205
          %v207 = vld [vmem:[%s199 + $0x18] sm:$0xff]
          %208 = vst [vmem:[%s200 + $0x18] sm:$0xff] %v207
          %v209 = vld [vmem:[%s199 + $0x20] sm:$0xff]
          %210 = vst [vmem:[%s200 + $0x20] sm:$0xff] %v209
          %v211 = vld [vmem:[%s199 + $0x28] sm:$0xff]
          %212 = vst [vmem:[%s200 + $0x28] sm:$0xff] %v211
          %v213 = vld [vmem:[%s199 + $0x30] sm:$0xff]
          %214 = vst [vmem:[%s200 + $0x30] sm:$0xff] %v213
          %v215 = vld [vmem:[%s199 + $0x38] sm:$0xff]
          %216 = vst [vmem:[%s200 + $0x38] sm:$0xff] %v215
          %v217 = vld [vmem:[%s199 + $0x40] sm:$0xff]
          %218 = vst [vmem:[%s200 + $0x40] sm:$0xff] %v217
          %v219 = vld [vmem:[%s199 + $0x48] sm:$0xff]
          %220 = vst [vmem:[%s200 + $0x48] sm:$0xff] %v219
          %v221 = vld [vmem:[%s199 + $0x50] sm:$0xff]
          %222 = vst [vmem:[%s200 + $0x50] sm:$0xff] %v221
          %v223 = vld [vmem:[%s199 + $0x58] sm:$0xff]
          %224 = vst [vmem:[%s200 + $0x58] sm:$0xff] %v223
          %v225 = vld [vmem:[%s199 + $0x60] sm:$0xff]
          %226 = vst [vmem:[%s200 + $0x60] sm:$0xff] %v225
          %v227 = vld [vmem:[%s199 + $0x68] sm:$0xff]
          %228 = vst [vmem:[%s200 + $0x68] sm:$0xff] %v227
          %v229 = vld [vmem:[%s199 + $0x70] sm:$0xff]
          %230 = vst [vmem:[%s200 + $0x70] sm:$0xff] %v229
          %v231 = vld [vmem:[%s199 + $0x78] sm:$0xff]
          %232 = vst [vmem:[%s200 + $0x78] sm:$0xff] %v231
          %v233 = vld [vmem:[%s199 + $0x80] sm:$0xff]
          %234 = vst [vmem:[%s200 + $0x80] sm:$0xff] %v233
          %v235 = vld [vmem:[%s199 + $0x88] sm:$0xff]
          %236 = vst [vmem:[%s200 + $0x88] sm:$0xff] %v235
          %v237 = vld [vmem:[%s199 + $0x90] sm:$0xff]
          %238 = vst [vmem:[%s200 + $0x90] sm:$0xff] %v237
          %v239 = vld [vmem:[%s199 + $0x98] sm:$0xff]
          %240 = vst [vmem:[%s200 + $0x98] sm:$0xff] %v239
          %v241 = vld [vmem:[%s199 + $0xa0] sm:$0xff]
          %242 = vst [vmem:[%s200 + $0xa0] sm:$0xff] %v241
          %v243 = vld [vmem:[%s199 + $0xa8] sm:$0xff]
          %244 = vst [vmem:[%s200 + $0xa8] sm:$0xff] %v243
          %v245 = vld [vmem:[%s199 + $0xb0] sm:$0xff]
          %246 = vst [vmem:[%s200 + $0xb0] sm:$0xff] %v245
          %v247 = vld [vmem:[%s199 + $0xb8] sm:$0xff]
          %248 = vst [vmem:[%s200 + $0xb8] sm:$0xff] %v247
          %v249 = vld [vmem:[%s199 + $0xc0] sm:$0xff]
          %250 = vst [vmem:[%s200 + $0xc0] sm:$0xff] %v249
          %v251 = vld [vmem:[%s199 + $0xc8] sm:$0xff]
          %252 = vst [vmem:[%s200 + $0xc8] sm:$0xff] %v251
          %v253 = vld [vmem:[%s199 + $0xd0] sm:$0xff]
          %254 = vst [vmem:[%s200 + $0xd0] sm:$0xff] %v253
          %v255 = vld [vmem:[%s199 + $0xd8] sm:$0xff]
          %256 = vst [vmem:[%s200 + $0xd8] sm:$0xff] %v255
          %v257 = vld [vmem:[%s199 + $0xe0] sm:$0xff]
          %258 = vst [vmem:[%s200 + $0xe0] sm:$0xff] %v257
          %v259 = vld [vmem:[%s199 + $0xe8] sm:$0xff]
          %260 = vst [vmem:[%s200 + $0xe8] sm:$0xff] %v259
          %v261 = vld [vmem:[%s199 + $0xf0] sm:$0xff]
          %262 = vst [vmem:[%s200 + $0xf0] sm:$0xff] %v261
          %v263 = vld [vmem:[%s199 + $0xf8] sm:$0xff]
          %264 = vst [vmem:[%s200 + $0xf8] sm:$0xff] %v263
          %v265 = vld [vmem:[%s199 + $0x100] sm:$0xff]
          %266 = vst [vmem:[%s200 + $0x100] sm:$0xff] %v265
          %v267 = vld [vmem:[%s199 + $0x108] sm:$0xff]
          %268 = vst [vmem:[%s200 + $0x108] sm:$0xff] %v267
          %v269 = vld [vmem:[%s199 + $0x110] sm:$0xff]
          %270 = vst [vmem:[%s200 + $0x110] sm:$0xff] %v269
          %v271 = vld [vmem:[%s199 + $0x118] sm:$0xff]
          %272 = vst [vmem:[%s200 + $0x118] sm:$0xff] %v271
        $region37: #{in_conv_forward.4} parent=31 // loop_footer
          %s198 = sadd.s32 1, %s194
        $region38: #{in_conv_forward.4} parent=31 // loop_footer_branch
          %193 = sbr.rel target = $region34
        $region39: #{in_conv_forward.4} parent=31 // loop_exit
          _
        %s274 = ssub.s32 64, 1
        loop: start=0, step=1, limit=1
        $region40: #{in_conv_forward.4} parent=31 // loop_pre_header
          _
        $region41: #{in_conv_forward.4} parent=31 // loop_header
          %s276 = sphi 0, %s280
          %p277 = scmp.ge.s32.totalorder %s276, 1
          %s281 = sphi %s191, %s191
          %s282 = sphi %s192, %s192
        $region42: #{in_conv_forward.4} parent=31 // loop_header_branch
          %279 = sbr.rel (%p277) target = $region46
        $region43: #{in_conv_forward.4} parent=31 // loop_body
          %v283 = vld [vmem:[%s281] sm:%s274]
          %284 = vst [vmem:[%s282] sm:%s274] %v283
        $region44: #{in_conv_forward.4} parent=31 // loop_footer
          %s280 = sadd.s32 1, %s276
        $region45: #{in_conv_forward.4} parent=31 // loop_footer_branch
          %275 = sbr.rel target = $region41
        $region46: #{in_conv_forward.4} parent=31 // loop_exit
          _
      $region32: #{in_conv_forward.4} parent=27 // pred_fallthru
        _
      // Predicated region
      $region47: #{in_conv_forward.4} parent=27 // pred_check
        _
      $region48: #{in_conv_forward.4} parent=27 // pred_check_branch
        %287 = sbr.rel (0) target = $region50
      $region49: #{in_conv_forward.4} parent=27 // pred_region
        %288 = vsyncadd [#allocation3], 4704
      $region50: #{in_conv_forward.4} parent=27 // pred_fallthru
        _
      %s289 = smul.u32 294, 1
      %s290 = sshll.u32 %s289, 4
      %291 = dma.done [#allocation3], %s290
      %292 = vst [vmem:[%s180] sm:$0xff] 0.0
      %293 = vst [vmem:[%s180 + $0x8] sm:$0xff] 0.0
      %294 = vst [vmem:[%s180 + $0x10] sm:$0xff] 0.0
      %295 = vst [vmem:[%s180 + $0x18] sm:$0xff] 0.0
      %296 = vst [vmem:[%s180 + $0x20] sm:$0xff] 0.0
      %297 = vst [vmem:[%s180 + $0x28] sm:$0xff] 0.0
      %298 = vst [vmem:[%s180 + $0x30] sm:$0xff] 0.0
      %299 = vst [vmem:[%s180 + $0x38] sm:$0xff] 0.0
      %300 = vst [vmem:[%s180 + $0x40] sm:$0xff] 0.0
      %301 = vst [vmem:[%s180 + $0x48] sm:$0xff] 0.0
      %302 = vst [vmem:[%s180 + $0x50] sm:$0xff] 0.0
      %303 = vst [vmem:[%s180 + $0x58] sm:$0xff] 0.0
      %304 = vst [vmem:[%s180 + $0x60] sm:$0xff] 0.0
      %305 = vst [vmem:[%s180 + $0x68] sm:$0xff] 0.0
      %306 = vst [vmem:[%s180 + $0x70] sm:$0xff] 0.0
      %307 = vst [vmem:[%s180 + $0x78] sm:$0xff] 0.0
      %308 = vst [vmem:[%s180 + $0x80] sm:$0xff] 0.0
      %309 = vst [vmem:[%s180 + $0x88] sm:$0xff] 0.0
      %310 = vst [vmem:[%s180 + $0x90] sm:$0xff] 0.0
      %311 = vst [vmem:[%s180 + $0x98] sm:$0xff] 0.0
      %312 = vst [vmem:[%s180 + $0xa0] sm:$0xff] 0.0
      %313 = vst [vmem:[%s180 + $0xa8] sm:$0xff] 0.0
      %314 = vst [vmem:[%s180 + $0xb0] sm:$0xff] 0.0
      %315 = vst [vmem:[%s180 + $0xb8] sm:$0xff] 0.0
      %316 = vst [vmem:[%s180 + $0xc0] sm:$0xff] 0.0
      %317 = vst [vmem:[%s180 + $0xc8] sm:$0xff] 0.0
      %318 = vst [vmem:[%s180 + $0xd0] sm:$0xff] 0.0
      %319 = vst [vmem:[%s180 + $0xd8] sm:$0xff] 0.0
      %320 = vst [vmem:[%s180 + $0xe0] sm:$0xff] 0.0
      %321 = vst [vmem:[%s180 + $0xe8] sm:$0xff] 0.0
      %322 = vst [vmem:[%s180 + $0xf0] sm:$0xff] 0.0
      %323 = vst [vmem:[%s180 + $0xf8] sm:$0xff] 0.0
      %v324 = vld [vmem:[%s180] sm:$0xff]
      %v325 = vld [vmem:[%s180 + $0x8] sm:$0xff]
      %v326 = vld [vmem:[%s180 + $0x10] sm:$0xff]
      %v327 = vld [vmem:[%s180 + $0x18] sm:$0xff]
      %v328 = vld [vmem:[%s180 + $0x20] sm:$0xff]
      %v329 = vld [vmem:[%s180 + $0x28] sm:$0xff]
      %v330 = vld [vmem:[%s180 + $0x30] sm:$0xff]
      %v331 = vld [vmem:[%s180 + $0x38] sm:$0xff]
      %v332 = vld [vmem:[%s180 + $0x40] sm:$0xff]
      %v333 = vld [vmem:[%s180 + $0x48] sm:$0xff]
      %v334 = vld [vmem:[%s180 + $0x50] sm:$0xff]
      %v335 = vld [vmem:[%s180 + $0x58] sm:$0xff]
      %v336 = vld [vmem:[%s180 + $0x60] sm:$0xff]
      %v337 = vld [vmem:[%s180 + $0x68] sm:$0xff]
      %v338 = vld [vmem:[%s180 + $0x70] sm:$0xff]
      %v339 = vld [vmem:[%s180 + $0x78] sm:$0xff]
      %v340 = vld [vmem:[%s180 + $0x80] sm:$0xff]
      %v341 = vld [vmem:[%s180 + $0x88] sm:$0xff]
      %v342 = vld [vmem:[%s180 + $0x90] sm:$0xff]
      %v343 = vld [vmem:[%s180 + $0x98] sm:$0xff]
      %v344 = vld [vmem:[%s180 + $0xa0] sm:$0xff]
      %v345 = vld [vmem:[%s180 + $0xa8] sm:$0xff]
      %v346 = vld [vmem:[%s180 + $0xb0] sm:$0xff]
      %v347 = vld [vmem:[%s180 + $0xb8] sm:$0xff]
      %v348 = vld [vmem:[%s180 + $0xc0] sm:$0xff]
      %v349 = vld [vmem:[%s180 + $0xc8] sm:$0xff]
      %v350 = vld [vmem:[%s180 + $0xd0] sm:$0xff]
      %v351 = vld [vmem:[%s180 + $0xd8] sm:$0xff]
      %v352 = vld [vmem:[%s180 + $0xe0] sm:$0xff]
      %v353 = vld [vmem:[%s180 + $0xe8] sm:$0xff]
      %v354 = vld [vmem:[%s180 + $0xf0] sm:$0xff]
      %v355 = vld [vmem:[%s180 + $0xf8] sm:$0xff]
      %v356 = vld [vmem:[#allocation2] sm:$0xff]
      %v357 = vld [vmem:[#allocation2 + $0x8] sm:$0xff]
      %v358 = vld [vmem:[#allocation2 + $0x10] sm:$0xff]
      %v359 = vld [vmem:[#allocation2 + $0x18] sm:$0xff]
      %v360 = vld [vmem:[#allocation2 + $0x20] sm:$0xff]
      %v361 = vld [vmem:[#allocation2 + $0x28] sm:$0xff]
      %v362 = vld [vmem:[#allocation2 + $0x30] sm:$0xff]
      %v363 = vld [vmem:[#allocation2 + $0x38] sm:$0xff]
      %v364 = vld [vmem:[#allocation2 + $0x40] sm:$0xff]
      %v365 = vld [vmem:[#allocation2 + $0x48] sm:$0xff]
      %v366 = vld [vmem:[#allocation2 + $0x50] sm:$0xff]
      %v367 = vld [vmem:[#allocation2 + $0x58] sm:$0xff]
      %v368 = vld [vmem:[#allocation2 + $0x60] sm:$0xff]
      %v369 = vld [vmem:[#allocation2 + $0x68] sm:$0xff]
      %v370 = vld [vmem:[#allocation2 + $0x70] sm:$0xff]
      %v371 = vld [vmem:[#allocation2 + $0x78] sm:$0xff]
      %v372 = vld [vmem:[#allocation2 + $0x80] sm:$0xff]
      %v373 = vld [vmem:[#allocation2 + $0x88] sm:$0xff]
      %v374 = vld [vmem:[#allocation2 + $0x90] sm:$0xff]
      %v375 = vld [vmem:[#allocation2 + $0x98] sm:$0xff]
      %v376 = vld [vmem:[#allocation2 + $0xa0] sm:$0xff]
      %v377 = vld [vmem:[#allocation2 + $0xa8] sm:$0xff]
      %v378 = vld [vmem:[#allocation2 + $0xb0] sm:$0xff]
      %v379 = vld [vmem:[#allocation2 + $0xb8] sm:$0xff]
      %v380 = vld [vmem:[#allocation2 + $0xc0] sm:$0xff]
      %v381 = vld [vmem:[#allocation2 + $0xc8] sm:$0xff]
      %v382 = vld [vmem:[#allocation2 + $0xd0] sm:$0xff]
      %v383 = vld [vmem:[#allocation2 + $0xd8] sm:$0xff]
      %v384 = vld [vmem:[#allocation2 + $0xe0] sm:$0xff]
      %v385 = vld [vmem:[#allocation2 + $0xe8] sm:$0xff]
      %v386 = vld [vmem:[#allocation2 + $0xf0] sm:$0xff]
      %v387 = vld [vmem:[#allocation2 + $0xf8] sm:$0xff]
      %v388 = vld [vmem:[%s1] sm:$0xff]
      %v389 = vld [vmem:[%s1 + $0x8] sm:$0xff]
      %v390 = vld [vmem:[%s1 + $0x10] sm:$0xff]
      %v391 = vld [vmem:[%s1 + $0x18] sm:$0xff]
      %v392 = vld [vmem:[%s1 + $0x20] sm:$0xff]
      %v393 = vld [vmem:[%s1 + $0x28] sm:$0xff]
      %v394 = vld [vmem:[%s1 + $0x30] sm:$0xff]
      %v395 = vld [vmem:[%s1 + $0x38] sm:$0xff]
      %v396 = vld [vmem:[%s1 + $0x40] sm:$0xff]
      %v397 = vld [vmem:[%s1 + $0x48] sm:$0xff]
      %v398 = vld [vmem:[%s1 + $0x50] sm:$0xff]
      %v399 = vld [vmem:[%s1 + $0x58] sm:$0xff]
      %v400 = vld [vmem:[%s1 + $0x60] sm:$0xff]
      %v401 = vld [vmem:[%s1 + $0x68] sm:$0xff]
      %v402 = vld [vmem:[%s1 + $0x70] sm:$0xff]
      %v403 = vld [vmem:[%s1 + $0x78] sm:$0xff]
      %404 = vmatpush.msra.mxu0 %v403
      %405 = vmatpush.msra.mxu0 %v402
      %406 = vmatpush.msra.mxu0 %v401
      %407 = vmatpush.msra.mxu0 %v400
      %408 = vmatpush.msra.mxu0 %v399
      %409 = vmatpush.msra.mxu0 %v398
      %410 = vmatpush.msra.mxu0 %v397
      %411 = vmatpush.msra.mxu0 %v396
      %412 = vmatpush.msra.mxu0 %v395
      %413 = vmatpush.msra.mxu0 %v394
      %414 = vmatpush.msra.mxu0 %v393
      %415 = vmatpush.msra.mxu0 %v392
      %416 = vmatpush.msra.mxu0 %v391
      %417 = vmatpush.msra.mxu0 %v390
      %418 = vmatpush.msra.mxu0 %v389
      %419 = vmatpush.msra.mxu0 %v388
      %420 = vmatmul.f32.gmra.mxu0 %v356
      %v421 = vpop.f32.mrf.mxu0
      %v422 = vadd.f32 0.0, %v421
      %423 = vmatmul.f32.gmra.mxu0 %v357
      %v424 = vpop.f32.mrf.mxu0
      %v425 = vadd.f32 0.0, %v424
      %426 = vmatmul.f32.gmra.mxu0 %v358
      %v427 = vpop.f32.mrf.mxu0
      %v428 = vadd.f32 0.0, %v427
      %429 = vmatmul.f32.gmra.mxu0 %v359
      %v430 = vpop.f32.mrf.mxu0
      %v431 = vadd.f32 0.0, %v430
      %432 = vmatmul.f32.gmra.mxu0 %v360
      %v433 = vpop.f32.mrf.mxu0
      %v434 = vadd.f32 0.0, %v433
      %435 = vmatmul.f32.gmra.mxu0 %v361
      %v436 = vpop.f32.mrf.mxu0
      %v437 = vadd.f32 0.0, %v436
      %438 = vmatmul.f32.gmra.mxu0 %v362
      %v439 = vpop.f32.mrf.mxu0
      %v440 = vadd.f32 0.0, %v439
      %441 = vmatmul.f32.gmra.mxu0 %v363
      %v442 = vpop.f32.mrf.mxu0
      %v443 = vadd.f32 0.0, %v442
      %444 = vmatmul.f32.gmra.mxu0 %v364
      %v445 = vpop.f32.mrf.mxu0
      %v446 = vadd.f32 0.0, %v445
      %447 = vmatmul.f32.gmra.mxu0 %v365
      %v448 = vpop.f32.mrf.mxu0
      %v449 = vadd.f32 0.0, %v448
      %450 = vmatmul.f32.gmra.mxu0 %v366
      %v451 = vpop.f32.mrf.mxu0
      %v452 = vadd.f32 0.0, %v451
      %453 = vmatmul.f32.gmra.mxu0 %v367
      %v454 = vpop.f32.mrf.mxu0
      %v455 = vadd.f32 0.0, %v454
      %456 = vmatmul.f32.gmra.mxu0 %v368
      %v457 = vpop.f32.mrf.mxu0
      %v458 = vadd.f32 0.0, %v457
      %459 = vmatmul.f32.gmra.mxu0 %v369
      %v460 = vpop.f32.mrf.mxu0
      %v461 = vadd.f32 0.0, %v460
      %462 = vmatmul.f32.gmra.mxu0 %v370
      %v463 = vpop.f32.mrf.mxu0
      %v464 = vadd.f32 0.0, %v463
      %465 = vmatmul.f32.gmra.mxu0 %v371
      %v466 = vpop.f32.mrf.mxu0
      %v467 = vadd.f32 0.0, %v466
      %468 = vmatmul.f32.gmra.mxu0 %v372
      %v469 = vpop.f32.mrf.mxu0
      %v470 = vadd.f32 0.0, %v469
      %471 = vmatmul.f32.gmra.mxu0 %v373
      %v472 = vpop.f32.mrf.mxu0
      %v473 = vadd.f32 0.0, %v472
      %474 = vmatmul.f32.gmra.mxu0 %v374
      %v475 = vpop.f32.mrf.mxu0
      %v476 = vadd.f32 0.0, %v475
      %477 = vmatmul.f32.gmra.mxu0 %v375
      %v478 = vpop.f32.mrf.mxu0
      %v479 = vadd.f32 0.0, %v478
      %480 = vmatmul.f32.gmra.mxu0 %v376
      %v481 = vpop.f32.mrf.mxu0
      %v482 = vadd.f32 0.0, %v481
      %483 = vmatmul.f32.gmra.mxu0 %v377
      %v484 = vpop.f32.mrf.mxu0
      %v485 = vadd.f32 0.0, %v484
      %486 = vmatmul.f32.gmra.mxu0 %v378
      %v487 = vpop.f32.mrf.mxu0
      %v488 = vadd.f32 0.0, %v487
      %489 = vmatmul.f32.gmra.mxu0 %v379
      %v490 = vpop.f32.mrf.mxu0
      %v491 = vadd.f32 0.0, %v490
      %492 = vmatmul.f32.gmra.mxu0 %v380
      %v493 = vpop.f32.mrf.mxu0
      %v494 = vadd.f32 0.0, %v493
      %495 = vmatmul.f32.gmra.mxu0 %v381
      %v496 = vpop.f32.mrf.mxu0
      %v497 = vadd.f32 0.0, %v496
      %498 = vmatmul.f32.gmra.mxu0 %v382
      %v499 = vpop.f32.mrf.mxu0
      %v500 = vadd.f32 0.0, %v499
      %501 = vmatmul.f32.gmra.mxu0 %v383
      %v502 = vpop.f32.mrf.mxu0
      %v503 = vadd.f32 0.0, %v502
      %504 = vmatmul.f32.gmra.mxu0 %v384
      %v505 = vpop.f32.mrf.mxu0
      %v506 = vadd.f32 0.0, %v505
      %507 = vmatmul.f32.gmra.mxu0 %v385
      %v508 = vpop.f32.mrf.mxu0
      %v509 = vadd.f32 0.0, %v508
      %510 = vmatmul.f32.gmra.mxu0 %v386
      %v511 = vpop.f32.mrf.mxu0
      %v512 = vadd.f32 0.0, %v511
      %513 = vmatmul.f32.gmra.mxu0 %v387
      %v514 = vpop.f32.mrf.mxu0
      %v515 = vadd.f32 0.0, %v514
      %516 = vdwg.mxu0
      %v517 = vadd.f32 %v324, %v422
      %v518 = vadd.f32 %v325, %v425
      %v519 = vadd.f32 %v326, %v428
      %v520 = vadd.f32 %v327, %v431
      %v521 = vadd.f32 %v328, %v434
      %v522 = vadd.f32 %v329, %v437
      %v523 = vadd.f32 %v330, %v440
      %v524 = vadd.f32 %v331, %v443
      %v525 = vadd.f32 %v332, %v446
      %v526 = vadd.f32 %v333, %v449
      %v527 = vadd.f32 %v334, %v452
      %v528 = vadd.f32 %v335, %v455
      %v529 = vadd.f32 %v336, %v458
      %v530 = vadd.f32 %v337, %v461
      %v531 = vadd.f32 %v338, %v464
      %v532 = vadd.f32 %v339, %v467
      %v533 = vadd.f32 %v340, %v470
      %v534 = vadd.f32 %v341, %v473
      %v535 = vadd.f32 %v342, %v476
      %v536 = vadd.f32 %v343, %v479
      %v537 = vadd.f32 %v344, %v482
      %v538 = vadd.f32 %v345, %v485
      %v539 = vadd.f32 %v346, %v488
      %v540 = vadd.f32 %v347, %v491
      %v541 = vadd.f32 %v348, %v494
      %v542 = vadd.f32 %v349, %v497
      %v543 = vadd.f32 %v350, %v500
      %v544 = vadd.f32 %v351, %v503
      %v545 = vadd.f32 %v352, %v506
      %v546 = vadd.f32 %v353, %v509
      %v547 = vadd.f32 %v354, %v512
      %v548 = vadd.f32 %v355, %v515
      %549 = vst [vmem:[%s180] sm:$0xff] %v517
      %550 = vst [vmem:[%s180 + $0x8] sm:$0xff] %v518
      %551 = vst [vmem:[%s180 + $0x10] sm:$0xff] %v519
      %552 = vst [vmem:[%s180 + $0x18] sm:$0xff] %v520
      %553 = vst [vmem:[%s180 + $0x20] sm:$0xff] %v521
      %554 = vst [vmem:[%s180 + $0x28] sm:$0xff] %v522
      %555 = vst [vmem:[%s180 + $0x30] sm:$0xff] %v523
      %556 = vst [vmem:[%s180 + $0x38] sm:$0xff] %v524
      %557 = vst [vmem:[%s180 + $0x40] sm:$0xff] %v525
      %558 = vst [vmem:[%s180 + $0x48] sm:$0xff] %v526
      %559 = vst [vmem:[%s180 + $0x50] sm:$0xff] %v527
      %560 = vst [vmem:[%s180 + $0x58] sm:$0xff] %v528
      %561 = vst [vmem:[%s180 + $0x60] sm:$0xff] %v529
      %562 = vst [vmem:[%s180 + $0x68] sm:$0xff] %v530
      %563 = vst [vmem:[%s180 + $0x70] sm:$0xff] %v531
      %564 = vst [vmem:[%s180 + $0x78] sm:$0xff] %v532
      %565 = vst [vmem:[%s180 + $0x80] sm:$0xff] %v533
      %566 = vst [vmem:[%s180 + $0x88] sm:$0xff] %v534
      %567 = vst [vmem:[%s180 + $0x90] sm:$0xff] %v535
      %568 = vst [vmem:[%s180 + $0x98] sm:$0xff] %v536
      %569 = vst [vmem:[%s180 + $0xa0] sm:$0xff] %v537
      %570 = vst [vmem:[%s180 + $0xa8] sm:$0xff] %v538
      %571 = vst [vmem:[%s180 + $0xb0] sm:$0xff] %v539
      %572 = vst [vmem:[%s180 + $0xb8] sm:$0xff] %v540
      %573 = vst [vmem:[%s180 + $0xc0] sm:$0xff] %v541
      %574 = vst [vmem:[%s180 + $0xc8] sm:$0xff] %v542
      %575 = vst [vmem:[%s180 + $0xd0] sm:$0xff] %v543
      %576 = vst [vmem:[%s180 + $0xd8] sm:$0xff] %v544
      %577 = vst [vmem:[%s180 + $0xe0] sm:$0xff] %v545
      %578 = vst [vmem:[%s180 + $0xe8] sm:$0xff] %v546
      %579 = vst [vmem:[%s180 + $0xf0] sm:$0xff] %v547
      %580 = vst [vmem:[%s180 + $0xf8] sm:$0xff] %v548
      %v581 = vld [vmem:[%s180] sm:$0xff]
      %v582 = vld [vmem:[%s180 + $0x8] sm:$0xff]
      %v583 = vld [vmem:[%s180 + $0x10] sm:$0xff]
      %v584 = vld [vmem:[%s180 + $0x18] sm:$0xff]
      %v585 = vld [vmem:[%s180 + $0x20] sm:$0xff]
      %v586 = vld [vmem:[%s180 + $0x28] sm:$0xff]
      %v587 = vld [vmem:[%s180 + $0x30] sm:$0xff]
      %v588 = vld [vmem:[%s180 + $0x38] sm:$0xff]
      %v589 = vld [vmem:[%s180 + $0x40] sm:$0xff]
      %v590 = vld [vmem:[%s180 + $0x48] sm:$0xff]
      %v591 = vld [vmem:[%s180 + $0x50] sm:$0xff]
      %v592 = vld [vmem:[%s180 + $0x58] sm:$0xff]
      %v593 = vld [vmem:[%s180 + $0x60] sm:$0xff]
      %v594 = vld [vmem:[%s180 + $0x68] sm:$0xff]
      %v595 = vld [vmem:[%s180 + $0x70] sm:$0xff]
      %v596 = vld [vmem:[%s180 + $0x78] sm:$0xff]
      %v597 = vld [vmem:[%s180 + $0x80] sm:$0xff]
      %v598 = vld [vmem:[%s180 + $0x88] sm:$0xff]
      %v599 = vld [vmem:[%s180 + $0x90] sm:$0xff]
      %v600 = vld [vmem:[%s180 + $0x98] sm:$0xff]
      %v601 = vld [vmem:[%s180 + $0xa0] sm:$0xff]
      %v602 = vld [vmem:[%s180 + $0xa8] sm:$0xff]
      %v603 = vld [vmem:[%s180 + $0xb0] sm:$0xff]
      %v604 = vld [vmem:[%s180 + $0xb8] sm:$0xff]
      %v605 = vld [vmem:[%s180 + $0xc0] sm:$0xff]
      %v606 = vld [vmem:[%s180 + $0xc8] sm:$0xff]
      %v607 = vld [vmem:[%s180 + $0xd0] sm:$0xff]
      %v608 = vld [vmem:[%s180 + $0xd8] sm:$0xff]
      %v609 = vld [vmem:[%s180 + $0xe0] sm:$0xff]
      %v610 = vld [vmem:[%s180 + $0xe8] sm:$0xff]
      %v611 = vld [vmem:[%s180 + $0xf0] sm:$0xff]
      %v612 = vld [vmem:[%s180 + $0xf8] sm:$0xff]
      %v613 = vld [vmem:[#allocation2 + $0x1] sm:$0xff]
      %v614 = vld [vmem:[#allocation2 + $0x9] sm:$0xff]
      %v615 = vld [vmem:[#allocation2 + $0x11] sm:$0xff]
      %v616 = vld [vmem:[#allocation2 + $0x19] sm:$0xff]
      %v617 = vld [vmem:[#allocation2 + $0x21] sm:$0xff]
      %v618 = vld [vmem:[#allocation2 + $0x29] sm:$0xff]
      %v619 = vld [vmem:[#allocation2 + $0x31] sm:$0xff]
      %v620 = vld [vmem:[#allocation2 + $0x39] sm:$0xff]
      %v621 = vld [vmem:[#allocation2 + $0x41] sm:$0xff]
      %v622 = vld [vmem:[#allocation2 + $0x49] sm:$0xff]
      %v623 = vld [vmem:[#allocation2 + $0x51] sm:$0xff]
      %v624 = vld [vmem:[#allocation2 + $0x59] sm:$0xff]
      %v625 = vld [vmem:[#allocation2 + $0x61] sm:$0xff]
      %v626 = vld [vmem:[#allocation2 + $0x69] sm:$0xff]
      %v627 = vld [vmem:[#allocation2 + $0x71] sm:$0xff]
      %v628 = vld [vmem:[#allocation2 + $0x79] sm:$0xff]
      %v629 = vld [vmem:[#allocation2 + $0x81] sm:$0xff]
      %v630 = vld [vmem:[#allocation2 + $0x89] sm:$0xff]
      %v631 = vld [vmem:[#allocation2 + $0x91] sm:$0xff]
      %v632 = vld [vmem:[#allocation2 + $0x99] sm:$0xff]
      %v633 = vld [vmem:[#allocation2 + $0xa1] sm:$0xff]
      %v634 = vld [vmem:[#allocation2 + $0xa9] sm:$0xff]
      %v635 = vld [vmem:[#allocation2 + $0xb1] sm:$0xff]
      %v636 = vld [vmem:[#allocation2 + $0xb9] sm:$0xff]
      %v637 = vld [vmem:[#allocation2 + $0xc1] sm:$0xff]
      %v638 = vld [vmem:[#allocation2 + $0xc9] sm:$0xff]
      %v639 = vld [vmem:[#allocation2 + $0xd1] sm:$0xff]
      %v640 = vld [vmem:[#allocation2 + $0xd9] sm:$0xff]
      %v641 = vld [vmem:[#allocation2 + $0xe1] sm:$0xff]
      %v642 = vld [vmem:[#allocation2 + $0xe9] sm:$0xff]
      %v643 = vld [vmem:[#allocation2 + $0xf1] sm:$0xff]
      %v644 = vld [vmem:[#allocation2 + $0xf9] sm:$0xff]
      %s645 = scalar_lea.vmem %s1, 128
      %v646 = vld [vmem:[%s645] sm:$0xff]
      %v647 = vld [vmem:[%s645 + $0x8] sm:$0xff]
      %v648 = vld [vmem:[%s645 + $0x10] sm:$0xff]
      %v649 = vld [vmem:[%s645 + $0x18] sm:$0xff]
      %v650 = vld [vmem:[%s645 + $0x20] sm:$0xff]
      %v651 = vld [vmem:[%s645 + $0x28] sm:$0xff]
      %v652 = vld [vmem:[%s645 + $0x30] sm:$0xff]
      %v653 = vld [vmem:[%s645 + $0x38] sm:$0xff]
      %v654 = vld [vmem:[%s645 + $0x40] sm:$0xff]
      %v655 = vld [vmem:[%s645 + $0x48] sm:$0xff]
      %v656 = vld [vmem:[%s645 + $0x50] sm:$0xff]
      %v657 = vld [vmem:[%s645 + $0x58] sm:$0xff]
      %v658 = vld [vmem:[%s645 + $0x60] sm:$0xff]
      %v659 = vld [vmem:[%s645 + $0x68] sm:$0xff]
      %v660 = vld [vmem:[%s645 + $0x70] sm:$0xff]
      %v661 = vld [vmem:[%s645 + $0x78] sm:$0xff]
      %662 = vmatpush.msra.mxu0 %v661
      %663 = vmatpush.msra.mxu0 %v660
      %664 = vmatpush.msra.mxu0 %v659
      %665 = vmatpush.msra.mxu0 %v658
      %666 = vmatpush.msra.mxu0 %v657
      %667 = vmatpush.msra.mxu0 %v656
      %668 = vmatpush.msra.mxu0 %v655
      %669 = vmatpush.msra.mxu0 %v654
      %670 = vmatpush.msra.mxu0 %v653
      %671 = vmatpush.msra.mxu0 %v652
      %672 = vmatpush.msra.mxu0 %v651
      %673 = vmatpush.msra.mxu0 %v650
      %674 = vmatpush.msra.mxu0 %v649
      %675 = vmatpush.msra.mxu0 %v648
      %676 = vmatpush.msra.mxu0 %v647
      %677 = vmatpush.msra.mxu0 %v646
      %678 = vmatmul.f32.gmra.mxu0 %v613
      %v679 = vpop.f32.mrf.mxu0
      %v680 = vadd.f32 0.0, %v679
      %681 = vmatmul.f32.gmra.mxu0 %v614
      %v682 = vpop.f32.mrf.mxu0
      %v683 = vadd.f32 0.0, %v682
      %684 = vmatmul.f32.gmra.mxu0 %v615
      %v685 = vpop.f32.mrf.mxu0
      %v686 = vadd.f32 0.0, %v685
      %687 = vmatmul.f32.gmra.mxu0 %v616
      %v688 = vpop.f32.mrf.mxu0
      %v689 = vadd.f32 0.0, %v688
      %690 = vmatmul.f32.gmra.mxu0 %v617
      %v691 = vpop.f32.mrf.mxu0
      %v692 = vadd.f32 0.0, %v691
      %693 = vmatmul.f32.gmra.mxu0 %v618
      %v694 = vpop.f32.mrf.mxu0
      %v695 = vadd.f32 0.0, %v694
      %696 = vmatmul.f32.gmra.mxu0 %v619
      %v697 = vpop.f32.mrf.mxu0
      %v698 = vadd.f32 0.0, %v697
      %699 = vmatmul.f32.gmra.mxu0 %v620
      %v700 = vpop.f32.mrf.mxu0
      %v701 = vadd.f32 0.0, %v700
      %702 = vmatmul.f32.gmra.mxu0 %v621
      %v703 = vpop.f32.mrf.mxu0
      %v704 = vadd.f32 0.0, %v703
      %705 = vmatmul.f32.gmra.mxu0 %v622
      %v706 = vpop.f32.mrf.mxu0
      %v707 = vadd.f32 0.0, %v706
      %708 = vmatmul.f32.gmra.mxu0 %v623
      %v709 = vpop.f32.mrf.mxu0
      %v710 = vadd.f32 0.0, %v709
      %711 = vmatmul.f32.gmra.mxu0 %v624
      %v712 = vpop.f32.mrf.mxu0
      %v713 = vadd.f32 0.0, %v712
      %714 = vmatmul.f32.gmra.mxu0 %v625
      %v715 = vpop.f32.mrf.mxu0
      %v716 = vadd.f32 0.0, %v715
      %717 = vmatmul.f32.gmra.mxu0 %v626
      %v718 = vpop.f32.mrf.mxu0
      %v719 = vadd.f32 0.0, %v718
      %720 = vmatmul.f32.gmra.mxu0 %v627
      %v721 = vpop.f32.mrf.mxu0
      %v722 = vadd.f32 0.0, %v721
      %723 = vmatmul.f32.gmra.mxu0 %v628
      %v724 = vpop.f32.mrf.mxu0
      %v725 = vadd.f32 0.0, %v724
      %726 = vmatmul.f32.gmra.mxu0 %v629
      %v727 = vpop.f32.mrf.mxu0
      %v728 = vadd.f32 0.0, %v727
      %729 = vmatmul.f32.gmra.mxu0 %v630
      %v730 = vpop.f32.mrf.mxu0
      %v731 = vadd.f32 0.0, %v730
      %732 = vmatmul.f32.gmra.mxu0 %v631
      %v733 = vpop.f32.mrf.mxu0
      %v734 = vadd.f32 0.0, %v733
      %735 = vmatmul.f32.gmra.mxu0 %v632
      %v736 = vpop.f32.mrf.mxu0
      %v737 = vadd.f32 0.0, %v736
      %738 = vmatmul.f32.gmra.mxu0 %v633
      %v739 = vpop.f32.mrf.mxu0
      %v740 = vadd.f32 0.0, %v739
      %741 = vmatmul.f32.gmra.mxu0 %v634
      %v742 = vpop.f32.mrf.mxu0
      %v743 = vadd.f32 0.0, %v742
      %744 = vmatmul.f32.gmra.mxu0 %v635
      %v745 = vpop.f32.mrf.mxu0
      %v746 = vadd.f32 0.0, %v745
      %747 = vmatmul.f32.gmra.mxu0 %v636
      %v748 = vpop.f32.mrf.mxu0
      %v749 = vadd.f32 0.0, %v748
      %750 = vmatmul.f32.gmra.mxu0 %v637
      %v751 = vpop.f32.mrf.mxu0
      %v752 = vadd.f32 0.0, %v751
      %753 = vmatmul.f32.gmra.mxu0 %v638
      %v754 = vpop.f32.mrf.mxu0
      %v755 = vadd.f32 0.0, %v754
      %756 = vmatmul.f32.gmra.mxu0 %v639
      %v757 = vpop.f32.mrf.mxu0
      %v758 = vadd.f32 0.0, %v757
      %759 = vmatmul.f32.gmra.mxu0 %v640
      %v760 = vpop.f32.mrf.mxu0
      %v761 = vadd.f32 0.0, %v760
      %762 = vmatmul.f32.gmra.mxu0 %v641
      %v763 = vpop.f32.mrf.mxu0
      %v764 = vadd.f32 0.0, %v763
      %765 = vmatmul.f32.gmra.mxu0 %v642
      %v766 = vpop.f32.mrf.mxu0
      %v767 = vadd.f32 0.0, %v766
      %768 = vmatmul.f32.gmra.mxu0 %v643
      %v769 = vpop.f32.mrf.mxu0
      %v770 = vadd.f32 0.0, %v769
      %771 = vmatmul.f32.gmra.mxu0 %v644
      %v772 = vpop.f32.mrf.mxu0
      %v773 = vadd.f32 0.0, %v772
      %774 = vdwg.mxu0
      %v775 = vadd.f32 %v581, %v680
      %v776 = vadd.f32 %v582, %v683
      %v777 = vadd.f32 %v583, %v686
      %v778 = vadd.f32 %v584, %v689
      %v779 = vadd.f32 %v585, %v692
      %v780 = vadd.f32 %v586, %v695
      %v781 = vadd.f32 %v587, %v698
      %v782 = vadd.f32 %v588, %v701
      %v783 = vadd.f32 %v589, %v704
      %v784 = vadd.f32 %v590, %v707
      %v785 = vadd.f32 %v591, %v710
      %v786 = vadd.f32 %v592, %v713
      %v787 = vadd.f32 %v593, %v716
      %v788 = vadd.f32 %v594, %v719
      %v789 = vadd.f32 %v595, %v722
      %v790 = vadd.f32 %v596, %v725
      %v791 = vadd.f32 %v597, %v728
      %v792 = vadd.f32 %v598, %v731
      %v793 = vadd.f32 %v599, %v734
      %v794 = vadd.f32 %v600, %v737
      %v795 = vadd.f32 %v601, %v740
      %v796 = vadd.f32 %v602, %v743
      %v797 = vadd.f32 %v603, %v746
      %v798 = vadd.f32 %v604, %v749
      %v799 = vadd.f32 %v605, %v752
      %v800 = vadd.f32 %v606, %v755
      %v801 = vadd.f32 %v607, %v758
      %v802 = vadd.f32 %v608, %v761
      %v803 = vadd.f32 %v609, %v764
      %v804 = vadd.f32 %v610, %v767
      %v805 = vadd.f32 %v611, %v770
      %v806 = vadd.f32 %v612, %v773
      %807 = vst [vmem:[%s180] sm:$0xff] %v775
      %808 = vst [vmem:[%s180 + $0x8] sm:$0xff] %v776
      %809 = vst [vmem:[%s180 + $0x10] sm:$0xff] %v777
      %810 = vst [vmem:[%s180 + $0x18] sm:$0xff] %v778
      %811 = vst [vmem:[%s180 + $0x20] sm:$0xff] %v779
      %812 = vst [vmem:[%s180 + $0x28] sm:$0xff] %v780
      %813 = vst [vmem:[%s180 + $0x30] sm:$0xff] %v781
      %814 = vst [vmem:[%s180 + $0x38] sm:$0xff] %v782
      %815 = vst [vmem:[%s180 + $0x40] sm:$0xff] %v783
      %816 = vst [vmem:[%s180 + $0x48] sm:$0xff] %v784
      %817 = vst [vmem:[%s180 + $0x50] sm:$0xff] %v785
      %818 = vst [vmem:[%s180 + $0x58] sm:$0xff] %v786
      %819 = vst [vmem:[%s180 + $0x60] sm:$0xff] %v787
      %820 = vst [vmem:[%s180 + $0x68] sm:$0xff] %v788
      %821 = vst [vmem:[%s180 + $0x70] sm:$0xff] %v789
      %822 = vst [vmem:[%s180 + $0x78] sm:$0xff] %v790
      %823 = vst [vmem:[%s180 + $0x80] sm:$0xff] %v791
      %824 = vst [vmem:[%s180 + $0x88] sm:$0xff] %v792
      %825 = vst [vmem:[%s180 + $0x90] sm:$0xff] %v793
      %826 = vst [vmem:[%s180 + $0x98] sm:$0xff] %v794
      %827 = vst [vmem:[%s180 + $0xa0] sm:$0xff] %v795
      %828 = vst [vmem:[%s180 + $0xa8] sm:$0xff] %v796
      %829 = vst [vmem:[%s180 + $0xb0] sm:$0xff] %v797
      %830 = vst [vmem:[%s180 + $0xb8] sm:$0xff] %v798
      %831 = vst [vmem:[%s180 + $0xc0] sm:$0xff] %v799
      %832 = vst [vmem:[%s180 + $0xc8] sm:$0xff] %v800
      %833 = vst [vmem:[%s180 + $0xd0] sm:$0xff] %v801
      %834 = vst [vmem:[%s180 + $0xd8] sm:$0xff] %v802
      %835 = vst [vmem:[%s180 + $0xe0] sm:$0xff] %v803
      %836 = vst [vmem:[%s180 + $0xe8] sm:$0xff] %v804
      %837 = vst [vmem:[%s180 + $0xf0] sm:$0xff] %v805
      %838 = vst [vmem:[%s180 + $0xf8] sm:$0xff] %v806
      %v839 = vld [vmem:[%s180] sm:$0xff]
      %v840 = vld [vmem:[%s180 + $0x8] sm:$0xff]
      %v841 = vld [vmem:[%s180 + $0x10] sm:$0xff]
      %v842 = vld [vmem:[%s180 + $0x18] sm:$0xff]
      %v843 = vld [vmem:[%s180 + $0x20] sm:$0xff]
      %v844 = vld [vmem:[%s180 + $0x28] sm:$0xff]
      %v845 = vld [vmem:[%s180 + $0x30] sm:$0xff]
      %v846 = vld [vmem:[%s180 + $0x38] sm:$0xff]
      %v847 = vld [vmem:[%s180 + $0x40] sm:$0xff]
      %v848 = vld [vmem:[%s180 + $0x48] sm:$0xff]
      %v849 = vld [vmem:[%s180 + $0x50] sm:$0xff]
      %v850 = vld [vmem:[%s180 + $0x58] sm:$0xff]
      %v851 = vld [vmem:[%s180 + $0x60] sm:$0xff]
      %v852 = vld [vmem:[%s180 + $0x68] sm:$0xff]
      %v853 = vld [vmem:[%s180 + $0x70] sm:$0xff]
      %v854 = vld [vmem:[%s180 + $0x78] sm:$0xff]
      %v855 = vld [vmem:[%s180 + $0x80] sm:$0xff]
      %v856 = vld [vmem:[%s180 + $0x88] sm:$0xff]
      %v857 = vld [vmem:[%s180 + $0x90] sm:$0xff]
      %v858 = vld [vmem:[%s180 + $0x98] sm:$0xff]
      %v859 = vld [vmem:[%s180 + $0xa0] sm:$0xff]
      %v860 = vld [vmem:[%s180 + $0xa8] sm:$0xff]
      %v861 = vld [vmem:[%s180 + $0xb0] sm:$0xff]
      %v862 = vld [vmem:[%s180 + $0xb8] sm:$0xff]
      %v863 = vld [vmem:[%s180 + $0xc0] sm:$0xff]
      %v864 = vld [vmem:[%s180 + $0xc8] sm:$0xff]
      %v865 = vld [vmem:[%s180 + $0xd0] sm:$0xff]
      %v866 = vld [vmem:[%s180 + $0xd8] sm:$0xff]
      %v867 = vld [vmem:[%s180 + $0xe0] sm:$0xff]
      %v868 = vld [vmem:[%s180 + $0xe8] sm:$0xff]
      %v869 = vld [vmem:[%s180 + $0xf0] sm:$0xff]
      %v870 = vld [vmem:[%s180 + $0xf8] sm:$0xff]
      %v871 = vld [vmem:[#allocation2 + $0x2] sm:$0xff]
      %v872 = vld [vmem:[#allocation2 + $0xa] sm:$0xff]
      %v873 = vld [vmem:[#allocation2 + $0x12] sm:$0xff]
      %v874 = vld [vmem:[#allocation2 + $0x1a] sm:$0xff]
      %v875 = vld [vmem:[#allocation2 + $0x22] sm:$0xff]
      %v876 = vld [vmem:[#allocation2 + $0x2a] sm:$0xff]
      %v877 = vld [vmem:[#allocation2 + $0x32] sm:$0xff]
      %v878 = vld [vmem:[#allocation2 + $0x3a] sm:$0xff]
      %v879 = vld [vmem:[#allocation2 + $0x42] sm:$0xff]
      %v880 = vld [vmem:[#allocation2 + $0x4a] sm:$0xff]
      %v881 = vld [vmem:[#allocation2 + $0x52] sm:$0xff]
      %v882 = vld [vmem:[#allocation2 + $0x5a] sm:$0xff]
      %v883 = vld [vmem:[#allocation2 + $0x62] sm:$0xff]
      %v884 = vld [vmem:[#allocation2 + $0x6a] sm:$0xff]
      %v885 = vld [vmem:[#allocation2 + $0x72] sm:$0xff]
      %v886 = vld [vmem:[#allocation2 + $0x7a] sm:$0xff]
      %v887 = vld [vmem:[#allocation2 + $0x82] sm:$0xff]
      %v888 = vld [vmem:[#allocation2 + $0x8a] sm:$0xff]
      %v889 = vld [vmem:[#allocation2 + $0x92] sm:$0xff]
      %v890 = vld [vmem:[#allocation2 + $0x9a] sm:$0xff]
      %v891 = vld [vmem:[#allocation2 + $0xa2] sm:$0xff]
      %v892 = vld [vmem:[#allocation2 + $0xaa] sm:$0xff]
      %v893 = vld [vmem:[#allocation2 + $0xb2] sm:$0xff]
      %v894 = vld [vmem:[#allocation2 + $0xba] sm:$0xff]
      %v895 = vld [vmem:[#allocation2 + $0xc2] sm:$0xff]
      %v896 = vld [vmem:[#allocation2 + $0xca] sm:$0xff]
      %v897 = vld [vmem:[#allocation2 + $0xd2] sm:$0xff]
      %v898 = vld [vmem:[#allocation2 + $0xda] sm:$0xff]
      %v899 = vld [vmem:[#allocation2 + $0xe2] sm:$0xff]
      %v900 = vld [vmem:[#allocation2 + $0xea] sm:$0xff]
      %v901 = vld [vmem:[#allocation2 + $0xf2] sm:$0xff]
      %v902 = vld [vmem:[#allocation2 + $0xfa] sm:$0xff]
      %s903 = scalar_lea.vmem %s1, 256
      %v904 = vld [vmem:[%s903] sm:$0xff]
      %v905 = vld [vmem:[%s903 + $0x8] sm:$0xff]
      %v906 = vld [vmem:[%s903 + $0x10] sm:$0xff]
      %v907 = vld [vmem:[%s903 + $0x18] sm:$0xff]
      %v908 = vld [vmem:[%s903 + $0x20] sm:$0xff]
      %v909 = vld [vmem:[%s903 + $0x28] sm:$0xff]
      %v910 = vld [vmem:[%s903 + $0x30] sm:$0xff]
      %v911 = vld [vmem:[%s903 + $0x38] sm:$0xff]
      %v912 = vld [vmem:[%s903 + $0x40] sm:$0xff]
      %v913 = vld [vmem:[%s903 + $0x48] sm:$0xff]
      %v914 = vld [vmem:[%s903 + $0x50] sm:$0xff]
      %v915 = vld [vmem:[%s903 + $0x58] sm:$0xff]
      %v916 = vld [vmem:[%s903 + $0x60] sm:$0xff]
      %v917 = vld [vmem:[%s903 + $0x68] sm:$0xff]
      %v918 = vld [vmem:[%s903 + $0x70] sm:$0xff]
      %v919 = vld [vmem:[%s903 + $0x78] sm:$0xff]
      %920 = vmatpush.msra.mxu0 %v919
      %921 = vmatpush.msra.mxu0 %v918
      %922 = vmatpush.msra.mxu0 %v917
      %923 = vmatpush.msra.mxu0 %v916
      %924 = vmatpush.msra.mxu0 %v915
      %925 = vmatpush.msra.mxu0 %v914
      %926 = vmatpush.msra.mxu0 %v913
      %927 = vmatpush.msra.mxu0 %v912
      %928 = vmatpush.msra.mxu0 %v911
      %929 = vmatpush.msra.mxu0 %v910
      %930 = vmatpush.msra.mxu0 %v909
      %931 = vmatpush.msra.mxu0 %v908
      %932 = vmatpush.msra.mxu0 %v907
      %933 = vmatpush.msra.mxu0 %v906
      %934 = vmatpush.msra.mxu0 %v905
      %935 = vmatpush.msra.mxu0 %v904
      %936 = vmatmul.f32.gmra.mxu0 %v871
      %v937 = vpop.f32.mrf.mxu0
      %v938 = vadd.f32 0.0, %v937
      %939 = vmatmul.f32.gmra.mxu0 %v872
      %v940 = vpop.f32.mrf.mxu0
      %v941 = vadd.f32 0.0, %v940
      %942 = vmatmul.f32.gmra.mxu0 %v873
      %v943 = vpop.f32.mrf.mxu0
      %v944 = vadd.f32 0.0, %v943
      %945 = vmatmul.f32.gmra.mxu0 %v874
      %v946 = vpop.f32.mrf.mxu0
      %v947 = vadd.f32 0.0, %v946
      %948 = vmatmul.f32.gmra.mxu0 %v875
      %v949 = vpop.f32.mrf.mxu0
      %v950 = vadd.f32 0.0, %v949
      %951 = vmatmul.f32.gmra.mxu0 %v876
      %v952 = vpop.f32.mrf.mxu0
      %v953 = vadd.f32 0.0, %v952
      %954 = vmatmul.f32.gmra.mxu0 %v877
      %v955 = vpop.f32.mrf.mxu0
      %v956 = vadd.f32 0.0, %v955
      %957 = vmatmul.f32.gmra.mxu0 %v878
      %v958 = vpop.f32.mrf.mxu0
      %v959 = vadd.f32 0.0, %v958
      %960 = vmatmul.f32.gmra.mxu0 %v879
      %v961 = vpop.f32.mrf.mxu0
      %v962 = vadd.f32 0.0, %v961
      %963 = vmatmul.f32.gmra.mxu0 %v880
      %v964 = vpop.f32.mrf.mxu0
      %v965 = vadd.f32 0.0, %v964
      %966 = vmatmul.f32.gmra.mxu0 %v881
      %v967 = vpop.f32.mrf.mxu0
      %v968 = vadd.f32 0.0, %v967
      %969 = vmatmul.f32.gmra.mxu0 %v882
      %v970 = vpop.f32.mrf.mxu0
      %v971 = vadd.f32 0.0, %v970
      %972 = vmatmul.f32.gmra.mxu0 %v883
      %v973 = vpop.f32.mrf.mxu0
      %v974 = vadd.f32 0.0, %v973
      %975 = vmatmul.f32.gmra.mxu0 %v884
      %v976 = vpop.f32.mrf.mxu0
      %v977 = vadd.f32 0.0, %v976
      %978 = vmatmul.f32.gmra.mxu0 %v885
      %v979 = vpop.f32.mrf.mxu0
      %v980 = vadd.f32 0.0, %v979
      %981 = vmatmul.f32.gmra.mxu0 %v886
      %v982 = vpop.f32.mrf.mxu0
      %v983 = vadd.f32 0.0, %v982
      %984 = vmatmul.f32.gmra.mxu0 %v887
      %v985 = vpop.f32.mrf.mxu0
      %v986 = vadd.f32 0.0, %v985
      %987 = vmatmul.f32.gmra.mxu0 %v888
      %v988 = vpop.f32.mrf.mxu0
      %v989 = vadd.f32 0.0, %v988
      %990 = vmatmul.f32.gmra.mxu0 %v889
      %v991 = vpop.f32.mrf.mxu0
      %v992 = vadd.f32 0.0, %v991
      %993 = vmatmul.f32.gmra.mxu0 %v890
      %v994 = vpop.f32.mrf.mxu0
      %v995 = vadd.f32 0.0, %v994
      %996 = vmatmul.f32.gmra.mxu0 %v891
      %v997 = vpop.f32.mrf.mxu0
      %v998 = vadd.f32 0.0, %v997
      %999 = vmatmul.f32.gmra.mxu0 %v892
      %v1000 = vpop.f32.mrf.mxu0
      %v1001 = vadd.f32 0.0, %v1000
      %1002 = vmatmul.f32.gmra.mxu0 %v893
      %v1003 = vpop.f32.mrf.mxu0
      %v1004 = vadd.f32 0.0, %v1003
      %1005 = vmatmul.f32.gmra.mxu0 %v894
      %v1006 = vpop.f32.mrf.mxu0
      %v1007 = vadd.f32 0.0, %v1006
      %1008 = vmatmul.f32.gmra.mxu0 %v895
      %v1009 = vpop.f32.mrf.mxu0
      %v1010 = vadd.f32 0.0, %v1009
      %1011 = vmatmul.f32.gmra.mxu0 %v896
      %v1012 = vpop.f32.mrf.mxu0
      %v1013 = vadd.f32 0.0, %v1012
      %1014 = vmatmul.f32.gmra.mxu0 %v897
      %v1015 = vpop.f32.mrf.mxu0
      %v1016 = vadd.f32 0.0, %v1015
      %1017 = vmatmul.f32.gmra.mxu0 %v898
      %v1018 = vpop.f32.mrf.mxu0
      %v1019 = vadd.f32 0.0, %v1018
      %1020 = vmatmul.f32.gmra.mxu0 %v899
      %v1021 = vpop.f32.mrf.mxu0
      %v1022 = vadd.f32 0.0, %v1021
      %1023 = vmatmul.f32.gmra.mxu0 %v900
      %v1024 = vpop.f32.mrf.mxu0
      %v1025 = vadd.f32 0.0, %v1024
      %1026 = vmatmul.f32.gmra.mxu0 %v901
      %v1027 = vpop.f32.mrf.mxu0
      %v1028 = vadd.f32 0.0, %v1027
      %1029 = vmatmul.f32.gmra.mxu0 %v902
      %v1030 = vpop.f32.mrf.mxu0
      %v1031 = vadd.f32 0.0, %v1030
      %1032 = vdwg.mxu0
      %v1033 = vadd.f32 %v839, %v938
      %v1034 = vadd.f32 %v840, %v941
      %v1035 = vadd.f32 %v841, %v944
      %v1036 = vadd.f32 %v842, %v947
      %v1037 = vadd.f32 %v843, %v950
      %v1038 = vadd.f32 %v844, %v953
      %v1039 = vadd.f32 %v845, %v956
      %v1040 = vadd.f32 %v846, %v959
      %v1041 = vadd.f32 %v847, %v962
      %v1042 = vadd.f32 %v848, %v965
      %v1043 = vadd.f32 %v849, %v968
      %v1044 = vadd.f32 %v850, %v971
      %v1045 = vadd.f32 %v851, %v974
      %v1046 = vadd.f32 %v852, %v977
      %v1047 = vadd.f32 %v853, %v980
      %v1048 = vadd.f32 %v854, %v983
      %v1049 = vadd.f32 %v855, %v986
      %v1050 = vadd.f32 %v856, %v989
      %v1051 = vadd.f32 %v857, %v992
      %v1052 = vadd.f32 %v858, %v995
      %v1053 = vadd.f32 %v859, %v998
      %v1054 = vadd.f32 %v860, %v1001
      %v1055 = vadd.f32 %v861, %v1004
      %v1056 = vadd.f32 %v862, %v1007
      %v1057 = vadd.f32 %v863, %v1010
      %v1058 = vadd.f32 %v864, %v1013
      %v1059 = vadd.f32 %v865, %v1016
      %v1060 = vadd.f32 %v866, %v1019
      %v1061 = vadd.f32 %v867, %v1022
      %v1062 = vadd.f32 %v868, %v1025
      %v1063 = vadd.f32 %v869, %v1028
      %v1064 = vadd.f32 %v870, %v1031
      %1065 = vst [vmem:[%s180] sm:$0xff] %v1033
      %1066 = vst [vmem:[%s180 + $0x8] sm:$0xff] %v1034
      %1067 = vst [vmem:[%s180 + $0x10] sm:$0xff] %v1035
      %1068 = vst [vmem:[%s180 + $0x18] sm:$0xff] %v1036
      %1069 = vst [vmem:[%s180 + $0x20] sm:$0xff] %v1037
      %1070 = vst [vmem:[%s180 + $0x28] sm:$0xff] %v1038
      %1071 = vst [vmem:[%s180 + $0x30] sm:$0xff] %v1039
      %1072 = vst [vmem:[%s180 + $0x38] sm:$0xff] %v1040
      %1073 = vst [vmem:[%s180 + $0x40] sm:$0xff] %v1041
      %1074 = vst [vmem:[%s180 + $0x48] sm:$0xff] %v1042
      %1075 = vst [vmem:[%s180 + $0x50] sm:$0xff] %v1043
      %1076 = vst [vmem:[%s180 + $0x58] sm:$0xff] %v1044
      %1077 = vst [vmem:[%s180 + $0x60] sm:$0xff] %v1045
      %1078 = vst [vmem:[%s180 + $0x68] sm:$0xff] %v1046
      %1079 = vst [vmem:[%s180 + $0x70] sm:$0xff] %v1047
      %1080 = vst [vmem:[%s180 + $0x78] sm:$0xff] %v1048
      %1081 = vst [vmem:[%s180 + $0x80] sm:$0xff] %v1049
      %1082 = vst [vmem:[%s180 + $0x88] sm:$0xff] %v1050
      %1083 = vst [vmem:[%s180 + $0x90] sm:$0xff] %v1051
      %1084 = vst [vmem:[%s180 + $0x98] sm:$0xff] %v1052
      %1085 = vst [vmem:[%s180 + $0xa0] sm:$0xff] %v1053
      %1086 = vst [vmem:[%s180 + $0xa8] sm:$0xff] %v1054
      %1087 = vst [vmem:[%s180 + $0xb0] sm:$0xff] %v1055
      %1088 = vst [vmem:[%s180 + $0xb8] sm:$0xff] %v1056
      %1089 = vst [vmem:[%s180 + $0xc0] sm:$0xff] %v1057
      %1090 = vst [vmem:[%s180 + $0xc8] sm:$0xff] %v1058
      %1091 = vst [vmem:[%s180 + $0xd0] sm:$0xff] %v1059
      %1092 = vst [vmem:[%s180 + $0xd8] sm:$0xff] %v1060
      %1093 = vst [vmem:[%s180 + $0xe0] sm:$0xff] %v1061
      %1094 = vst [vmem:[%s180 + $0xe8] sm:$0xff] %v1062
      %1095 = vst [vmem:[%s180 + $0xf0] sm:$0xff] %v1063
      %1096 = vst [vmem:[%s180 + $0xf8] sm:$0xff] %v1064
      %v1097 = vld [vmem:[%s180] sm:$0xff]
      %v1098 = vld [vmem:[%s180 + $0x8] sm:$0xff]
      %v1099 = vld [vmem:[%s180 + $0x10] sm:$0xff]
      %v1100 = vld [vmem:[%s180 + $0x18] sm:$0xff]
      %v1101 = vld [vmem:[%s180 + $0x20] sm:$0xff]
      %v1102 = vld [vmem:[%s180 + $0x28] sm:$0xff]
      %v1103 = vld [vmem:[%s180 + $0x30] sm:$0xff]
      %v1104 = vld [vmem:[%s180 + $0x38] sm:$0xff]
      %v1105 = vld [vmem:[%s180 + $0x40] sm:$0xff]
      %v1106 = vld [vmem:[%s180 + $0x48] sm:$0xff]
      %v1107 = vld [vmem:[%s180 + $0x50] sm:$0xff]
      %v1108 = vld [vmem:[%s180 + $0x58] sm:$0xff]
      %v1109 = vld [vmem:[%s180 + $0x60] sm:$0xff]
      %v1110 = vld [vmem:[%s180 + $0x68] sm:$0xff]
      %v1111 = vld [vmem:[%s180 + $0x70] sm:$0xff]
      %v1112 = vld [vmem:[%s180 + $0x78] sm:$0xff]
      %v1113 = vld [vmem:[%s180 + $0x80] sm:$0xff]
      %v1114 = vld [vmem:[%s180 + $0x88] sm:$0xff]
      %v1115 = vld [vmem:[%s180 + $0x90] sm:$0xff]
      %v1116 = vld [vmem:[%s180 + $0x98] sm:$0xff]
      %v1117 = vld [vmem:[%s180 + $0xa0] sm:$0xff]
      %v1118 = vld [vmem:[%s180 + $0xa8] sm:$0xff]
      %v1119 = vld [vmem:[%s180 + $0xb0] sm:$0xff]
      %v1120 = vld [vmem:[%s180 + $0xb8] sm:$0xff]
      %v1121 = vld [vmem:[%s180 + $0xc0] sm:$0xff]
      %v1122 = vld [vmem:[%s180 + $0xc8] sm:$0xff]
      %v1123 = vld [vmem:[%s180 + $0xd0] sm:$0xff]
      %v1124 = vld [vmem:[%s180 + $0xd8] sm:$0xff]
      %v1125 = vld [vmem:[%s180 + $0xe0] sm:$0xff]
      %v1126 = vld [vmem:[%s180 + $0xe8] sm:$0xff]
      %v1127 = vld [vmem:[%s180 + $0xf0] sm:$0xff]
      %v1128 = vld [vmem:[%s180 + $0xf8] sm:$0xff]
      %v1129 = vld [vmem:[#allocation2 + $0x12] sm:$0xff]
      %v1130 = vld [vmem:[#allocation2 + $0x1a] sm:$0xff]
      %v1131 = vld [vmem:[#allocation2 + $0x22] sm:$0xff]
      %v1132 = vld [vmem:[#allocation2 + $0x2a] sm:$0xff]
      %v1133 = vld [vmem:[#allocation2 + $0x32] sm:$0xff]
      %v1134 = vld [vmem:[#allocation2 + $0x3a] sm:$0xff]
      %v1135 = vld [vmem:[#allocation2 + $0x42] sm:$0xff]
      %v1136 = vld [vmem:[#allocation2 + $0x4a] sm:$0xff]
      %v1137 = vld [vmem:[#allocation2 + $0x52] sm:$0xff]
      %v1138 = vld [vmem:[#allocation2 + $0x5a] sm:$0xff]
      %v1139 = vld [vmem:[#allocation2 + $0x62] sm:$0xff]
      %v1140 = vld [vmem:[#allocation2 + $0x6a] sm:$0xff]
      %v1141 = vld [vmem:[#allocation2 + $0x72] sm:$0xff]
      %v1142 = vld [vmem:[#allocation2 + $0x7a] sm:$0xff]
      %v1143 = vld [vmem:[#allocation2 + $0x82] sm:$0xff]
      %v1144 = vld [vmem:[#allocation2 + $0x8a] sm:$0xff]
      %v1145 = vld [vmem:[#allocation2 + $0x92] sm:$0xff]
      %v1146 = vld [vmem:[#allocation2 + $0x9a] sm:$0xff]
      %v1147 = vld [vmem:[#allocation2 + $0xa2] sm:$0xff]
      %v1148 = vld [vmem:[#allocation2 + $0xaa] sm:$0xff]
      %v1149 = vld [vmem:[#allocation2 + $0xb2] sm:$0xff]
      %v1150 = vld [vmem:[#allocation2 + $0xba] sm:$0xff]
      %v1151 = vld [vmem:[#allocation2 + $0xc2] sm:$0xff]
      %v1152 = vld [vmem:[#allocation2 + $0xca] sm:$0xff]
      %v1153 = vld [vmem:[#allocation2 + $0xd2] sm:$0xff]
      %v1154 = vld [vmem:[#allocation2 + $0xda] sm:$0xff]
      %v1155 = vld [vmem:[#allocation2 + $0xe2] sm:$0xff]
      %v1156 = vld [vmem:[#allocation2 + $0xea] sm:$0xff]
      %v1157 = vld [vmem:[#allocation2 + $0xf2] sm:$0xff]
      %v1158 = vld [vmem:[#allocation2 + $0xfa] sm:$0xff]
      %v1159 = vld [vmem:[#allocation2 + $0x102] sm:$0xff]
      %v1160 = vld [vmem:[#allocation2 + $0x10a] sm:$0xff]
      %s1161 = scalar_lea.vmem %s1, 384
      %v1162 = vld [vmem:[%s1161] sm:$0xff]
      %v1163 = vld [vmem:[%s1161 + $0x8] sm:$0xff]
      %v1164 = vld [vmem:[%s1161 + $0x10] sm:$0xff]
      %v1165 = vld [vmem:[%s1161 + $0x18] sm:$0xff]
      %v1166 = vld [vmem:[%s1161 + $0x20] sm:$0xff]
      %v1167 = vld [vmem:[%s1161 + $0x28] sm:$0xff]
      %v1168 = vld [vmem:[%s1161 + $0x30] sm:$0xff]
      %v1169 = vld [vmem:[%s1161 + $0x38] sm:$0xff]
      %v1170 = vld [vmem:[%s1161 + $0x40] sm:$0xff]
      %v1171 = vld [vmem:[%s1161 + $0x48] sm:$0xff]
      %v1172 = vld [vmem:[%s1161 + $0x50] sm:$0xff]
      %v1173 = vld [vmem:[%s1161 + $0x58] sm:$0xff]
      %v1174 = vld [vmem:[%s1161 + $0x60] sm:$0xff]
      %v1175 = vld [vmem:[%s1161 + $0x68] sm:$0xff]
      %v1176 = vld [vmem:[%s1161 + $0x70] sm:$0xff]
      %v1177 = vld [vmem:[%s1161 + $0x78] sm:$0xff]
      %1178 = vmatpush.msra.mxu0 %v1177
      %1179 = vmatpush.msra.mxu0 %v1176
      %1180 = vmatpush.msra.mxu0 %v1175
      %1181 = vmatpush.msra.mxu0 %v1174
      %1182 = vmatpush.msra.mxu0 %v1173
      %1183 = vmatpush.msra.mxu0 %v1172
      %1184 = vmatpush.msra.mxu0 %v1171
      %1185 = vmatpush.msra.mxu0 %v1170
      %1186 = vmatpush.msra.mxu0 %v1169
      %1187 = vmatpush.msra.mxu0 %v1168
      %1188 = vmatpush.msra.mxu0 %v1167
      %1189 = vmatpush.msra.mxu0 %v1166
      %1190 = vmatpush.msra.mxu0 %v1165
      %1191 = vmatpush.msra.mxu0 %v1164
      %1192 = vmatpush.msra.mxu0 %v1163
      %1193 = vmatpush.msra.mxu0 %v1162
      %1194 = vmatmul.f32.gmra.mxu0 %v1129
      %v1195 = vpop.f32.mrf.mxu0
      %v1196 = vadd.f32 0.0, %v1195
      %1197 = vmatmul.f32.gmra.mxu0 %v1130
      %v1198 = vpop.f32.mrf.mxu0
      %v1199 = vadd.f32 0.0, %v1198
      %1200 = vmatmul.f32.gmra.mxu0 %v1131
      %v1201 = vpop.f32.mrf.mxu0
      %v1202 = vadd.f32 0.0, %v1201
      %1203 = vmatmul.f32.gmra.mxu0 %v1132
      %v1204 = vpop.f32.mrf.mxu0
      %v1205 = vadd.f32 0.0, %v1204
      %1206 = vmatmul.f32.gmra.mxu0 %v1133
      %v1207 = vpop.f32.mrf.mxu0
      %v1208 = vadd.f32 0.0, %v1207
      %1209 = vmatmul.f32.gmra.mxu0 %v1134
      %v1210 = vpop.f32.mrf.mxu0
      %v1211 = vadd.f32 0.0, %v1210
      %1212 = vmatmul.f32.gmra.mxu0 %v1135
      %v1213 = vpop.f32.mrf.mxu0
      %v1214 = vadd.f32 0.0, %v1213
      %1215 = vmatmul.f32.gmra.mxu0 %v1136
      %v1216 = vpop.f32.mrf.mxu0
      %v1217 = vadd.f32 0.0, %v1216
      %1218 = vmatmul.f32.gmra.mxu0 %v1137
      %v1219 = vpop.f32.mrf.mxu0
      %v1220 = vadd.f32 0.0, %v1219
      %1221 = vmatmul.f32.gmra.mxu0 %v1138
      %v1222 = vpop.f32.mrf.mxu0
      %v1223 = vadd.f32 0.0, %v1222
      %1224 = vmatmul.f32.gmra.mxu0 %v1139
      %v1225 = vpop.f32.mrf.mxu0
      %v1226 = vadd.f32 0.0, %v1225
      %1227 = vmatmul.f32.gmra.mxu0 %v1140
      %v1228 = vpop.f32.mrf.mxu0
      %v1229 = vadd.f32 0.0, %v1228
      %1230 = vmatmul.f32.gmra.mxu0 %v1141
      %v1231 = vpop.f32.mrf.mxu0
      %v1232 = vadd.f32 0.0, %v1231
      %1233 = vmatmul.f32.gmra.mxu0 %v1142
      %v1234 = vpop.f32.mrf.mxu0
      %v1235 = vadd.f32 0.0, %v1234
      %1236 = vmatmul.f32.gmra.mxu0 %v1143
      %v1237 = vpop.f32.mrf.mxu0
      %v1238 = vadd.f32 0.0, %v1237
      %1239 = vmatmul.f32.gmra.mxu0 %v1144
      %v1240 = vpop.f32.mrf.mxu0
      %v1241 = vadd.f32 0.0, %v1240
      %1242 = vmatmul.f32.gmra.mxu0 %v1145
      %v1243 = vpop.f32.mrf.mxu0
      %v1244 = vadd.f32 0.0, %v1243
      %1245 = vmatmul.f32.gmra.mxu0 %v1146
      %v1246 = vpop.f32.mrf.mxu0
      %v1247 = vadd.f32 0.0, %v1246
      %1248 = vmatmul.f32.gmra.mxu0 %v1147
      %v1249 = vpop.f32.mrf.mxu0
      %v1250 = vadd.f32 0.0, %v1249
      %1251 = vmatmul.f32.gmra.mxu0 %v1148
      %v1252 = vpop.f32.mrf.mxu0
      %v1253 = vadd.f32 0.0, %v1252
      %1254 = vmatmul.f32.gmra.mxu0 %v1149
      %v1255 = vpop.f32.mrf.mxu0
      %v1256 = vadd.f32 0.0, %v1255
      %1257 = vmatmul.f32.gmra.mxu0 %v1150
      %v1258 = vpop.f32.mrf.mxu0
      %v1259 = vadd.f32 0.0, %v1258
      %1260 = vmatmul.f32.gmra.mxu0 %v1151
      %v1261 = vpop.f32.mrf.mxu0
      %v1262 = vadd.f32 0.0, %v1261
      %1263 = vmatmul.f32.gmra.mxu0 %v1152
      %v1264 = vpop.f32.mrf.mxu0
      %v1265 = vadd.f32 0.0, %v1264
      %1266 = vmatmul.f32.gmra.mxu0 %v1153
      %v1267 = vpop.f32.mrf.mxu0
      %v1268 = vadd.f32 0.0, %v1267
      %1269 = vmatmul.f32.gmra.mxu0 %v1154
      %v1270 = vpop.f32.mrf.mxu0
      %v1271 = vadd.f32 0.0, %v1270
      %1272 = vmatmul.f32.gmra.mxu0 %v1155
      %v1273 = vpop.f32.mrf.mxu0
      %v1274 = vadd.f32 0.0, %v1273
      %1275 = vmatmul.f32.gmra.mxu0 %v1156
      %v1276 = vpop.f32.mrf.mxu0
      %v1277 = vadd.f32 0.0, %v1276
      %1278 = vmatmul.f32.gmra.mxu0 %v1157
      %v1279 = vpop.f32.mrf.mxu0
      %v1280 = vadd.f32 0.0, %v1279
      %1281 = vmatmul.f32.gmra.mxu0 %v1158
      %v1282 = vpop.f32.mrf.mxu0
      %v1283 = vadd.f32 0.0, %v1282
      %1284 = vmatmul.f32.gmra.mxu0 %v1159
      %v1285 = vpop.f32.mrf.mxu0
      %v1286 = vadd.f32 0.0, %v1285
      %1287 = vmatmul.f32.gmra.mxu0 %v1160
      %v1288 = vpop.f32.mrf.mxu0
      %v1289 = vadd.f32 0.0, %v1288
      %1290 = vdwg.mxu0
      %v1291 = vadd.f32 %v1097, %v1196
      %v1292 = vadd.f32 %v1098, %v1199
      %v1293 = vadd.f32 %v1099, %v1202
      %v1294 = vadd.f32 %v1100, %v1205
      %v1295 = vadd.f32 %v1101, %v1208
      %v1296 = vadd.f32 %v1102, %v1211
      %v1297 = vadd.f32 %v1103, %v1214
      %v1298 = vadd.f32 %v1104, %v1217
      %v1299 = vadd.f32 %v1105, %v1220
      %v1300 = vadd.f32 %v1106, %v1223
      %v1301 = vadd.f32 %v1107, %v1226
      %v1302 = vadd.f32 %v1108, %v1229
      %v1303 = vadd.f32 %v1109, %v1232
      %v1304 = vadd.f32 %v1110, %v1235
      %v1305 = vadd.f32 %v1111, %v1238
      %v1306 = vadd.f32 %v1112, %v1241
      %v1307 = vadd.f32 %v1113, %v1244
      %v1308 = vadd.f32 %v1114, %v1247
      %v1309 = vadd.f32 %v1115, %v1250
      %v1310 = vadd.f32 %v1116, %v1253
      %v1311 = vadd.f32 %v1117, %v1256
      %v1312 = vadd.f32 %v1118, %v1259
      %v1313 = vadd.f32 %v1119, %v1262
      %v1314 = vadd.f32 %v1120, %v1265
      %v1315 = vadd.f32 %v1121, %v1268
      %v1316 = vadd.f32 %v1122, %v1271
      %v1317 = vadd.f32 %v1123, %v1274
      %v1318 = vadd.f32 %v1124, %v1277
      %v1319 = vadd.f32 %v1125, %v1280
      %v1320 = vadd.f32 %v1126, %v1283
      %v1321 = vadd.f32 %v1127, %v1286
      %v1322 = vadd.f32 %v1128, %v1289
      %1323 = vst [vmem:[%s180] sm:$0xff] %v1291
      %1324 = vst [vmem:[%s180 + $0x8] sm:$0xff] %v1292
      %1325 = vst [vmem:[%s180 + $0x10] sm:$0xff] %v1293
      %1326 = vst [vmem:[%s180 + $0x18] sm:$0xff] %v1294
      %1327 = vst [vmem:[%s180 + $0x20] sm:$0xff] %v1295
      %1328 = vst [vmem:[%s180 + $0x28] sm:$0xff] %v1296
      %1329 = vst [vmem:[%s180 + $0x30] sm:$0xff] %v1297
      %1330 = vst [vmem:[%s180 + $0x38] sm:$0xff] %v1298
      %1331 = vst [vmem:[%s180 + $0x40] sm:$0xff] %v1299
      %1332 = vst [vmem:[%s180 + $0x48] sm:$0xff] %v1300
      %1333 = vst [vmem:[%s180 + $0x50] sm:$0xff] %v1301
      %1334 = vst [vmem:[%s180 + $0x58] sm:$0xff] %v1302
      %1335 = vst [vmem:[%s180 + $0x60] sm:$0xff] %v1303
      %1336 = vst [vmem:[%s180 + $0x68] sm:$0xff] %v1304
      %1337 = vst [vmem:[%s180 + $0x70] sm:$0xff] %v1305
      %1338 = vst [vmem:[%s180 + $0x78] sm:$0xff] %v1306
      %1339 = vst [vmem:[%s180 + $0x80] sm:$0xff] %v1307
      %1340 = vst [vmem:[%s180 + $0x88] sm:$0xff] %v1308
      %1341 = vst [vmem:[%s180 + $0x90] sm:$0xff] %v1309
      %1342 = vst [vmem:[%s180 + $0x98] sm:$0xff] %v1310
      %1343 = vst [vmem:[%s180 + $0xa0] sm:$0xff] %v1311
      %1344 = vst [vmem:[%s180 + $0xa8] sm:$0xff] %v1312
      %1345 = vst [vmem:[%s180 + $0xb0] sm:$0xff] %v1313
      %1346 = vst [vmem:[%s180 + $0xb8] sm:$0xff] %v1314
      %1347 = vst [vmem:[%s180 + $0xc0] sm:$0xff] %v1315
      %1348 = vst [vmem:[%s180 + $0xc8] sm:$0xff] %v1316
      %1349 = vst [vmem:[%s180 + $0xd0] sm:$0xff] %v1317
      %1350 = vst [vmem:[%s180 + $0xd8] sm:$0xff] %v1318
      %1351 = vst [vmem:[%s180 + $0xe0] sm:$0xff] %v1319
      %1352 = vst [vmem:[%s180 + $0xe8] sm:$0xff] %v1320
      %1353 = vst [vmem:[%s180 + $0xf0] sm:$0xff] %v1321
      %1354 = vst [vmem:[%s180 + $0xf8] sm:$0xff] %v1322
      %v1355 = vld [vmem:[%s180] sm:$0xff]
      %v1356 = vld [vmem:[%s180 + $0x8] sm:$0xff]
      %v1357 = vld [vmem:[%s180 + $0x10] sm:$0xff]
      %v1358 = vld [vmem:[%s180 + $0x18] sm:$0xff]
      %v1359 = vld [vmem:[%s180 + $0x20] sm:$0xff]
      %v1360 = vld [vmem:[%s180 + $0x28] sm:$0xff]
      %v1361 = vld [vmem:[%s180 + $0x30] sm:$0xff]
      %v1362 = vld [vmem:[%s180 + $0x38] sm:$0xff]
      %v1363 = vld [vmem:[%s180 + $0x40] sm:$0xff]
      %v1364 = vld [vmem:[%s180 + $0x48] sm:$0xff]
      %v1365 = vld [vmem:[%s180 + $0x50] sm:$0xff]
      %v1366 = vld [vmem:[%s180 + $0x58] sm:$0xff]
      %v1367 = vld [vmem:[%s180 + $0x60] sm:$0xff]
      %v1368 = vld [vmem:[%s180 + $0x68] sm:$0xff]
      %v1369 = vld [vmem:[%s180 + $0x70] sm:$0xff]
      %v1370 = vld [vmem:[%s180 + $0x78] sm:$0xff]
      %v1371 = vld [vmem:[%s180 + $0x80] sm:$0xff]
      %v1372 = vld [vmem:[%s180 + $0x88] sm:$0xff]
      %v1373 = vld [vmem:[%s180 + $0x90] sm:$0xff]
      %v1374 = vld [vmem:[%s180 + $0x98] sm:$0xff]
      %v1375 = vld [vmem:[%s180 + $0xa0] sm:$0xff]
      %v1376 = vld [vmem:[%s180 + $0xa8] sm:$0xff]
      %v1377 = vld [vmem:[%s180 + $0xb0] sm:$0xff]
      %v1378 = vld [vmem:[%s180 + $0xb8] sm:$0xff]
      %v1379 = vld [vmem:[%s180 + $0xc0] sm:$0xff]
      %v1380 = vld [vmem:[%s180 + $0xc8] sm:$0xff]
      %v1381 = vld [vmem:[%s180 + $0xd0] sm:$0xff]
      %v1382 = vld [vmem:[%s180 + $0xd8] sm:$0xff]
      %v1383 = vld [vmem:[%s180 + $0xe0] sm:$0xff]
      %v1384 = vld [vmem:[%s180 + $0xe8] sm:$0xff]
      %v1385 = vld [vmem:[%s180 + $0xf0] sm:$0xff]
      %v1386 = vld [vmem:[%s180 + $0xf8] sm:$0xff]
      %v1387 = vld [vmem:[#allocation2 + $0x13] sm:$0xff]
      %v1388 = vld [vmem:[#allocation2 + $0x1b] sm:$0xff]
      %v1389 = vld [vmem:[#allocation2 + $0x23] sm:$0xff]
      %v1390 = vld [vmem:[#allocation2 + $0x2b] sm:$0xff]
      %v1391 = vld [vmem:[#allocation2 + $0x33] sm:$0xff]
      %v1392 = vld [vmem:[#allocation2 + $0x3b] sm:$0xff]
      %v1393 = vld [vmem:[#allocation2 + $0x43] sm:$0xff]
      %v1394 = vld [vmem:[#allocation2 + $0x4b] sm:$0xff]
      %v1395 = vld [vmem:[#allocation2 + $0x53] sm:$0xff]
      %v1396 = vld [vmem:[#allocation2 + $0x5b] sm:$0xff]
      %v1397 = vld [vmem:[#allocation2 + $0x63] sm:$0xff]
      %v1398 = vld [vmem:[#allocation2 + $0x6b] sm:$0xff]
      %v1399 = vld [vmem:[#allocation2 + $0x73] sm:$0xff]
      %v1400 = vld [vmem:[#allocation2 + $0x7b] sm:$0xff]
      %v1401 = vld [vmem:[#allocation2 + $0x83] sm:$0xff]
      %v1402 = vld [vmem:[#allocation2 + $0x8b] sm:$0xff]
      %v1403 = vld [vmem:[#allocation2 + $0x93] sm:$0xff]
      %v1404 = vld [vmem:[#allocation2 + $0x9b] sm:$0xff]
      %v1405 = vld [vmem:[#allocation2 + $0xa3] sm:$0xff]
      %v1406 = vld [vmem:[#allocation2 + $0xab] sm:$0xff]
      %v1407 = vld [vmem:[#allocation2 + $0xb3] sm:$0xff]
      %v1408 = vld [vmem:[#allocation2 + $0xbb] sm:$0xff]
      %v1409 = vld [vmem:[#allocation2 + $0xc3] sm:$0xff]
      %v1410 = vld [vmem:[#allocation2 + $0xcb] sm:$0xff]
      %v1411 = vld [vmem:[#allocation2 + $0xd3] sm:$0xff]
      %v1412 = vld [vmem:[#allocation2 + $0xdb] sm:$0xff]
      %v1413 = vld [vmem:[#allocation2 + $0xe3] sm:$0xff]
      %v1414 = vld [vmem:[#allocation2 + $0xeb] sm:$0xff]
      %v1415 = vld [vmem:[#allocation2 + $0xf3] sm:$0xff]
      %v1416 = vld [vmem:[#allocation2 + $0xfb] sm:$0xff]
      %v1417 = vld [vmem:[#allocation2 + $0x103] sm:$0xff]
      %v1418 = vld [vmem:[#allocation2 + $0x10b] sm:$0xff]
      %s1419 = scalar_lea.vmem %s1, 512
      %v1420 = vld [vmem:[%s1419] sm:$0xff]
      %v1421 = vld [vmem:[%s1419 + $0x8] sm:$0xff]
      %v1422 = vld [vmem:[%s1419 + $0x10] sm:$0xff]
      %v1423 = vld [vmem:[%s1419 + $0x18] sm:$0xff]
      %v1424 = vld [vmem:[%s1419 + $0x20] sm:$0xff]
      %v1425 = vld [vmem:[%s1419 + $0x28] sm:$0xff]
      %v1426 = vld [vmem:[%s1419 + $0x30] sm:$0xff]
      %v1427 = vld [vmem:[%s1419 + $0x38] sm:$0xff]
      %v1428 = vld [vmem:[%s1419 + $0x40] sm:$0xff]
      %v1429 = vld [vmem:[%s1419 + $0x48] sm:$0xff]
      %v1430 = vld [vmem:[%s1419 + $0x50] sm:$0xff]
      %v1431 = vld [vmem:[%s1419 + $0x58] sm:$0xff]
      %v1432 = vld [vmem:[%s1419 + $0x60] sm:$0xff]
      %v1433 = vld [vmem:[%s1419 + $0x68] sm:$0xff]
      %v1434 = vld [vmem:[%s1419 + $0x70] sm:$0xff]
      %v1435 = vld [vmem:[%s1419 + $0x78] sm:$0xff]
      %1436 = vmatpush.msra.mxu0 %v1435
      %1437 = vmatpush.msra.mxu0 %v1434
      %1438 = vmatpush.msra.mxu0 %v1433
      %1439 = vmatpush.msra.mxu0 %v1432
      %1440 = vmatpush.msra.mxu0 %v1431
      %1441 = vmatpush.msra.mxu0 %v1430
      %1442 = vmatpush.msra.mxu0 %v1429
      %1443 = vmatpush.msra.mxu0 %v1428
      %1444 = vmatpush.msra.mxu0 %v1427
      %1445 = vmatpush.msra.mxu0 %v1426
      %1446 = vmatpush.msra.mxu0 %v1425
      %1447 = vmatpush.msra.mxu0 %v1424
      %1448 = vmatpush.msra.mxu0 %v1423
      %1449 = vmatpush.msra.mxu0 %v1422
      %1450 = vmatpush.msra.mxu0 %v1421
      %1451 = vmatpush.msra.mxu0 %v1420
      %1452 = vmatmul.f32.gmra.mxu0 %v1387
      %v1453 = vpop.f32.mrf.mxu0
      %v1454 = vadd.f32 0.0, %v1453
      %1455 = vmatmul.f32.gmra.mxu0 %v1388
      %v1456 = vpop.f32.mrf.mxu0
      %v1457 = vadd.f32 0.0, %v1456
      %1458 = vmatmul.f32.gmra.mxu0 %v1389
      %v1459 = vpop.f32.mrf.mxu0
      %v1460 = vadd.f32 0.0, %v1459
      %1461 = vmatmul.f32.gmra.mxu0 %v1390
      %v1462 = vpop.f32.mrf.mxu0
      %v1463 = vadd.f32 0.0, %v1462
      %1464 = vmatmul.f32.gmra.mxu0 %v1391
      %v1465 = vpop.f32.mrf.mxu0
      %v1466 = vadd.f32 0.0, %v1465
      %1467 = vmatmul.f32.gmra.mxu0 %v1392
      %v1468 = vpop.f32.mrf.mxu0
      %v1469 = vadd.f32 0.0, %v1468
      %1470 = vmatmul.f32.gmra.mxu0 %v1393
      %v1471 = vpop.f32.mrf.mxu0
      %v1472 = vadd.f32 0.0, %v1471
      %1473 = vmatmul.f32.gmra.mxu0 %v1394
      %v1474 = vpop.f32.mrf.mxu0
      %v1475 = vadd.f32 0.0, %v1474
      %1476 = vmatmul.f32.gmra.mxu0 %v1395
      %v1477 = vpop.f32.mrf.mxu0
      %v1478 = vadd.f32 0.0, %v1477
      %1479 = vmatmul.f32.gmra.mxu0 %v1396
      %v1480 = vpop.f32.mrf.mxu0
      %v1481 = vadd.f32 0.0, %v1480
      %1482 = vmatmul.f32.gmra.mxu0 %v1397
      %v1483 = vpop.f32.mrf.mxu0
      %v1484 = vadd.f32 0.0, %v1483
      %1485 = vmatmul.f32.gmra.mxu0 %v1398
      %v1486 = vpop.f32.mrf.mxu0
      %v1487 = vadd.f32 0.0, %v1486
      %1488 = vmatmul.f32.gmra.mxu0 %v1399
      %v1489 = vpop.f32.mrf.mxu0
      %v1490 = vadd.f32 0.0, %v1489
      %1491 = vmatmul.f32.gmra.mxu0 %v1400
      %v1492 = vpop.f32.mrf.mxu0
      %v1493 = vadd.f32 0.0, %v1492
      %1494 = vmatmul.f32.gmra.mxu0 %v1401
      %v1495 = vpop.f32.mrf.mxu0
      %v1496 = vadd.f32 0.0, %v1495
      %1497 = vmatmul.f32.gmra.mxu0 %v1402
      %v1498 = vpop.f32.mrf.mxu0
      %v1499 = vadd.f32 0.0, %v1498
      %1500 = vmatmul.f32.gmra.mxu0 %v1403
      %v1501 = vpop.f32.mrf.mxu0
      %v1502 = vadd.f32 0.0, %v1501
      %1503 = vmatmul.f32.gmra.mxu0 %v1404
      %v1504 = vpop.f32.mrf.mxu0
      %v1505 = vadd.f32 0.0, %v1504
      %1506 = vmatmul.f32.gmra.mxu0 %v1405
      %v1507 = vpop.f32.mrf.mxu0
      %v1508 = vadd.f32 0.0, %v1507
      %1509 = vmatmul.f32.gmra.mxu0 %v1406
      %v1510 = vpop.f32.mrf.mxu0
      %v1511 = vadd.f32 0.0, %v1510
      %1512 = vmatmul.f32.gmra.mxu0 %v1407
      %v1513 = vpop.f32.mrf.mxu0
      %v1514 = vadd.f32 0.0, %v1513
      %1515 = vmatmul.f32.gmra.mxu0 %v1408
      %v1516 = vpop.f32.mrf.mxu0
      %v1517 = vadd.f32 0.0, %v1516
      %1518 = vmatmul.f32.gmra.mxu0 %v1409
      %v1519 = vpop.f32.mrf.mxu0
      %v1520 = vadd.f32 0.0, %v1519
      %1521 = vmatmul.f32.gmra.mxu0 %v1410
      %v1522 = vpop.f32.mrf.mxu0
      %v1523 = vadd.f32 0.0, %v1522
      %1524 = vmatmul.f32.gmra.mxu0 %v1411
      %v1525 = vpop.f32.mrf.mxu0
      %v1526 = vadd.f32 0.0, %v1525
      %1527 = vmatmul.f32.gmra.mxu0 %v1412
      %v1528 = vpop.f32.mrf.mxu0
      %v1529 = vadd.f32 0.0, %v1528
      %1530 = vmatmul.f32.gmra.mxu0 %v1413
      %v1531 = vpop.f32.mrf.mxu0
      %v1532 = vadd.f32 0.0, %v1531
      %1533 = vmatmul.f32.gmra.mxu0 %v1414
      %v1534 = vpop.f32.mrf.mxu0
      %v1535 = vadd.f32 0.0, %v1534
      %1536 = vmatmul.f32.gmra.mxu0 %v1415
      %v1537 = vpop.f32.mrf.mxu0
      %v1538 = vadd.f32 0.0, %v1537
      %1539 = vmatmul.f32.gmra.mxu0 %v1416
      %v1540 = vpop.f32.mrf.mxu0
      %v1541 = vadd.f32 0.0, %v1540
      %1542 = vmatmul.f32.gmra.mxu0 %v1417
      %v1543 = vpop.f32.mrf.mxu0
      %v1544 = vadd.f32 0.0, %v1543
      %1545 = vmatmul.f32.gmra.mxu0 %v1418
      %v1546 = vpop.f32.mrf.mxu0
      %v1547 = vadd.f32 0.0, %v1546
      %1548 = vdwg.mxu0
      %v1549 = vadd.f32 %v1355, %v1454
      %v1550 = vadd.f32 %v1356, %v1457
      %v1551 = vadd.f32 %v1357, %v1460
      %v1552 = vadd.f32 %v1358, %v1463
      %v1553 = vadd.f32 %v1359, %v1466
      %v1554 = vadd.f32 %v1360, %v1469
      %v1555 = vadd.f32 %v1361, %v1472
      %v1556 = vadd.f32 %v1362, %v1475
      %v1557 = vadd.f32 %v1363, %v1478
      %v1558 = vadd.f32 %v1364, %v1481
      %v1559 = vadd.f32 %v1365, %v1484
      %v1560 = vadd.f32 %v1366, %v1487
      %v1561 = vadd.f32 %v1367, %v1490
      %v1562 = vadd.f32 %v1368, %v1493
      %v1563 = vadd.f32 %v1369, %v1496
      %v1564 = vadd.f32 %v1370, %v1499
      %v1565 = vadd.f32 %v1371, %v1502
      %v1566 = vadd.f32 %v1372, %v1505
      %v1567 = vadd.f32 %v1373, %v1508
      %v1568 = vadd.f32 %v1374, %v1511
      %v1569 = vadd.f32 %v1375, %v1514
      %v1570 = vadd.f32 %v1376, %v1517
      %v1571 = vadd.f32 %v1377, %v1520
      %v1572 = vadd.f32 %v1378, %v1523
      %v1573 = vadd.f32 %v1379, %v1526
      %v1574 = vadd.f32 %v1380, %v1529
      %v1575 = vadd.f32 %v1381, %v1532
      %v1576 = vadd.f32 %v1382, %v1535
      %v1577 = vadd.f32 %v1383, %v1538
      %v1578 = vadd.f32 %v1384, %v1541
      %v1579 = vadd.f32 %v1385, %v1544
      %v1580 = vadd.f32 %v1386, %v1547
      %1581 = vst [vmem:[%s180] sm:$0xff] %v1549
      %1582 = vst [vmem:[%s180 + $0x8] sm:$0xff] %v1550
      %1583 = vst [vmem:[%s180 + $0x10] sm:$0xff] %v1551
      %1584 = vst [vmem:[%s180 + $0x18] sm:$0xff] %v1552
      %1585 = vst [vmem:[%s180 + $0x20] sm:$0xff] %v1553
      %1586 = vst [vmem:[%s180 + $0x28] sm:$0xff] %v1554
      %1587 = vst [vmem:[%s180 + $0x30] sm:$0xff] %v1555
      %1588 = vst [vmem:[%s180 + $0x38] sm:$0xff] %v1556
      %1589 = vst [vmem:[%s180 + $0x40] sm:$0xff] %v1557
      %1590 = vst [vmem:[%s180 + $0x48] sm:$0xff] %v1558
      %1591 = vst [vmem:[%s180 + $0x50] sm:$0xff] %v1559
      %1592 = vst [vmem:[%s180 + $0x58] sm:$0xff] %v1560
      %1593 = vst [vmem:[%s180 + $0x60] sm:$0xff] %v1561
      %1594 = vst [vmem:[%s180 + $0x68] sm:$0xff] %v1562
      %1595 = vst [vmem:[%s180 + $0x70] sm:$0xff] %v1563
      %1596 = vst [vmem:[%s180 + $0x78] sm:$0xff] %v1564
      %1597 = vst [vmem:[%s180 + $0x80] sm:$0xff] %v1565
      %1598 = vst [vmem:[%s180 + $0x88] sm:$0xff] %v1566
      %1599 = vst [vmem:[%s180 + $0x90] sm:$0xff] %v1567
      %1600 = vst [vmem:[%s180 + $0x98] sm:$0xff] %v1568
      %1601 = vst [vmem:[%s180 + $0xa0] sm:$0xff] %v1569
      %1602 = vst [vmem:[%s180 + $0xa8] sm:$0xff] %v1570
      %1603 = vst [vmem:[%s180 + $0xb0] sm:$0xff] %v1571
      %1604 = vst [vmem:[%s180 + $0xb8] sm:$0xff] %v1572
      %1605 = vst [vmem:[%s180 + $0xc0] sm:$0xff] %v1573
      %1606 = vst [vmem:[%s180 + $0xc8] sm:$0xff] %v1574
      %1607 = vst [vmem:[%s180 + $0xd0] sm:$0xff] %v1575
      %1608 = vst [vmem:[%s180 + $0xd8] sm:$0xff] %v1576
      %1609 = vst [vmem:[%s180 + $0xe0] sm:$0xff] %v1577
      %1610 = vst [vmem:[%s180 + $0xe8] sm:$0xff] %v1578
      %1611 = vst [vmem:[%s180 + $0xf0] sm:$0xff] %v1579
      %1612 = vst [vmem:[%s180 + $0xf8] sm:$0xff] %v1580
      %v1613 = vld [vmem:[%s180] sm:$0xff]
      %v1614 = vld [vmem:[%s180 + $0x8] sm:$0xff]
      %v1615 = vld [vmem:[%s180 + $0x10] sm:$0xff]
      %v1616 = vld [vmem:[%s180 + $0x18] sm:$0xff]
      %v1617 = vld [vmem:[%s180 + $0x20] sm:$0xff]
      %v1618 = vld [vmem:[%s180 + $0x28] sm:$0xff]
      %v1619 = vld [vmem:[%s180 + $0x30] sm:$0xff]
      %v1620 = vld [vmem:[%s180 + $0x38] sm:$0xff]
      %v1621 = vld [vmem:[%s180 + $0x40] sm:$0xff]
      %v1622 = vld [vmem:[%s180 + $0x48] sm:$0xff]
      %v1623 = vld [vmem:[%s180 + $0x50] sm:$0xff]
      %v1624 = vld [vmem:[%s180 + $0x58] sm:$0xff]
      %v1625 = vld [vmem:[%s180 + $0x60] sm:$0xff]
      %v1626 = vld [vmem:[%s180 + $0x68] sm:$0xff]
      %v1627 = vld [vmem:[%s180 + $0x70] sm:$0xff]
      %v1628 = vld [vmem:[%s180 + $0x78] sm:$0xff]
      %v1629 = vld [vmem:[%s180 + $0x80] sm:$0xff]
      %v1630 = vld [vmem:[%s180 + $0x88] sm:$0xff]
      %v1631 = vld [vmem:[%s180 + $0x90] sm:$0xff]
      %v1632 = vld [vmem:[%s180 + $0x98] sm:$0xff]
      %v1633 = vld [vmem:[%s180 + $0xa0] sm:$0xff]
      %v1634 = vld [vmem:[%s180 + $0xa8] sm:$0xff]
      %v1635 = vld [vmem:[%s180 + $0xb0] sm:$0xff]
      %v1636 = vld [vmem:[%s180 + $0xb8] sm:$0xff]
      %v1637 = vld [vmem:[%s180 + $0xc0] sm:$0xff]
      %v1638 = vld [vmem:[%s180 + $0xc8] sm:$0xff]
      %v1639 = vld [vmem:[%s180 + $0xd0] sm:$0xff]
      %v1640 = vld [vmem:[%s180 + $0xd8] sm:$0xff]
      %v1641 = vld [vmem:[%s180 + $0xe0] sm:$0xff]
      %v1642 = vld [vmem:[%s180 + $0xe8] sm:$0xff]
      %v1643 = vld [vmem:[%s180 + $0xf0] sm:$0xff]
      %v1644 = vld [vmem:[%s180 + $0xf8] sm:$0xff]
      %v1645 = vld [vmem:[#allocation2 + $0x14] sm:$0xff]
      %v1646 = vld [vmem:[#allocation2 + $0x1c] sm:$0xff]
      %v1647 = vld [vmem:[#allocation2 + $0x24] sm:$0xff]
      %v1648 = vld [vmem:[#allocation2 + $0x2c] sm:$0xff]
      %v1649 = vld [vmem:[#allocation2 + $0x34] sm:$0xff]
      %v1650 = vld [vmem:[#allocation2 + $0x3c] sm:$0xff]
      %v1651 = vld [vmem:[#allocation2 + $0x44] sm:$0xff]
      %v1652 = vld [vmem:[#allocation2 + $0x4c] sm:$0xff]
      %v1653 = vld [vmem:[#allocation2 + $0x54] sm:$0xff]
      %v1654 = vld [vmem:[#allocation2 + $0x5c] sm:$0xff]
      %v1655 = vld [vmem:[#allocation2 + $0x64] sm:$0xff]
      %v1656 = vld [vmem:[#allocation2 + $0x6c] sm:$0xff]
      %v1657 = vld [vmem:[#allocation2 + $0x74] sm:$0xff]
      %v1658 = vld [vmem:[#allocation2 + $0x7c] sm:$0xff]
      %v1659 = vld [vmem:[#allocation2 + $0x84] sm:$0xff]
      %v1660 = vld [vmem:[#allocation2 + $0x8c] sm:$0xff]
      %v1661 = vld [vmem:[#allocation2 + $0x94] sm:$0xff]
      %v1662 = vld [vmem:[#allocation2 + $0x9c] sm:$0xff]
      %v1663 = vld [vmem:[#allocation2 + $0xa4] sm:$0xff]
      %v1664 = vld [vmem:[#allocation2 + $0xac] sm:$0xff]
      %v1665 = vld [vmem:[#allocation2 + $0xb4] sm:$0xff]
      %v1666 = vld [vmem:[#allocation2 + $0xbc] sm:$0xff]
      %v1667 = vld [vmem:[#allocation2 + $0xc4] sm:$0xff]
      %v1668 = vld [vmem:[#allocation2 + $0xcc] sm:$0xff]
      %v1669 = vld [vmem:[#allocation2 + $0xd4] sm:$0xff]
      %v1670 = vld [vmem:[#allocation2 + $0xdc] sm:$0xff]
      %v1671 = vld [vmem:[#allocation2 + $0xe4] sm:$0xff]
      %v1672 = vld [vmem:[#allocation2 + $0xec] sm:$0xff]
      %v1673 = vld [vmem:[#allocation2 + $0xf4] sm:$0xff]
      %v1674 = vld [vmem:[#allocation2 + $0xfc] sm:$0xff]
      %v1675 = vld [vmem:[#allocation2 + $0x104] sm:$0xff]
      %v1676 = vld [vmem:[#allocation2 + $0x10c] sm:$0xff]
      %s1677 = scalar_lea.vmem %s1, 640
      %v1678 = vld [vmem:[%s1677] sm:$0xff]
      %v1679 = vld [vmem:[%s1677 + $0x8] sm:$0xff]
      %v1680 = vld [vmem:[%s1677 + $0x10] sm:$0xff]
      %v1681 = vld [vmem:[%s1677 + $0x18] sm:$0xff]
      %v1682 = vld [vmem:[%s1677 + $0x20] sm:$0xff]
      %v1683 = vld [vmem:[%s1677 + $0x28] sm:$0xff]
      %v1684 = vld [vmem:[%s1677 + $0x30] sm:$0xff]
      %v1685 = vld [vmem:[%s1677 + $0x38] sm:$0xff]
      %v1686 = vld [vmem:[%s1677 + $0x40] sm:$0xff]
      %v1687 = vld [vmem:[%s1677 + $0x48] sm:$0xff]
      %v1688 = vld [vmem:[%s1677 + $0x50] sm:$0xff]
      %v1689 = vld [vmem:[%s1677 + $0x58] sm:$0xff]
      %v1690 = vld [vmem:[%s1677 + $0x60] sm:$0xff]
      %v1691 = vld [vmem:[%s1677 + $0x68] sm:$0xff]
      %v1692 = vld [vmem:[%s1677 + $0x70] sm:$0xff]
      %v1693 = vld [vmem:[%s1677 + $0x78] sm:$0xff]
      %1694 = vmatpush.msra.mxu0 %v1693
      %1695 = vmatpush.msra.mxu0 %v1692
      %1696 = vmatpush.msra.mxu0 %v1691
      %1697 = vmatpush.msra.mxu0 %v1690
      %1698 = vmatpush.msra.mxu0 %v1689
      %1699 = vmatpush.msra.mxu0 %v1688
      %1700 = vmatpush.msra.mxu0 %v1687
      %1701 = vmatpush.msra.mxu0 %v1686
      %1702 = vmatpush.msra.mxu0 %v1685
      %1703 = vmatpush.msra.mxu0 %v1684
      %1704 = vmatpush.msra.mxu0 %v1683
      %1705 = vmatpush.msra.mxu0 %v1682
      %1706 = vmatpush.msra.mxu0 %v1681
      %1707 = vmatpush.msra.mxu0 %v1680
      %1708 = vmatpush.msra.mxu0 %v1679
      %1709 = vmatpush.msra.mxu0 %v1678
      %1710 = vmatmul.f32.gmra.mxu0 %v1645
      %v1711 = vpop.f32.mrf.mxu0
      %v1712 = vadd.f32 0.0, %v1711
      %1713 = vmatmul.f32.gmra.mxu0 %v1646
      %v1714 = vpop.f32.mrf.mxu0
      %v1715 = vadd.f32 0.0, %v1714
      %1716 = vmatmul.f32.gmra.mxu0 %v1647
      %v1717 = vpop.f32.mrf.mxu0
      %v1718 = vadd.f32 0.0, %v1717
      %1719 = vmatmul.f32.gmra.mxu0 %v1648
      %v1720 = vpop.f32.mrf.mxu0
      %v1721 = vadd.f32 0.0, %v1720
      %1722 = vmatmul.f32.gmra.mxu0 %v1649
      %v1723 = vpop.f32.mrf.mxu0
      %v1724 = vadd.f32 0.0, %v1723
      %1725 = vmatmul.f32.gmra.mxu0 %v1650
      %v1726 = vpop.f32.mrf.mxu0
      %v1727 = vadd.f32 0.0, %v1726
      %1728 = vmatmul.f32.gmra.mxu0 %v1651
      %v1729 = vpop.f32.mrf.mxu0
      %v1730 = vadd.f32 0.0, %v1729
      %1731 = vmatmul.f32.gmra.mxu0 %v1652
      %v1732 = vpop.f32.mrf.mxu0
      %v1733 = vadd.f32 0.0, %v1732
      %1734 = vmatmul.f32.gmra.mxu0 %v1653
      %v1735 = vpop.f32.mrf.mxu0
      %v1736 = vadd.f32 0.0, %v1735
      %1737 = vmatmul.f32.gmra.mxu0 %v1654
      %v1738 = vpop.f32.mrf.mxu0
      %v1739 = vadd.f32 0.0, %v1738
      %1740 = vmatmul.f32.gmra.mxu0 %v1655
      %v1741 = vpop.f32.mrf.mxu0
      %v1742 = vadd.f32 0.0, %v1741
      %1743 = vmatmul.f32.gmra.mxu0 %v1656
      %v1744 = vpop.f32.mrf.mxu0
      %v1745 = vadd.f32 0.0, %v1744
      %1746 = vmatmul.f32.gmra.mxu0 %v1657
      %v1747 = vpop.f32.mrf.mxu0
      %v1748 = vadd.f32 0.0, %v1747
      %1749 = vmatmul.f32.gmra.mxu0 %v1658
      %v1750 = vpop.f32.mrf.mxu0
      %v1751 = vadd.f32 0.0, %v1750
      %1752 = vmatmul.f32.gmra.mxu0 %v1659
      %v1753 = vpop.f32.mrf.mxu0
      %v1754 = vadd.f32 0.0, %v1753
      %1755 = vmatmul.f32.gmra.mxu0 %v1660
      %v1756 = vpop.f32.mrf.mxu0
      %v1757 = vadd.f32 0.0, %v1756
      %1758 = vmatmul.f32.gmra.mxu0 %v1661
      %v1759 = vpop.f32.mrf.mxu0
      %v1760 = vadd.f32 0.0, %v1759
      %1761 = vmatmul.f32.gmra.mxu0 %v1662
      %v1762 = vpop.f32.mrf.mxu0
      %v1763 = vadd.f32 0.0, %v1762
      %1764 = vmatmul.f32.gmra.mxu0 %v1663
      %v1765 = vpop.f32.mrf.mxu0
      %v1766 = vadd.f32 0.0, %v1765
      %1767 = vmatmul.f32.gmra.mxu0 %v1664
      %v1768 = vpop.f32.mrf.mxu0
      %v1769 = vadd.f32 0.0, %v1768
      %1770 = vmatmul.f32.gmra.mxu0 %v1665
      %v1771 = vpop.f32.mrf.mxu0
      %v1772 = vadd.f32 0.0, %v1771
      %1773 = vmatmul.f32.gmra.mxu0 %v1666
      %v1774 = vpop.f32.mrf.mxu0
      %v1775 = vadd.f32 0.0, %v1774
      %1776 = vmatmul.f32.gmra.mxu0 %v1667
      %v1777 = vpop.f32.mrf.mxu0
      %v1778 = vadd.f32 0.0, %v1777
      %1779 = vmatmul.f32.gmra.mxu0 %v1668
      %v1780 = vpop.f32.mrf.mxu0
      %v1781 = vadd.f32 0.0, %v1780
      %1782 = vmatmul.f32.gmra.mxu0 %v1669
      %v1783 = vpop.f32.mrf.mxu0
      %v1784 = vadd.f32 0.0, %v1783
      %1785 = vmatmul.f32.gmra.mxu0 %v1670
      %v1786 = vpop.f32.mrf.mxu0
      %v1787 = vadd.f32 0.0, %v1786
      %1788 = vmatmul.f32.gmra.mxu0 %v1671
      %v1789 = vpop.f32.mrf.mxu0
      %v1790 = vadd.f32 0.0, %v1789
      %1791 = vmatmul.f32.gmra.mxu0 %v1672
      %v1792 = vpop.f32.mrf.mxu0
      %v1793 = vadd.f32 0.0, %v1792
      %1794 = vmatmul.f32.gmra.mxu0 %v1673
      %v1795 = vpop.f32.mrf.mxu0
      %v1796 = vadd.f32 0.0, %v1795
      %1797 = vmatmul.f32.gmra.mxu0 %v1674
      %v1798 = vpop.f32.mrf.mxu0
      %v1799 = vadd.f32 0.0, %v1798
      %1800 = vmatmul.f32.gmra.mxu0 %v1675
      %v1801 = vpop.f32.mrf.mxu0
      %v1802 = vadd.f32 0.0, %v1801
      %1803 = vmatmul.f32.gmra.mxu0 %v1676
      %v1804 = vpop.f32.mrf.mxu0
      %v1805 = vadd.f32 0.0, %v1804
      %1806 = vdwg.mxu0
      %v1807 = vadd.f32 %v1613, %v1712
      %v1808 = vadd.f32 %v1614, %v1715
      %v1809 = vadd.f32 %v1615, %v1718
      %v1810 = vadd.f32 %v1616, %v1721
      %v1811 = vadd.f32 %v1617, %v1724
      %v1812 = vadd.f32 %v1618, %v1727
      %v1813 = vadd.f32 %v1619, %v1730
      %v1814 = vadd.f32 %v1620, %v1733
      %v1815 = vadd.f32 %v1621, %v1736
      %v1816 = vadd.f32 %v1622, %v1739
      %v1817 = vadd.f32 %v1623, %v1742
      %v1818 = vadd.f32 %v1624, %v1745
      %v1819 = vadd.f32 %v1625, %v1748
      %v1820 = vadd.f32 %v1626, %v1751
      %v1821 = vadd.f32 %v1627, %v1754
      %v1822 = vadd.f32 %v1628, %v1757
      %v1823 = vadd.f32 %v1629, %v1760
      %v1824 = vadd.f32 %v1630, %v1763
      %v1825 = vadd.f32 %v1631, %v1766
      %v1826 = vadd.f32 %v1632, %v1769
      %v1827 = vadd.f32 %v1633, %v1772
      %v1828 = vadd.f32 %v1634, %v1775
      %v1829 = vadd.f32 %v1635, %v1778
      %v1830 = vadd.f32 %v1636, %v1781
      %v1831 = vadd.f32 %v1637, %v1784
      %v1832 = vadd.f32 %v1638, %v1787
      %v1833 = vadd.f32 %v1639, %v1790
      %v1834 = vadd.f32 %v1640, %v1793
      %v1835 = vadd.f32 %v1641, %v1796
      %v1836 = vadd.f32 %v1642, %v1799
      %v1837 = vadd.f32 %v1643, %v1802
      %v1838 = vadd.f32 %v1644, %v1805
      %1839 = vst [vmem:[%s180] sm:$0xff] %v1807
      %1840 = vst [vmem:[%s180 + $0x8] sm:$0xff] %v1808
      %1841 = vst [vmem:[%s180 + $0x10] sm:$0xff] %v1809
      %1842 = vst [vmem:[%s180 + $0x18] sm:$0xff] %v1810
      %1843 = vst [vmem:[%s180 + $0x20] sm:$0xff] %v1811
      %1844 = vst [vmem:[%s180 + $0x28] sm:$0xff] %v1812
      %1845 = vst [vmem:[%s180 + $0x30] sm:$0xff] %v1813
      %1846 = vst [vmem:[%s180 + $0x38] sm:$0xff] %v1814
      %1847 = vst [vmem:[%s180 + $0x40] sm:$0xff] %v1815
      %1848 = vst [vmem:[%s180 + $0x48] sm:$0xff] %v1816
      %1849 = vst [vmem:[%s180 + $0x50] sm:$0xff] %v1817
      %1850 = vst [vmem:[%s180 + $0x58] sm:$0xff] %v1818
      %1851 = vst [vmem:[%s180 + $0x60] sm:$0xff] %v1819
      %1852 = vst [vmem:[%s180 + $0x68] sm:$0xff] %v1820
      %1853 = vst [vmem:[%s180 + $0x70] sm:$0xff] %v1821
      %1854 = vst [vmem:[%s180 + $0x78] sm:$0xff] %v1822
      %1855 = vst [vmem:[%s180 + $0x80] sm:$0xff] %v1823
      %1856 = vst [vmem:[%s180 + $0x88] sm:$0xff] %v1824
      %1857 = vst [vmem:[%s180 + $0x90] sm:$0xff] %v1825
      %1858 = vst [vmem:[%s180 + $0x98] sm:$0xff] %v1826
      %1859 = vst [vmem:[%s180 + $0xa0] sm:$0xff] %v1827
      %1860 = vst [vmem:[%s180 + $0xa8] sm:$0xff] %v1828
      %1861 = vst [vmem:[%s180 + $0xb0] sm:$0xff] %v1829
      %1862 = vst [vmem:[%s180 + $0xb8] sm:$0xff] %v1830
      %1863 = vst [vmem:[%s180 + $0xc0] sm:$0xff] %v1831
      %1864 = vst [vmem:[%s180 + $0xc8] sm:$0xff] %v1832
      %1865 = vst [vmem:[%s180 + $0xd0] sm:$0xff] %v1833
      %1866 = vst [vmem:[%s180 + $0xd8] sm:$0xff] %v1834
      %1867 = vst [vmem:[%s180 + $0xe0] sm:$0xff] %v1835
      %1868 = vst [vmem:[%s180 + $0xe8] sm:$0xff] %v1836
      %1869 = vst [vmem:[%s180 + $0xf0] sm:$0xff] %v1837
      %1870 = vst [vmem:[%s180 + $0xf8] sm:$0xff] %v1838
      %v1871 = vld [vmem:[%s180] sm:$0xff]
      %v1872 = vld [vmem:[%s180 + $0x8] sm:$0xff]
      %v1873 = vld [vmem:[%s180 + $0x10] sm:$0xff]
      %v1874 = vld [vmem:[%s180 + $0x18] sm:$0xff]
      %v1875 = vld [vmem:[%s180 + $0x20] sm:$0xff]
      %v1876 = vld [vmem:[%s180 + $0x28] sm:$0xff]
      %v1877 = vld [vmem:[%s180 + $0x30] sm:$0xff]
      %v1878 = vld [vmem:[%s180 + $0x38] sm:$0xff]
      %v1879 = vld [vmem:[%s180 + $0x40] sm:$0xff]
      %v1880 = vld [vmem:[%s180 + $0x48] sm:$0xff]
      %v1881 = vld [vmem:[%s180 + $0x50] sm:$0xff]
      %v1882 = vld [vmem:[%s180 + $0x58] sm:$0xff]
      %v1883 = vld [vmem:[%s180 + $0x60] sm:$0xff]
      %v1884 = vld [vmem:[%s180 + $0x68] sm:$0xff]
      %v1885 = vld [vmem:[%s180 + $0x70] sm:$0xff]
      %v1886 = vld [vmem:[%s180 + $0x78] sm:$0xff]
      %v1887 = vld [vmem:[%s180 + $0x80] sm:$0xff]
      %v1888 = vld [vmem:[%s180 + $0x88] sm:$0xff]
      %v1889 = vld [vmem:[%s180 + $0x90] sm:$0xff]
      %v1890 = vld [vmem:[%s180 + $0x98] sm:$0xff]
      %v1891 = vld [vmem:[%s180 + $0xa0] sm:$0xff]
      %v1892 = vld [vmem:[%s180 + $0xa8] sm:$0xff]
      %v1893 = vld [vmem:[%s180 + $0xb0] sm:$0xff]
      %v1894 = vld [vmem:[%s180 + $0xb8] sm:$0xff]
      %v1895 = vld [vmem:[%s180 + $0xc0] sm:$0xff]
      %v1896 = vld [vmem:[%s180 + $0xc8] sm:$0xff]
      %v1897 = vld [vmem:[%s180 + $0xd0] sm:$0xff]
      %v1898 = vld [vmem:[%s180 + $0xd8] sm:$0xff]
      %v1899 = vld [vmem:[%s180 + $0xe0] sm:$0xff]
      %v1900 = vld [vmem:[%s180 + $0xe8] sm:$0xff]
      %v1901 = vld [vmem:[%s180 + $0xf0] sm:$0xff]
      %v1902 = vld [vmem:[%s180 + $0xf8] sm:$0xff]
      %v1903 = vld [vmem:[#allocation2 + $0x24] sm:$0xff]
      %v1904 = vld [vmem:[#allocation2 + $0x2c] sm:$0xff]
      %v1905 = vld [vmem:[#allocation2 + $0x34] sm:$0xff]
      %v1906 = vld [vmem:[#allocation2 + $0x3c] sm:$0xff]
      %v1907 = vld [vmem:[#allocation2 + $0x44] sm:$0xff]
      %v1908 = vld [vmem:[#allocation2 + $0x4c] sm:$0xff]
      %v1909 = vld [vmem:[#allocation2 + $0x54] sm:$0xff]
      %v1910 = vld [vmem:[#allocation2 + $0x5c] sm:$0xff]
      %v1911 = vld [vmem:[#allocation2 + $0x64] sm:$0xff]
      %v1912 = vld [vmem:[#allocation2 + $0x6c] sm:$0xff]
      %v1913 = vld [vmem:[#allocation2 + $0x74] sm:$0xff]
      %v1914 = vld [vmem:[#allocation2 + $0x7c] sm:$0xff]
      %v1915 = vld [vmem:[#allocation2 + $0x84] sm:$0xff]
      %v1916 = vld [vmem:[#allocation2 + $0x8c] sm:$0xff]
      %v1917 = vld [vmem:[#allocation2 + $0x94] sm:$0xff]
      %v1918 = vld [vmem:[#allocation2 + $0x9c] sm:$0xff]
      %v1919 = vld [vmem:[#allocation2 + $0xa4] sm:$0xff]
      %v1920 = vld [vmem:[#allocation2 + $0xac] sm:$0xff]
      %v1921 = vld [vmem:[#allocation2 + $0xb4] sm:$0xff]
      %v1922 = vld [vmem:[#allocation2 + $0xbc] sm:$0xff]
      %v1923 = vld [vmem:[#allocation2 + $0xc4] sm:$0xff]
      %v1924 = vld [vmem:[#allocation2 + $0xcc] sm:$0xff]
      %v1925 = vld [vmem:[#allocation2 + $0xd4] sm:$0xff]
      %v1926 = vld [vmem:[#allocation2 + $0xdc] sm:$0xff]
      %v1927 = vld [vmem:[#allocation2 + $0xe4] sm:$0xff]
      %v1928 = vld [vmem:[#allocation2 + $0xec] sm:$0xff]
      %v1929 = vld [vmem:[#allocation2 + $0xf4] sm:$0xff]
      %v1930 = vld [vmem:[#allocation2 + $0xfc] sm:$0xff]
      %v1931 = vld [vmem:[#allocation2 + $0x104] sm:$0xff]
      %v1932 = vld [vmem:[#allocation2 + $0x10c] sm:$0xff]
      %v1933 = vld [vmem:[#allocation2 + $0x114] sm:$0xff]
      %v1934 = vld [vmem:[#allocation2 + $0x11c] sm:$0xff]
      %s1935 = scalar_lea.vmem %s1, 768
      %v1936 = vld [vmem:[%s1935] sm:$0xff]
      %v1937 = vld [vmem:[%s1935 + $0x8] sm:$0xff]
      %v1938 = vld [vmem:[%s1935 + $0x10] sm:$0xff]
      %v1939 = vld [vmem:[%s1935 + $0x18] sm:$0xff]
      %v1940 = vld [vmem:[%s1935 + $0x20] sm:$0xff]
      %v1941 = vld [vmem:[%s1935 + $0x28] sm:$0xff]
      %v1942 = vld [vmem:[%s1935 + $0x30] sm:$0xff]
      %v1943 = vld [vmem:[%s1935 + $0x38] sm:$0xff]
      %v1944 = vld [vmem:[%s1935 + $0x40] sm:$0xff]
      %v1945 = vld [vmem:[%s1935 + $0x48] sm:$0xff]
      %v1946 = vld [vmem:[%s1935 + $0x50] sm:$0xff]
      %v1947 = vld [vmem:[%s1935 + $0x58] sm:$0xff]
      %v1948 = vld [vmem:[%s1935 + $0x60] sm:$0xff]
      %v1949 = vld [vmem:[%s1935 + $0x68] sm:$0xff]
      %v1950 = vld [vmem:[%s1935 + $0x70] sm:$0xff]
      %v1951 = vld [vmem:[%s1935 + $0x78] sm:$0xff]
      %1952 = vmatpush.msra.mxu0 %v1951
      %1953 = vmatpush.msra.mxu0 %v1950
      %1954 = vmatpush.msra.mxu0 %v1949
      %1955 = vmatpush.msra.mxu0 %v1948
      %1956 = vmatpush.msra.mxu0 %v1947
      %1957 = vmatpush.msra.mxu0 %v1946
      %1958 = vmatpush.msra.mxu0 %v1945
      %1959 = vmatpush.msra.mxu0 %v1944
      %1960 = vmatpush.msra.mxu0 %v1943
      %1961 = vmatpush.msra.mxu0 %v1942
      %1962 = vmatpush.msra.mxu0 %v1941
      %1963 = vmatpush.msra.mxu0 %v1940
      %1964 = vmatpush.msra.mxu0 %v1939
      %1965 = vmatpush.msra.mxu0 %v1938
      %1966 = vmatpush.msra.mxu0 %v1937
      %1967 = vmatpush.msra.mxu0 %v1936
      %1968 = vmatmul.f32.gmra.mxu0 %v1903
      %v1969 = vpop.f32.mrf.mxu0
      %v1970 = vadd.f32 0.0, %v1969
      %1971 = vmatmul.f32.gmra.mxu0 %v1904
      %v1972 = vpop.f32.mrf.mxu0
      %v1973 = vadd.f32 0.0, %v1972
      %1974 = vmatmul.f32.gmra.mxu0 %v1905
      %v1975 = vpop.f32.mrf.mxu0
      %v1976 = vadd.f32 0.0, %v1975
      %1977 = vmatmul.f32.gmra.mxu0 %v1906
      %v1978 = vpop.f32.mrf.mxu0
      %v1979 = vadd.f32 0.0, %v1978
      %1980 = vmatmul.f32.gmra.mxu0 %v1907
      %v1981 = vpop.f32.mrf.mxu0
      %v1982 = vadd.f32 0.0, %v1981
      %1983 = vmatmul.f32.gmra.mxu0 %v1908
      %v1984 = vpop.f32.mrf.mxu0
      %v1985 = vadd.f32 0.0, %v1984
      %1986 = vmatmul.f32.gmra.mxu0 %v1909
      %v1987 = vpop.f32.mrf.mxu0
      %v1988 = vadd.f32 0.0, %v1987
      %1989 = vmatmul.f32.gmra.mxu0 %v1910
      %v1990 = vpop.f32.mrf.mxu0
      %v1991 = vadd.f32 0.0, %v1990
      %1992 = vmatmul.f32.gmra.mxu0 %v1911
      %v1993 = vpop.f32.mrf.mxu0
      %v1994 = vadd.f32 0.0, %v1993
      %1995 = vmatmul.f32.gmra.mxu0 %v1912
      %v1996 = vpop.f32.mrf.mxu0
      %v1997 = vadd.f32 0.0, %v1996
      %1998 = vmatmul.f32.gmra.mxu0 %v1913
      %v1999 = vpop.f32.mrf.mxu0
      %v2000 = vadd.f32 0.0, %v1999
      %2001 = vmatmul.f32.gmra.mxu0 %v1914
      %v2002 = vpop.f32.mrf.mxu0
      %v2003 = vadd.f32 0.0, %v2002
      %2004 = vmatmul.f32.gmra.mxu0 %v1915
      %v2005 = vpop.f32.mrf.mxu0
      %v2006 = vadd.f32 0.0, %v2005
      %2007 = vmatmul.f32.gmra.mxu0 %v1916
      %v2008 = vpop.f32.mrf.mxu0
      %v2009 = vadd.f32 0.0, %v2008
      %2010 = vmatmul.f32.gmra.mxu0 %v1917
      %v2011 = vpop.f32.mrf.mxu0
      %v2012 = vadd.f32 0.0, %v2011
      %2013 = vmatmul.f32.gmra.mxu0 %v1918
      %v2014 = vpop.f32.mrf.mxu0
      %v2015 = vadd.f32 0.0, %v2014
      %2016 = vmatmul.f32.gmra.mxu0 %v1919
      %v2017 = vpop.f32.mrf.mxu0
      %v2018 = vadd.f32 0.0, %v2017
      %2019 = vmatmul.f32.gmra.mxu0 %v1920
      %v2020 = vpop.f32.mrf.mxu0
      %v2021 = vadd.f32 0.0, %v2020
      %2022 = vmatmul.f32.gmra.mxu0 %v1921
      %v2023 = vpop.f32.mrf.mxu0
      %v2024 = vadd.f32 0.0, %v2023
      %2025 = vmatmul.f32.gmra.mxu0 %v1922
      %v2026 = vpop.f32.mrf.mxu0
      %v2027 = vadd.f32 0.0, %v2026
      %2028 = vmatmul.f32.gmra.mxu0 %v1923
      %v2029 = vpop.f32.mrf.mxu0
      %v2030 = vadd.f32 0.0, %v2029
      %2031 = vmatmul.f32.gmra.mxu0 %v1924
      %v2032 = vpop.f32.mrf.mxu0
      %v2033 = vadd.f32 0.0, %v2032
      %2034 = vmatmul.f32.gmra.mxu0 %v1925
      %v2035 = vpop.f32.mrf.mxu0
      %v2036 = vadd.f32 0.0, %v2035
      %2037 = vmatmul.f32.gmra.mxu0 %v1926
      %v2038 = vpop.f32.mrf.mxu0
      %v2039 = vadd.f32 0.0, %v2038
      %2040 = vmatmul.f32.gmra.mxu0 %v1927
      %v2041 = vpop.f32.mrf.mxu0
      %v2042 = vadd.f32 0.0, %v2041
      %2043 = vmatmul.f32.gmra.mxu0 %v1928
      %v2044 = vpop.f32.mrf.mxu0
      %v2045 = vadd.f32 0.0, %v2044
      %2046 = vmatmul.f32.gmra.mxu0 %v1929
      %v2047 = vpop.f32.mrf.mxu0
      %v2048 = vadd.f32 0.0, %v2047
      %2049 = vmatmul.f32.gmra.mxu0 %v1930
      %v2050 = vpop.f32.mrf.mxu0
      %v2051 = vadd.f32 0.0, %v2050
      %2052 = vmatmul.f32.gmra.mxu0 %v1931
      %v2053 = vpop.f32.mrf.mxu0
      %v2054 = vadd.f32 0.0, %v2053
      %2055 = vmatmul.f32.gmra.mxu0 %v1932
      %v2056 = vpop.f32.mrf.mxu0
      %v2057 = vadd.f32 0.0, %v2056
      %2058 = vmatmul.f32.gmra.mxu0 %v1933
      %v2059 = vpop.f32.mrf.mxu0
      %v2060 = vadd.f32 0.0, %v2059
      %2061 = vmatmul.f32.gmra.mxu0 %v1934
      %v2062 = vpop.f32.mrf.mxu0
      %v2063 = vadd.f32 0.0, %v2062
      %2064 = vdwg.mxu0
      %v2065 = vadd.f32 %v1871, %v1970
      %v2066 = vadd.f32 %v1872, %v1973
      %v2067 = vadd.f32 %v1873, %v1976
      %v2068 = vadd.f32 %v1874, %v1979
      %v2069 = vadd.f32 %v1875, %v1982
      %v2070 = vadd.f32 %v1876, %v1985
      %v2071 = vadd.f32 %v1877, %v1988
      %v2072 = vadd.f32 %v1878, %v1991
      %v2073 = vadd.f32 %v1879, %v1994
      %v2074 = vadd.f32 %v1880, %v1997
      %v2075 = vadd.f32 %v1881, %v2000
      %v2076 = vadd.f32 %v1882, %v2003
      %v2077 = vadd.f32 %v1883, %v2006
      %v2078 = vadd.f32 %v1884, %v2009
      %v2079 = vadd.f32 %v1885, %v2012
      %v2080 = vadd.f32 %v1886, %v2015
      %v2081 = vadd.f32 %v1887, %v2018
      %v2082 = vadd.f32 %v1888, %v2021
      %v2083 = vadd.f32 %v1889, %v2024
      %v2084 = vadd.f32 %v1890, %v2027
      %v2085 = vadd.f32 %v1891, %v2030
      %v2086 = vadd.f32 %v1892, %v2033
      %v2087 = vadd.f32 %v1893, %v2036
      %v2088 = vadd.f32 %v1894, %v2039
      %v2089 = vadd.f32 %v1895, %v2042
      %v2090 = vadd.f32 %v1896, %v2045
      %v2091 = vadd.f32 %v1897, %v2048
      %v2092 = vadd.f32 %v1898, %v2051
      %v2093 = vadd.f32 %v1899, %v2054
      %v2094 = vadd.f32 %v1900, %v2057
      %v2095 = vadd.f32 %v1901, %v2060
      %v2096 = vadd.f32 %v1902, %v2063
      %2097 = vst [vmem:[%s180] sm:$0xff] %v2065
      %2098 = vst [vmem:[%s180 + $0x8] sm:$0xff] %v2066
      %2099 = vst [vmem:[%s180 + $0x10] sm:$0xff] %v2067
      %2100 = vst [vmem:[%s180 + $0x18] sm:$0xff] %v2068
      %2101 = vst [vmem:[%s180 + $0x20] sm:$0xff] %v2069
      %2102 = vst [vmem:[%s180 + $0x28] sm:$0xff] %v2070
      %2103 = vst [vmem:[%s180 + $0x30] sm:$0xff] %v2071
      %2104 = vst [vmem:[%s180 + $0x38] sm:$0xff] %v2072
      %2105 = vst [vmem:[%s180 + $0x40] sm:$0xff] %v2073
      %2106 = vst [vmem:[%s180 + $0x48] sm:$0xff] %v2074
      %2107 = vst [vmem:[%s180 + $0x50] sm:$0xff] %v2075
      %2108 = vst [vmem:[%s180 + $0x58] sm:$0xff] %v2076
      %2109 = vst [vmem:[%s180 + $0x60] sm:$0xff] %v2077
      %2110 = vst [vmem:[%s180 + $0x68] sm:$0xff] %v2078
      %2111 = vst [vmem:[%s180 + $0x70] sm:$0xff] %v2079
      %2112 = vst [vmem:[%s180 + $0x78] sm:$0xff] %v2080
      %2113 = vst [vmem:[%s180 + $0x80] sm:$0xff] %v2081
      %2114 = vst [vmem:[%s180 + $0x88] sm:$0xff] %v2082
      %2115 = vst [vmem:[%s180 + $0x90] sm:$0xff] %v2083
      %2116 = vst [vmem:[%s180 + $0x98] sm:$0xff] %v2084
      %2117 = vst [vmem:[%s180 + $0xa0] sm:$0xff] %v2085
      %2118 = vst [vmem:[%s180 + $0xa8] sm:$0xff] %v2086
      %2119 = vst [vmem:[%s180 + $0xb0] sm:$0xff] %v2087
      %2120 = vst [vmem:[%s180 + $0xb8] sm:$0xff] %v2088
      %2121 = vst [vmem:[%s180 + $0xc0] sm:$0xff] %v2089
      %2122 = vst [vmem:[%s180 + $0xc8] sm:$0xff] %v2090
      %2123 = vst [vmem:[%s180 + $0xd0] sm:$0xff] %v2091
      %2124 = vst [vmem:[%s180 + $0xd8] sm:$0xff] %v2092
      %2125 = vst [vmem:[%s180 + $0xe0] sm:$0xff] %v2093
      %2126 = vst [vmem:[%s180 + $0xe8] sm:$0xff] %v2094
      %2127 = vst [vmem:[%s180 + $0xf0] sm:$0xff] %v2095
      %2128 = vst [vmem:[%s180 + $0xf8] sm:$0xff] %v2096
      %v2129 = vld [vmem:[%s180] sm:$0xff]
      %v2130 = vld [vmem:[%s180 + $0x8] sm:$0xff]
      %v2131 = vld [vmem:[%s180 + $0x10] sm:$0xff]
      %v2132 = vld [vmem:[%s180 + $0x18] sm:$0xff]
      %v2133 = vld [vmem:[%s180 + $0x20] sm:$0xff]
      %v2134 = vld [vmem:[%s180 + $0x28] sm:$0xff]
      %v2135 = vld [vmem:[%s180 + $0x30] sm:$0xff]
      %v2136 = vld [vmem:[%s180 + $0x38] sm:$0xff]
      %v2137 = vld [vmem:[%s180 + $0x40] sm:$0xff]
      %v2138 = vld [vmem:[%s180 + $0x48] sm:$0xff]
      %v2139 = vld [vmem:[%s180 + $0x50] sm:$0xff]
      %v2140 = vld [vmem:[%s180 + $0x58] sm:$0xff]
      %v2141 = vld [vmem:[%s180 + $0x60] sm:$0xff]
      %v2142 = vld [vmem:[%s180 + $0x68] sm:$0xff]
      %v2143 = vld [vmem:[%s180 + $0x70] sm:$0xff]
      %v2144 = vld [vmem:[%s180 + $0x78] sm:$0xff]
      %v2145 = vld [vmem:[%s180 + $0x80] sm:$0xff]
      %v2146 = vld [vmem:[%s180 + $0x88] sm:$0xff]
      %v2147 = vld [vmem:[%s180 + $0x90] sm:$0xff]
      %v2148 = vld [vmem:[%s180 + $0x98] sm:$0xff]
      %v2149 = vld [vmem:[%s180 + $0xa0] sm:$0xff]
      %v2150 = vld [vmem:[%s180 + $0xa8] sm:$0xff]
      %v2151 = vld [vmem:[%s180 + $0xb0] sm:$0xff]
      %v2152 = vld [vmem:[%s180 + $0xb8] sm:$0xff]
      %v2153 = vld [vmem:[%s180 + $0xc0] sm:$0xff]
      %v2154 = vld [vmem:[%s180 + $0xc8] sm:$0xff]
      %v2155 = vld [vmem:[%s180 + $0xd0] sm:$0xff]
      %v2156 = vld [vmem:[%s180 + $0xd8] sm:$0xff]
      %v2157 = vld [vmem:[%s180 + $0xe0] sm:$0xff]
      %v2158 = vld [vmem:[%s180 + $0xe8] sm:$0xff]
      %v2159 = vld [vmem:[%s180 + $0xf0] sm:$0xff]
      %v2160 = vld [vmem:[%s180 + $0xf8] sm:$0xff]
      %v2161 = vld [vmem:[#allocation2 + $0x25] sm:$0xff]
      %v2162 = vld [vmem:[#allocation2 + $0x2d] sm:$0xff]
      %v2163 = vld [vmem:[#allocation2 + $0x35] sm:$0xff]
      %v2164 = vld [vmem:[#allocation2 + $0x3d] sm:$0xff]
      %v2165 = vld [vmem:[#allocation2 + $0x45] sm:$0xff]
      %v2166 = vld [vmem:[#allocation2 + $0x4d] sm:$0xff]
      %v2167 = vld [vmem:[#allocation2 + $0x55] sm:$0xff]
      %v2168 = vld [vmem:[#allocation2 + $0x5d] sm:$0xff]
      %v2169 = vld [vmem:[#allocation2 + $0x65] sm:$0xff]
      %v2170 = vld [vmem:[#allocation2 + $0x6d] sm:$0xff]
      %v2171 = vld [vmem:[#allocation2 + $0x75] sm:$0xff]
      %v2172 = vld [vmem:[#allocation2 + $0x7d] sm:$0xff]
      %v2173 = vld [vmem:[#allocation2 + $0x85] sm:$0xff]
      %v2174 = vld [vmem:[#allocation2 + $0x8d] sm:$0xff]
      %v2175 = vld [vmem:[#allocation2 + $0x95] sm:$0xff]
      %v2176 = vld [vmem:[#allocation2 + $0x9d] sm:$0xff]
      %v2177 = vld [vmem:[#allocation2 + $0xa5] sm:$0xff]
      %v2178 = vld [vmem:[#allocation2 + $0xad] sm:$0xff]
      %v2179 = vld [vmem:[#allocation2 + $0xb5] sm:$0xff]
      %v2180 = vld [vmem:[#allocation2 + $0xbd] sm:$0xff]
      %v2181 = vld [vmem:[#allocation2 + $0xc5] sm:$0xff]
      %v2182 = vld [vmem:[#allocation2 + $0xcd] sm:$0xff]
      %v2183 = vld [vmem:[#allocation2 + $0xd5] sm:$0xff]
      %v2184 = vld [vmem:[#allocation2 + $0xdd] sm:$0xff]
      %v2185 = vld [vmem:[#allocation2 + $0xe5] sm:$0xff]
      %v2186 = vld [vmem:[#allocation2 + $0xed] sm:$0xff]
      %v2187 = vld [vmem:[#allocation2 + $0xf5] sm:$0xff]
      %v2188 = vld [vmem:[#allocation2 + $0xfd] sm:$0xff]
      %v2189 = vld [vmem:[#allocation2 + $0x105] sm:$0xff]
      %v2190 = vld [vmem:[#allocation2 + $0x10d] sm:$0xff]
      %v2191 = vld [vmem:[#allocation2 + $0x115] sm:$0xff]
      %v2192 = vld [vmem:[#allocation2 + $0x11d] sm:$0xff]
      %s2193 = scalar_lea.vmem %s1, 896
      %v2194 = vld [vmem:[%s2193] sm:$0xff]
      %v2195 = vld [vmem:[%s2193 + $0x8] sm:$0xff]
      %v2196 = vld [vmem:[%s2193 + $0x10] sm:$0xff]
      %v2197 = vld [vmem:[%s2193 + $0x18] sm:$0xff]
      %v2198 = vld [vmem:[%s2193 + $0x20] sm:$0xff]
      %v2199 = vld [vmem:[%s2193 + $0x28] sm:$0xff]
      %v2200 = vld [vmem:[%s2193 + $0x30] sm:$0xff]
      %v2201 = vld [vmem:[%s2193 + $0x38] sm:$0xff]
      %v2202 = vld [vmem:[%s2193 + $0x40] sm:$0xff]
      %v2203 = vld [vmem:[%s2193 + $0x48] sm:$0xff]
      %v2204 = vld [vmem:[%s2193 + $0x50] sm:$0xff]
      %v2205 = vld [vmem:[%s2193 + $0x58] sm:$0xff]
      %v2206 = vld [vmem:[%s2193 + $0x60] sm:$0xff]
      %v2207 = vld [vmem:[%s2193 + $0x68] sm:$0xff]
      %v2208 = vld [vmem:[%s2193 + $0x70] sm:$0xff]
      %v2209 = vld [vmem:[%s2193 + $0x78] sm:$0xff]
      %2210 = vmatpush.msra.mxu0 %v2209
      %2211 = vmatpush.msra.mxu0 %v2208
      %2212 = vmatpush.msra.mxu0 %v2207
      %2213 = vmatpush.msra.mxu0 %v2206
      %2214 = vmatpush.msra.mxu0 %v2205
      %2215 = vmatpush.msra.mxu0 %v2204
      %2216 = vmatpush.msra.mxu0 %v2203
      %2217 = vmatpush.msra.mxu0 %v2202
      %2218 = vmatpush.msra.mxu0 %v2201
      %2219 = vmatpush.msra.mxu0 %v2200
      %2220 = vmatpush.msra.mxu0 %v2199
      %2221 = vmatpush.msra.mxu0 %v2198
      %2222 = vmatpush.msra.mxu0 %v2197
      %2223 = vmatpush.msra.mxu0 %v2196
      %2224 = vmatpush.msra.mxu0 %v2195
      %2225 = vmatpush.msra.mxu0 %v2194
      %2226 = vmatmul.f32.gmra.mxu0 %v2161
      %v2227 = vpop.f32.mrf.mxu0
      %v2228 = vadd.f32 0.0, %v2227
      %2229 = vmatmul.f32.gmra.mxu0 %v2162
      %v2230 = vpop.f32.mrf.mxu0
      %v2231 = vadd.f32 0.0, %v2230
      %2232 = vmatmul.f32.gmra.mxu0 %v2163
      %v2233 = vpop.f32.mrf.mxu0
      %v2234 = vadd.f32 0.0, %v2233
      %2235 = vmatmul.f32.gmra.mxu0 %v2164
      %v2236 = vpop.f32.mrf.mxu0
      %v2237 = vadd.f32 0.0, %v2236
      %2238 = vmatmul.f32.gmra.mxu0 %v2165
      %v2239 = vpop.f32.mrf.mxu0
      %v2240 = vadd.f32 0.0, %v2239
      %2241 = vmatmul.f32.gmra.mxu0 %v2166
      %v2242 = vpop.f32.mrf.mxu0
      %v2243 = vadd.f32 0.0, %v2242
      %2244 = vmatmul.f32.gmra.mxu0 %v2167
      %v2245 = vpop.f32.mrf.mxu0
      %v2246 = vadd.f32 0.0, %v2245
      %2247 = vmatmul.f32.gmra.mxu0 %v2168
      %v2248 = vpop.f32.mrf.mxu0
      %v2249 = vadd.f32 0.0, %v2248
      %2250 = vmatmul.f32.gmra.mxu0 %v2169
      %v2251 = vpop.f32.mrf.mxu0
      %v2252 = vadd.f32 0.0, %v2251
      %2253 = vmatmul.f32.gmra.mxu0 %v2170
      %v2254 = vpop.f32.mrf.mxu0
      %v2255 = vadd.f32 0.0, %v2254
      %2256 = vmatmul.f32.gmra.mxu0 %v2171
      %v2257 = vpop.f32.mrf.mxu0
      %v2258 = vadd.f32 0.0, %v2257
      %2259 = vmatmul.f32.gmra.mxu0 %v2172
      %v2260 = vpop.f32.mrf.mxu0
      %v2261 = vadd.f32 0.0, %v2260
      %2262 = vmatmul.f32.gmra.mxu0 %v2173
      %v2263 = vpop.f32.mrf.mxu0
      %v2264 = vadd.f32 0.0, %v2263
      %2265 = vmatmul.f32.gmra.mxu0 %v2174
      %v2266 = vpop.f32.mrf.mxu0
      %v2267 = vadd.f32 0.0, %v2266
      %2268 = vmatmul.f32.gmra.mxu0 %v2175
      %v2269 = vpop.f32.mrf.mxu0
      %v2270 = vadd.f32 0.0, %v2269
      %2271 = vmatmul.f32.gmra.mxu0 %v2176
      %v2272 = vpop.f32.mrf.mxu0
      %v2273 = vadd.f32 0.0, %v2272
      %2274 = vmatmul.f32.gmra.mxu0 %v2177
      %v2275 = vpop.f32.mrf.mxu0
      %v2276 = vadd.f32 0.0, %v2275
      %2277 = vmatmul.f32.gmra.mxu0 %v2178
      %v2278 = vpop.f32.mrf.mxu0
      %v2279 = vadd.f32 0.0, %v2278
      %2280 = vmatmul.f32.gmra.mxu0 %v2179
      %v2281 = vpop.f32.mrf.mxu0
      %v2282 = vadd.f32 0.0, %v2281
      %2283 = vmatmul.f32.gmra.mxu0 %v2180
      %v2284 = vpop.f32.mrf.mxu0
      %v2285 = vadd.f32 0.0, %v2284
      %2286 = vmatmul.f32.gmra.mxu0 %v2181
      %v2287 = vpop.f32.mrf.mxu0
      %v2288 = vadd.f32 0.0, %v2287
      %2289 = vmatmul.f32.gmra.mxu0 %v2182
      %v2290 = vpop.f32.mrf.mxu0
      %v2291 = vadd.f32 0.0, %v2290
      %2292 = vmatmul.f32.gmra.mxu0 %v2183
      %v2293 = vpop.f32.mrf.mxu0
      %v2294 = vadd.f32 0.0, %v2293
      %2295 = vmatmul.f32.gmra.mxu0 %v2184
      %v2296 = vpop.f32.mrf.mxu0
      %v2297 = vadd.f32 0.0, %v2296
      %2298 = vmatmul.f32.gmra.mxu0 %v2185
      %v2299 = vpop.f32.mrf.mxu0
      %v2300 = vadd.f32 0.0, %v2299
      %2301 = vmatmul.f32.gmra.mxu0 %v2186
      %v2302 = vpop.f32.mrf.mxu0
      %v2303 = vadd.f32 0.0, %v2302
      %2304 = vmatmul.f32.gmra.mxu0 %v2187
      %v2305 = vpop.f32.mrf.mxu0
      %v2306 = vadd.f32 0.0, %v2305
      %2307 = vmatmul.f32.gmra.mxu0 %v2188
      %v2308 = vpop.f32.mrf.mxu0
      %v2309 = vadd.f32 0.0, %v2308
      %2310 = vmatmul.f32.gmra.mxu0 %v2189
      %v2311 = vpop.f32.mrf.mxu0
      %v2312 = vadd.f32 0.0, %v2311
      %2313 = vmatmul.f32.gmra.mxu0 %v2190
      %v2314 = vpop.f32.mrf.mxu0
      %v2315 = vadd.f32 0.0, %v2314
      %2316 = vmatmul.f32.gmra.mxu0 %v2191
      %v2317 = vpop.f32.mrf.mxu0
      %v2318 = vadd.f32 0.0, %v2317
      %2319 = vmatmul.f32.gmra.mxu0 %v2192
      %v2320 = vpop.f32.mrf.mxu0
      %v2321 = vadd.f32 0.0, %v2320
      %2322 = vdwg.mxu0
      %v2323 = vadd.f32 %v2129, %v2228
      %v2324 = vadd.f32 %v2130, %v2231
      %v2325 = vadd.f32 %v2131, %v2234
      %v2326 = vadd.f32 %v2132, %v2237
      %v2327 = vadd.f32 %v2133, %v2240
      %v2328 = vadd.f32 %v2134, %v2243
      %v2329 = vadd.f32 %v2135, %v2246
      %v2330 = vadd.f32 %v2136, %v2249
      %v2331 = vadd.f32 %v2137, %v2252
      %v2332 = vadd.f32 %v2138, %v2255
      %v2333 = vadd.f32 %v2139, %v2258
      %v2334 = vadd.f32 %v2140, %v2261
      %v2335 = vadd.f32 %v2141, %v2264
      %v2336 = vadd.f32 %v2142, %v2267
      %v2337 = vadd.f32 %v2143, %v2270
      %v2338 = vadd.f32 %v2144, %v2273
      %v2339 = vadd.f32 %v2145, %v2276
      %v2340 = vadd.f32 %v2146, %v2279
      %v2341 = vadd.f32 %v2147, %v2282
      %v2342 = vadd.f32 %v2148, %v2285
      %v2343 = vadd.f32 %v2149, %v2288
      %v2344 = vadd.f32 %v2150, %v2291
      %v2345 = vadd.f32 %v2151, %v2294
      %v2346 = vadd.f32 %v2152, %v2297
      %v2347 = vadd.f32 %v2153, %v2300
      %v2348 = vadd.f32 %v2154, %v2303
      %v2349 = vadd.f32 %v2155, %v2306
      %v2350 = vadd.f32 %v2156, %v2309
      %v2351 = vadd.f32 %v2157, %v2312
      %v2352 = vadd.f32 %v2158, %v2315
      %v2353 = vadd.f32 %v2159, %v2318
      %v2354 = vadd.f32 %v2160, %v2321
      %2355 = vst [vmem:[%s180] sm:$0xff] %v2323
      %2356 = vst [vmem:[%s180 + $0x8] sm:$0xff] %v2324
      %2357 = vst [vmem:[%s180 + $0x10] sm:$0xff] %v2325
      %2358 = vst [vmem:[%s180 + $0x18] sm:$0xff] %v2326
      %2359 = vst [vmem:[%s180 + $0x20] sm:$0xff] %v2327
      %2360 = vst [vmem:[%s180 + $0x28] sm:$0xff] %v2328
      %2361 = vst [vmem:[%s180 + $0x30] sm:$0xff] %v2329
      %2362 = vst [vmem:[%s180 + $0x38] sm:$0xff] %v2330
      %2363 = vst [vmem:[%s180 + $0x40] sm:$0xff] %v2331
      %2364 = vst [vmem:[%s180 + $0x48] sm:$0xff] %v2332
      %2365 = vst [vmem:[%s180 + $0x50] sm:$0xff] %v2333
      %2366 = vst [vmem:[%s180 + $0x58] sm:$0xff] %v2334
      %2367 = vst [vmem:[%s180 + $0x60] sm:$0xff] %v2335
      %2368 = vst [vmem:[%s180 + $0x68] sm:$0xff] %v2336
      %2369 = vst [vmem:[%s180 + $0x70] sm:$0xff] %v2337
      %2370 = vst [vmem:[%s180 + $0x78] sm:$0xff] %v2338
      %2371 = vst [vmem:[%s180 + $0x80] sm:$0xff] %v2339
      %2372 = vst [vmem:[%s180 + $0x88] sm:$0xff] %v2340
      %2373 = vst [vmem:[%s180 + $0x90] sm:$0xff] %v2341
      %2374 = vst [vmem:[%s180 + $0x98] sm:$0xff] %v2342
      %2375 = vst [vmem:[%s180 + $0xa0] sm:$0xff] %v2343
      %2376 = vst [vmem:[%s180 + $0xa8] sm:$0xff] %v2344
      %2377 = vst [vmem:[%s180 + $0xb0] sm:$0xff] %v2345
      %2378 = vst [vmem:[%s180 + $0xb8] sm:$0xff] %v2346
      %2379 = vst [vmem:[%s180 + $0xc0] sm:$0xff] %v2347
      %2380 = vst [vmem:[%s180 + $0xc8] sm:$0xff] %v2348
      %2381 = vst [vmem:[%s180 + $0xd0] sm:$0xff] %v2349
      %2382 = vst [vmem:[%s180 + $0xd8] sm:$0xff] %v2350
      %2383 = vst [vmem:[%s180 + $0xe0] sm:$0xff] %v2351
      %2384 = vst [vmem:[%s180 + $0xe8] sm:$0xff] %v2352
      %2385 = vst [vmem:[%s180 + $0xf0] sm:$0xff] %v2353
      %2386 = vst [vmem:[%s180 + $0xf8] sm:$0xff] %v2354
      %v2387 = vld [vmem:[%s180] sm:$0xff]
      %v2388 = vld [vmem:[%s180 + $0x8] sm:$0xff]
      %v2389 = vld [vmem:[%s180 + $0x10] sm:$0xff]
      %v2390 = vld [vmem:[%s180 + $0x18] sm:$0xff]
      %v2391 = vld [vmem:[%s180 + $0x20] sm:$0xff]
      %v2392 = vld [vmem:[%s180 + $0x28] sm:$0xff]
      %v2393 = vld [vmem:[%s180 + $0x30] sm:$0xff]
      %v2394 = vld [vmem:[%s180 + $0x38] sm:$0xff]
      %v2395 = vld [vmem:[%s180 + $0x40] sm:$0xff]
      %v2396 = vld [vmem:[%s180 + $0x48] sm:$0xff]
      %v2397 = vld [vmem:[%s180 + $0x50] sm:$0xff]
      %v2398 = vld [vmem:[%s180 + $0x58] sm:$0xff]
      %v2399 = vld [vmem:[%s180 + $0x60] sm:$0xff]
      %v2400 = vld [vmem:[%s180 + $0x68] sm:$0xff]
      %v2401 = vld [vmem:[%s180 + $0x70] sm:$0xff]
      %v2402 = vld [vmem:[%s180 + $0x78] sm:$0xff]
      %v2403 = vld [vmem:[%s180 + $0x80] sm:$0xff]
      %v2404 = vld [vmem:[%s180 + $0x88] sm:$0xff]
      %v2405 = vld [vmem:[%s180 + $0x90] sm:$0xff]
      %v2406 = vld [vmem:[%s180 + $0x98] sm:$0xff]
      %v2407 = vld [vmem:[%s180 + $0xa0] sm:$0xff]
      %v2408 = vld [vmem:[%s180 + $0xa8] sm:$0xff]
      %v2409 = vld [vmem:[%s180 + $0xb0] sm:$0xff]
      %v2410 = vld [vmem:[%s180 + $0xb8] sm:$0xff]
      %v2411 = vld [vmem:[%s180 + $0xc0] sm:$0xff]
      %v2412 = vld [vmem:[%s180 + $0xc8] sm:$0xff]
      %v2413 = vld [vmem:[%s180 + $0xd0] sm:$0xff]
      %v2414 = vld [vmem:[%s180 + $0xd8] sm:$0xff]
      %v2415 = vld [vmem:[%s180 + $0xe0] sm:$0xff]
      %v2416 = vld [vmem:[%s180 + $0xe8] sm:$0xff]
      %v2417 = vld [vmem:[%s180 + $0xf0] sm:$0xff]
      %v2418 = vld [vmem:[%s180 + $0xf8] sm:$0xff]
      %v2419 = vld [vmem:[#allocation2 + $0x26] sm:$0xff]
      %v2420 = vld [vmem:[#allocation2 + $0x2e] sm:$0xff]
      %v2421 = vld [vmem:[#allocation2 + $0x36] sm:$0xff]
      %v2422 = vld [vmem:[#allocation2 + $0x3e] sm:$0xff]
      %v2423 = vld [vmem:[#allocation2 + $0x46] sm:$0xff]
      %v2424 = vld [vmem:[#allocation2 + $0x4e] sm:$0xff]
      %v2425 = vld [vmem:[#allocation2 + $0x56] sm:$0xff]
      %v2426 = vld [vmem:[#allocation2 + $0x5e] sm:$0xff]
      %v2427 = vld [vmem:[#allocation2 + $0x66] sm:$0xff]
      %v2428 = vld [vmem:[#allocation2 + $0x6e] sm:$0xff]
      %v2429 = vld [vmem:[#allocation2 + $0x76] sm:$0xff]
      %v2430 = vld [vmem:[#allocation2 + $0x7e] sm:$0xff]
      %v2431 = vld [vmem:[#allocation2 + $0x86] sm:$0xff]
      %v2432 = vld [vmem:[#allocation2 + $0x8e] sm:$0xff]
      %v2433 = vld [vmem:[#allocation2 + $0x96] sm:$0xff]
      %v2434 = vld [vmem:[#allocation2 + $0x9e] sm:$0xff]
      %v2435 = vld [vmem:[#allocation2 + $0xa6] sm:$0xff]
      %v2436 = vld [vmem:[#allocation2 + $0xae] sm:$0xff]
      %v2437 = vld [vmem:[#allocation2 + $0xb6] sm:$0xff]
      %v2438 = vld [vmem:[#allocation2 + $0xbe] sm:$0xff]
      %v2439 = vld [vmem:[#allocation2 + $0xc6] sm:$0xff]
      %v2440 = vld [vmem:[#allocation2 + $0xce] sm:$0xff]
      %v2441 = vld [vmem:[#allocation2 + $0xd6] sm:$0xff]
      %v2442 = vld [vmem:[#allocation2 + $0xde] sm:$0xff]
      %v2443 = vld [vmem:[#allocation2 + $0xe6] sm:$0xff]
      %v2444 = vld [vmem:[#allocation2 + $0xee] sm:$0xff]
      %v2445 = vld [vmem:[#allocation2 + $0xf6] sm:$0xff]
      %v2446 = vld [vmem:[#allocation2 + $0xfe] sm:$0xff]
      %v2447 = vld [vmem:[#allocation2 + $0x106] sm:$0xff]
      %v2448 = vld [vmem:[#allocation2 + $0x10e] sm:$0xff]
      %v2449 = vld [vmem:[#allocation2 + $0x116] sm:$0xff]
      %v2450 = vld [vmem:[#allocation2 + $0x11e] sm:$0xff]
      %s2451 = scalar_lea.vmem %s1, 1024
      %v2452 = vld [vmem:[%s2451] sm:$0xff]
      %v2453 = vld [vmem:[%s2451 + $0x8] sm:$0xff]
      %v2454 = vld [vmem:[%s2451 + $0x10] sm:$0xff]
      %v2455 = vld [vmem:[%s2451 + $0x18] sm:$0xff]
      %v2456 = vld [vmem:[%s2451 + $0x20] sm:$0xff]
      %v2457 = vld [vmem:[%s2451 + $0x28] sm:$0xff]
      %v2458 = vld [vmem:[%s2451 + $0x30] sm:$0xff]
      %v2459 = vld [vmem:[%s2451 + $0x38] sm:$0xff]
      %v2460 = vld [vmem:[%s2451 + $0x40] sm:$0xff]
      %v2461 = vld [vmem:[%s2451 + $0x48] sm:$0xff]
      %v2462 = vld [vmem:[%s2451 + $0x50] sm:$0xff]
      %v2463 = vld [vmem:[%s2451 + $0x58] sm:$0xff]
      %v2464 = vld [vmem:[%s2451 + $0x60] sm:$0xff]
      %v2465 = vld [vmem:[%s2451 + $0x68] sm:$0xff]
      %v2466 = vld [vmem:[%s2451 + $0x70] sm:$0xff]
      %v2467 = vld [vmem:[%s2451 + $0x78] sm:$0xff]
      %2468 = vmatpush.msra.mxu0 %v2467
      %2469 = vmatpush.msra.mxu0 %v2466
      %2470 = vmatpush.msra.mxu0 %v2465
      %2471 = vmatpush.msra.mxu0 %v2464
      %2472 = vmatpush.msra.mxu0 %v2463
      %2473 = vmatpush.msra.mxu0 %v2462
      %2474 = vmatpush.msra.mxu0 %v2461
      %2475 = vmatpush.msra.mxu0 %v2460
      %2476 = vmatpush.msra.mxu0 %v2459
      %2477 = vmatpush.msra.mxu0 %v2458
      %2478 = vmatpush.msra.mxu0 %v2457
      %2479 = vmatpush.msra.mxu0 %v2456
      %2480 = vmatpush.msra.mxu0 %v2455
      %2481 = vmatpush.msra.mxu0 %v2454
      %2482 = vmatpush.msra.mxu0 %v2453
      %2483 = vmatpush.msra.mxu0 %v2452
      %2484 = vmatmul.f32.gmra.mxu0 %v2419
      %v2485 = vpop.f32.mrf.mxu0
      %v2486 = vadd.f32 0.0, %v2485
      %2487 = vmatmul.f32.gmra.mxu0 %v2420
      %v2488 = vpop.f32.mrf.mxu0
      %v2489 = vadd.f32 0.0, %v2488
      %2490 = vmatmul.f32.gmra.mxu0 %v2421
      %v2491 = vpop.f32.mrf.mxu0
      %v2492 = vadd.f32 0.0, %v2491
      %2493 = vmatmul.f32.gmra.mxu0 %v2422
      %v2494 = vpop.f32.mrf.mxu0
      %v2495 = vadd.f32 0.0, %v2494
      %2496 = vmatmul.f32.gmra.mxu0 %v2423
      %v2497 = vpop.f32.mrf.mxu0
      %v2498 = vadd.f32 0.0, %v2497
      %2499 = vmatmul.f32.gmra.mxu0 %v2424
      %v2500 = vpop.f32.mrf.mxu0
      %v2501 = vadd.f32 0.0, %v2500
      %2502 = vmatmul.f32.gmra.mxu0 %v2425
      %v2503 = vpop.f32.mrf.mxu0
      %v2504 = vadd.f32 0.0, %v2503
      %2505 = vmatmul.f32.gmra.mxu0 %v2426
      %v2506 = vpop.f32.mrf.mxu0
      %v2507 = vadd.f32 0.0, %v2506
      %2508 = vmatmul.f32.gmra.mxu0 %v2427
      %v2509 = vpop.f32.mrf.mxu0
      %v2510 = vadd.f32 0.0, %v2509
      %2511 = vmatmul.f32.gmra.mxu0 %v2428
      %v2512 = vpop.f32.mrf.mxu0
      %v2513 = vadd.f32 0.0, %v2512
      %2514 = vmatmul.f32.gmra.mxu0 %v2429
      %v2515 = vpop.f32.mrf.mxu0
      %v2516 = vadd.f32 0.0, %v2515
      %2517 = vmatmul.f32.gmra.mxu0 %v2430
      %v2518 = vpop.f32.mrf.mxu0
      %v2519 = vadd.f32 0.0, %v2518
      %2520 = vmatmul.f32.gmra.mxu0 %v2431
      %v2521 = vpop.f32.mrf.mxu0
      %v2522 = vadd.f32 0.0, %v2521
      %2523 = vmatmul.f32.gmra.mxu0 %v2432
      %v2524 = vpop.f32.mrf.mxu0
      %v2525 = vadd.f32 0.0, %v2524
      %2526 = vmatmul.f32.gmra.mxu0 %v2433
      %v2527 = vpop.f32.mrf.mxu0
      %v2528 = vadd.f32 0.0, %v2527
      %2529 = vmatmul.f32.gmra.mxu0 %v2434
      %v2530 = vpop.f32.mrf.mxu0
      %v2531 = vadd.f32 0.0, %v2530
      %2532 = vmatmul.f32.gmra.mxu0 %v2435
      %v2533 = vpop.f32.mrf.mxu0
      %v2534 = vadd.f32 0.0, %v2533
      %2535 = vmatmul.f32.gmra.mxu0 %v2436
      %v2536 = vpop.f32.mrf.mxu0
      %v2537 = vadd.f32 0.0, %v2536
      %2538 = vmatmul.f32.gmra.mxu0 %v2437
      %v2539 = vpop.f32.mrf.mxu0
      %v2540 = vadd.f32 0.0, %v2539
      %2541 = vmatmul.f32.gmra.mxu0 %v2438
      %v2542 = vpop.f32.mrf.mxu0
      %v2543 = vadd.f32 0.0, %v2542
      %2544 = vmatmul.f32.gmra.mxu0 %v2439
      %v2545 = vpop.f32.mrf.mxu0
      %v2546 = vadd.f32 0.0, %v2545
      %2547 = vmatmul.f32.gmra.mxu0 %v2440
      %v2548 = vpop.f32.mrf.mxu0
      %v2549 = vadd.f32 0.0, %v2548
      %2550 = vmatmul.f32.gmra.mxu0 %v2441
      %v2551 = vpop.f32.mrf.mxu0
      %v2552 = vadd.f32 0.0, %v2551
      %2553 = vmatmul.f32.gmra.mxu0 %v2442
      %v2554 = vpop.f32.mrf.mxu0
      %v2555 = vadd.f32 0.0, %v2554
      %2556 = vmatmul.f32.gmra.mxu0 %v2443
      %v2557 = vpop.f32.mrf.mxu0
      %v2558 = vadd.f32 0.0, %v2557
      %2559 = vmatmul.f32.gmra.mxu0 %v2444
      %v2560 = vpop.f32.mrf.mxu0
      %v2561 = vadd.f32 0.0, %v2560
      %2562 = vmatmul.f32.gmra.mxu0 %v2445
      %v2563 = vpop.f32.mrf.mxu0
      %v2564 = vadd.f32 0.0, %v2563
      %2565 = vmatmul.f32.gmra.mxu0 %v2446
      %v2566 = vpop.f32.mrf.mxu0
      %v2567 = vadd.f32 0.0, %v2566
      %2568 = vmatmul.f32.gmra.mxu0 %v2447
      %v2569 = vpop.f32.mrf.mxu0
      %v2570 = vadd.f32 0.0, %v2569
      %2571 = vmatmul.f32.gmra.mxu0 %v2448
      %v2572 = vpop.f32.mrf.mxu0
      %v2573 = vadd.f32 0.0, %v2572
      %2574 = vmatmul.f32.gmra.mxu0 %v2449
      %v2575 = vpop.f32.mrf.mxu0
      %v2576 = vadd.f32 0.0, %v2575
      %2577 = vmatmul.f32.gmra.mxu0 %v2450
      %v2578 = vpop.f32.mrf.mxu0
      %v2579 = vadd.f32 0.0, %v2578
      %2580 = vdwg.mxu0
      %v2581 = vadd.f32 %v2387, %v2486
      %v2582 = vadd.f32 %v2388, %v2489
      %v2583 = vadd.f32 %v2389, %v2492
      %v2584 = vadd.f32 %v2390, %v2495
      %v2585 = vadd.f32 %v2391, %v2498
      %v2586 = vadd.f32 %v2392, %v2501
      %v2587 = vadd.f32 %v2393, %v2504
      %v2588 = vadd.f32 %v2394, %v2507
      %v2589 = vadd.f32 %v2395, %v2510
      %v2590 = vadd.f32 %v2396, %v2513
      %v2591 = vadd.f32 %v2397, %v2516
      %v2592 = vadd.f32 %v2398, %v2519
      %v2593 = vadd.f32 %v2399, %v2522
      %v2594 = vadd.f32 %v2400, %v2525
      %v2595 = vadd.f32 %v2401, %v2528
      %v2596 = vadd.f32 %v2402, %v2531
      %v2597 = vadd.f32 %v2403, %v2534
      %v2598 = vadd.f32 %v2404, %v2537
      %v2599 = vadd.f32 %v2405, %v2540
      %v2600 = vadd.f32 %v2406, %v2543
      %v2601 = vadd.f32 %v2407, %v2546
      %v2602 = vadd.f32 %v2408, %v2549
      %v2603 = vadd.f32 %v2409, %v2552
      %v2604 = vadd.f32 %v2410, %v2555
      %v2605 = vadd.f32 %v2411, %v2558
      %v2606 = vadd.f32 %v2412, %v2561
      %v2607 = vadd.f32 %v2413, %v2564
      %v2608 = vadd.f32 %v2414, %v2567
      %v2609 = vadd.f32 %v2415, %v2570
      %v2610 = vadd.f32 %v2416, %v2573
      %v2611 = vadd.f32 %v2417, %v2576
      %v2612 = vadd.f32 %v2418, %v2579
      %2613 = vst [vmem:[%s180] sm:$0xff] %v2581
      %2614 = vst [vmem:[%s180 + $0x8] sm:$0xff] %v2582
      %2615 = vst [vmem:[%s180 + $0x10] sm:$0xff] %v2583
      %2616 = vst [vmem:[%s180 + $0x18] sm:$0xff] %v2584
      %2617 = vst [vmem:[%s180 + $0x20] sm:$0xff] %v2585
      %2618 = vst [vmem:[%s180 + $0x28] sm:$0xff] %v2586
      %2619 = vst [vmem:[%s180 + $0x30] sm:$0xff] %v2587
      %2620 = vst [vmem:[%s180 + $0x38] sm:$0xff] %v2588
      %2621 = vst [vmem:[%s180 + $0x40] sm:$0xff] %v2589
      %2622 = vst [vmem:[%s180 + $0x48] sm:$0xff] %v2590
      %2623 = vst [vmem:[%s180 + $0x50] sm:$0xff] %v2591
      %2624 = vst [vmem:[%s180 + $0x58] sm:$0xff] %v2592
      %2625 = vst [vmem:[%s180 + $0x60] sm:$0xff] %v2593
      %2626 = vst [vmem:[%s180 + $0x68] sm:$0xff] %v2594
      %2627 = vst [vmem:[%s180 + $0x70] sm:$0xff] %v2595
      %2628 = vst [vmem:[%s180 + $0x78] sm:$0xff] %v2596
      %2629 = vst [vmem:[%s180 + $0x80] sm:$0xff] %v2597
      %2630 = vst [vmem:[%s180 + $0x88] sm:$0xff] %v2598
      %2631 = vst [vmem:[%s180 + $0x90] sm:$0xff] %v2599
      %2632 = vst [vmem:[%s180 + $0x98] sm:$0xff] %v2600
      %2633 = vst [vmem:[%s180 + $0xa0] sm:$0xff] %v2601
      %2634 = vst [vmem:[%s180 + $0xa8] sm:$0xff] %v2602
      %2635 = vst [vmem:[%s180 + $0xb0] sm:$0xff] %v2603
      %2636 = vst [vmem:[%s180 + $0xb8] sm:$0xff] %v2604
      %2637 = vst [vmem:[%s180 + $0xc0] sm:$0xff] %v2605
      %2638 = vst [vmem:[%s180 + $0xc8] sm:$0xff] %v2606
      %2639 = vst [vmem:[%s180 + $0xd0] sm:$0xff] %v2607
      %2640 = vst [vmem:[%s180 + $0xd8] sm:$0xff] %v2608
      %2641 = vst [vmem:[%s180 + $0xe0] sm:$0xff] %v2609
      %2642 = vst [vmem:[%s180 + $0xe8] sm:$0xff] %v2610
      %2643 = vst [vmem:[%s180 + $0xf0] sm:$0xff] %v2611
      %2644 = vst [vmem:[%s180 + $0xf8] sm:$0xff] %v2612
      %v2645 = vld [vmem:[%s180] sm:$0xff]
      %v2646 = vld [vmem:[%s180 + $0x8] sm:$0xff]
      %v2647 = vld [vmem:[%s180 + $0x10] sm:$0xff]
      %v2648 = vld [vmem:[%s180 + $0x18] sm:$0xff]
      %v2649 = vld [vmem:[%s180 + $0x20] sm:$0xff]
      %v2650 = vld [vmem:[%s180 + $0x28] sm:$0xff]
      %v2651 = vld [vmem:[%s180 + $0x30] sm:$0xff]
      %v2652 = vld [vmem:[%s180 + $0x38] sm:$0xff]
      %v2653 = vld [vmem:[%s180 + $0x40] sm:$0xff]
      %v2654 = vld [vmem:[%s180 + $0x48] sm:$0xff]
      %v2655 = vld [vmem:[%s180 + $0x50] sm:$0xff]
      %v2656 = vld [vmem:[%s180 + $0x58] sm:$0xff]
      %v2657 = vld [vmem:[%s180 + $0x60] sm:$0xff]
      %v2658 = vld [vmem:[%s180 + $0x68] sm:$0xff]
      %v2659 = vld [vmem:[%s180 + $0x70] sm:$0xff]
      %v2660 = vld [vmem:[%s180 + $0x78] sm:$0xff]
      %v2661 = vld [vmem:[%s180 + $0x80] sm:$0xff]
      %v2662 = vld [vmem:[%s180 + $0x88] sm:$0xff]
      %v2663 = vld [vmem:[%s180 + $0x90] sm:$0xff]
      %v2664 = vld [vmem:[%s180 + $0x98] sm:$0xff]
      %v2665 = vld [vmem:[%s180 + $0xa0] sm:$0xff]
      %v2666 = vld [vmem:[%s180 + $0xa8] sm:$0xff]
      %v2667 = vld [vmem:[%s180 + $0xb0] sm:$0xff]
      %v2668 = vld [vmem:[%s180 + $0xb8] sm:$0xff]
      %v2669 = vld [vmem:[%s180 + $0xc0] sm:$0xff]
      %v2670 = vld [vmem:[%s180 + $0xc8] sm:$0xff]
      %v2671 = vld [vmem:[%s180 + $0xd0] sm:$0xff]
      %v2672 = vld [vmem:[%s180 + $0xd8] sm:$0xff]
      %v2673 = vld [vmem:[%s180 + $0xe0] sm:$0xff]
      %v2674 = vld [vmem:[%s180 + $0xe8] sm:$0xff]
      %v2675 = vld [vmem:[%s180 + $0xf0] sm:$0xff]
      %v2676 = vld [vmem:[%s180 + $0xf8] sm:$0xff]
      %v2677 = vld [vmem:[%s174] sm:$0xff]
      %v2678 = vld [vmem:[%s174 + $0x8] sm:$0xff]
      %v2679 = vld [vmem:[%s174 + $0x10] sm:$0xff]
      %v2680 = vld [vmem:[%s174 + $0x18] sm:$0xff]
      %v2681 = vld [vmem:[%s174 + $0x20] sm:$0xff]
      %v2682 = vld [vmem:[%s174 + $0x28] sm:$0xff]
      %v2683 = vld [vmem:[%s174 + $0x30] sm:$0xff]
      %v2684 = vld [vmem:[%s174 + $0x38] sm:$0xff]
      %v2685 = vld [vmem:[%s174 + $0x40] sm:$0xff]
      %v2686 = vld [vmem:[%s174 + $0x48] sm:$0xff]
      %v2687 = vld [vmem:[%s174 + $0x50] sm:$0xff]
      %v2688 = vld [vmem:[%s174 + $0x58] sm:$0xff]
      %v2689 = vld [vmem:[%s174 + $0x60] sm:$0xff]
      %v2690 = vld [vmem:[%s174 + $0x68] sm:$0xff]
      %v2691 = vld [vmem:[%s174 + $0x70] sm:$0xff]
      %v2692 = vld [vmem:[%s174 + $0x78] sm:$0xff]
      %v2693 = vld [vmem:[%s174 + $0x80] sm:$0xff]
      %v2694 = vld [vmem:[%s174 + $0x88] sm:$0xff]
      %v2695 = vld [vmem:[%s174 + $0x90] sm:$0xff]
      %v2696 = vld [vmem:[%s174 + $0x98] sm:$0xff]
      %v2697 = vld [vmem:[%s174 + $0xa0] sm:$0xff]
      %v2698 = vld [vmem:[%s174 + $0xa8] sm:$0xff]
      %v2699 = vld [vmem:[%s174 + $0xb0] sm:$0xff]
      %v2700 = vld [vmem:[%s174 + $0xb8] sm:$0xff]
      %v2701 = vld [vmem:[%s174 + $0xc0] sm:$0xff]
      %v2702 = vld [vmem:[%s174 + $0xc8] sm:$0xff]
      %v2703 = vld [vmem:[%s174 + $0xd0] sm:$0xff]
      %v2704 = vld [vmem:[%s174 + $0xd8] sm:$0xff]
      %v2705 = vld [vmem:[%s174 + $0xe0] sm:$0xff]
      %v2706 = vld [vmem:[%s174 + $0xe8] sm:$0xff]
      %v2707 = vld [vmem:[%s174 + $0xf0] sm:$0xff]
      %v2708 = vld [vmem:[%s174 + $0xf8] sm:$0xff]
      %2710 = vset.pattern.permute.xlu0 0
      %2711 = vperm.xlu0 %2710, %v2677
      %v2712 = vpop.permute.xlu0 %2711
      %2715 = vset.pattern.permute.xlu0 0
      %2716 = vperm.xlu0 %2715, %v2678
      %v2717 = vpop.permute.xlu0 %2716
      %2720 = vset.pattern.permute.xlu0 0
      %2721 = vperm.xlu0 %2720, %v2679
      %v2722 = vpop.permute.xlu0 %2721
      %2725 = vset.pattern.permute.xlu0 0
      %2726 = vperm.xlu0 %2725, %v2680
      %v2727 = vpop.permute.xlu0 %2726
      %2730 = vset.pattern.permute.xlu0 0
      %2731 = vperm.xlu0 %2730, %v2681
      %v2732 = vpop.permute.xlu0 %2731
      %2735 = vset.pattern.permute.xlu0 0
      %2736 = vperm.xlu0 %2735, %v2682
      %v2737 = vpop.permute.xlu0 %2736
      %2740 = vset.pattern.permute.xlu0 0
      %2741 = vperm.xlu0 %2740, %v2683
      %v2742 = vpop.permute.xlu0 %2741
      %2745 = vset.pattern.permute.xlu0 0
      %2746 = vperm.xlu0 %2745, %v2684
      %v2747 = vpop.permute.xlu0 %2746
      %2750 = vset.pattern.permute.xlu0 0
      %2751 = vperm.xlu0 %2750, %v2685
      %v2752 = vpop.permute.xlu0 %2751
      %2755 = vset.pattern.permute.xlu0 0
      %2756 = vperm.xlu0 %2755, %v2686
      %v2757 = vpop.permute.xlu0 %2756
      %2760 = vset.pattern.permute.xlu0 0
      %2761 = vperm.xlu0 %2760, %v2687
      %v2762 = vpop.permute.xlu0 %2761
      %2765 = vset.pattern.permute.xlu0 0
      %2766 = vperm.xlu0 %2765, %v2688
      %v2767 = vpop.permute.xlu0 %2766
      %2770 = vset.pattern.permute.xlu0 0
      %2771 = vperm.xlu0 %2770, %v2689
      %v2772 = vpop.permute.xlu0 %2771
      %2775 = vset.pattern.permute.xlu0 0
      %2776 = vperm.xlu0 %2775, %v2690
      %v2777 = vpop.permute.xlu0 %2776
      %2780 = vset.pattern.permute.xlu0 0
      %2781 = vperm.xlu0 %2780, %v2691
      %v2782 = vpop.permute.xlu0 %2781
      %2785 = vset.pattern.permute.xlu0 0
      %2786 = vperm.xlu0 %2785, %v2692
      %v2787 = vpop.permute.xlu0 %2786
      %2790 = vset.pattern.permute.xlu0 0
      %2791 = vperm.xlu0 %2790, %v2693
      %v2792 = vpop.permute.xlu0 %2791
      %2795 = vset.pattern.permute.xlu0 0
      %2796 = vperm.xlu0 %2795, %v2694
      %v2797 = vpop.permute.xlu0 %2796
      %2800 = vset.pattern.permute.xlu0 0
      %2801 = vperm.xlu0 %2800, %v2695
      %v2802 = vpop.permute.xlu0 %2801
      %2805 = vset.pattern.permute.xlu0 0
      %2806 = vperm.xlu0 %2805, %v2696
      %v2807 = vpop.permute.xlu0 %2806
      %2810 = vset.pattern.permute.xlu0 0
      %2811 = vperm.xlu0 %2810, %v2697
      %v2812 = vpop.permute.xlu0 %2811
      %2815 = vset.pattern.permute.xlu0 0
      %2816 = vperm.xlu0 %2815, %v2698
      %v2817 = vpop.permute.xlu0 %2816
      %2820 = vset.pattern.permute.xlu0 0
      %2821 = vperm.xlu0 %2820, %v2699
      %v2822 = vpop.permute.xlu0 %2821
      %2825 = vset.pattern.permute.xlu0 0
      %2826 = vperm.xlu0 %2825, %v2700
      %v2827 = vpop.permute.xlu0 %2826
      %2830 = vset.pattern.permute.xlu0 0
      %2831 = vperm.xlu0 %2830, %v2701
      %v2832 = vpop.permute.xlu0 %2831
      %2835 = vset.pattern.permute.xlu0 0
      %2836 = vperm.xlu0 %2835, %v2702
      %v2837 = vpop.permute.xlu0 %2836
      %2840 = vset.pattern.permute.xlu0 0
      %2841 = vperm.xlu0 %2840, %v2703
      %v2842 = vpop.permute.xlu0 %2841
      %2845 = vset.pattern.permute.xlu0 0
      %2846 = vperm.xlu0 %2845, %v2704
      %v2847 = vpop.permute.xlu0 %2846
      %2850 = vset.pattern.permute.xlu0 0
      %2851 = vperm.xlu0 %2850, %v2705
      %v2852 = vpop.permute.xlu0 %2851
      %2855 = vset.pattern.permute.xlu0 0
      %2856 = vperm.xlu0 %2855, %v2706
      %v2857 = vpop.permute.xlu0 %2856
      %2860 = vset.pattern.permute.xlu0 0
      %2861 = vperm.xlu0 %2860, %v2707
      %v2862 = vpop.permute.xlu0 %2861
      %2865 = vset.pattern.permute.xlu0 0
      %2866 = vperm.xlu0 %2865, %v2708
      %v2867 = vpop.permute.xlu0 %2866
      %v2869 = vmul.f32 %v2645, %v2712
      %v2870 = vmul.f32 %v2646, %v2717
      %v2871 = vmul.f32 %v2647, %v2722
      %v2872 = vmul.f32 %v2648, %v2727
      %v2873 = vmul.f32 %v2649, %v2732
      %v2874 = vmul.f32 %v2650, %v2737
      %v2875 = vmul.f32 %v2651, %v2742
      %v2876 = vmul.f32 %v2652, %v2747
      %v2877 = vmul.f32 %v2653, %v2752
      %v2878 = vmul.f32 %v2654, %v2757
      %v2879 = vmul.f32 %v2655, %v2762
      %v2880 = vmul.f32 %v2656, %v2767
      %v2881 = vmul.f32 %v2657, %v2772
      %v2882 = vmul.f32 %v2658, %v2777
      %v2883 = vmul.f32 %v2659, %v2782
      %v2884 = vmul.f32 %v2660, %v2787
      %v2885 = vmul.f32 %v2661, %v2792
      %v2886 = vmul.f32 %v2662, %v2797
      %v2887 = vmul.f32 %v2663, %v2802
      %v2888 = vmul.f32 %v2664, %v2807
      %v2889 = vmul.f32 %v2665, %v2812
      %v2890 = vmul.f32 %v2666, %v2817
      %v2891 = vmul.f32 %v2667, %v2822
      %v2892 = vmul.f32 %v2668, %v2827
      %v2893 = vmul.f32 %v2669, %v2832
      %v2894 = vmul.f32 %v2670, %v2837
      %v2895 = vmul.f32 %v2671, %v2842
      %v2896 = vmul.f32 %v2672, %v2847
      %v2897 = vmul.f32 %v2673, %v2852
      %v2898 = vmul.f32 %v2674, %v2857
      %v2899 = vmul.f32 %v2675, %v2862
      %v2900 = vmul.f32 %v2676, %v2867
      %2901 = vst [vmem:[%s185] sm:$0xff] 0.0
      %v2902 = vadd.f32 %v2869, %v2870
      %v2903 = vadd.f32 %v2902, %v2871
      %v2904 = vadd.f32 %v2903, %v2872
      %v2905 = vadd.f32 %v2904, %v2873
      %v2906 = vadd.f32 %v2905, %v2874
      %v2907 = vadd.f32 %v2906, %v2875
      %v2908 = vadd.f32 %v2907, %v2876
      %v2909 = vadd.f32 %v2908, %v2877
      %v2910 = vadd.f32 %v2909, %v2878
      %v2911 = vadd.f32 %v2910, %v2879
      %v2912 = vadd.f32 %v2911, %v2880
      %v2913 = vadd.f32 %v2912, %v2881
      %v2914 = vadd.f32 %v2913, %v2882
      %v2915 = vadd.f32 %v2914, %v2883
      %v2916 = vadd.f32 %v2915, %v2884
      %v2917 = vadd.f32 %v2916, %v2885
      %v2918 = vadd.f32 %v2917, %v2886
      %v2919 = vadd.f32 %v2918, %v2887
      %v2920 = vadd.f32 %v2919, %v2888
      %v2921 = vadd.f32 %v2920, %v2889
      %v2922 = vadd.f32 %v2921, %v2890
      %v2923 = vadd.f32 %v2922, %v2891
      %v2924 = vadd.f32 %v2923, %v2892
      %v2925 = vadd.f32 %v2924, %v2893
      %v2926 = vadd.f32 %v2925, %v2894
      %v2927 = vadd.f32 %v2926, %v2895
      %v2928 = vadd.f32 %v2927, %v2896
      %v2929 = vadd.f32 %v2928, %v2897
      %v2930 = vadd.f32 %v2929, %v2898
      %v2931 = vadd.f32 %v2930, %v2899
      %v2932 = vadd.f32 %v2931, %v2900
      %v2933 = vrot.slane %v2932, 4
      %v2934 = vadd.f32 %v2932, %v2933
      %v2935 = vrot.slane %v2934, 2
      %v2936 = vadd.f32 %v2934, %v2935
      %v2937 = vrot.slane %v2936, 1
      %v2938 = vadd.f32 %v2936, %v2937
      %2939 = vst [vmem:[%s185] sm:$0x1] %v2938
      %v2940 = vmul.f32 %v2869, %v2645
      %v2941 = vmul.f32 %v2870, %v2646
      %v2942 = vmul.f32 %v2871, %v2647
      %v2943 = vmul.f32 %v2872, %v2648
      %v2944 = vmul.f32 %v2873, %v2649
      %v2945 = vmul.f32 %v2874, %v2650
      %v2946 = vmul.f32 %v2875, %v2651
      %v2947 = vmul.f32 %v2876, %v2652
      %v2948 = vmul.f32 %v2877, %v2653
      %v2949 = vmul.f32 %v2878, %v2654
      %v2950 = vmul.f32 %v2879, %v2655
      %v2951 = vmul.f32 %v2880, %v2656
      %v2952 = vmul.f32 %v2881, %v2657
      %v2953 = vmul.f32 %v2882, %v2658
      %v2954 = vmul.f32 %v2883, %v2659
      %v2955 = vmul.f32 %v2884, %v2660
      %v2956 = vmul.f32 %v2885, %v2661
      %v2957 = vmul.f32 %v2886, %v2662
      %v2958 = vmul.f32 %v2887, %v2663
      %v2959 = vmul.f32 %v2888, %v2664
      %v2960 = vmul.f32 %v2889, %v2665
      %v2961 = vmul.f32 %v2890, %v2666
      %v2962 = vmul.f32 %v2891, %v2667
      %v2963 = vmul.f32 %v2892, %v2668
      %v2964 = vmul.f32 %v2893, %v2669
      %v2965 = vmul.f32 %v2894, %v2670
      %v2966 = vmul.f32 %v2895, %v2671
      %v2967 = vmul.f32 %v2896, %v2672
      %v2968 = vmul.f32 %v2897, %v2673
      %v2969 = vmul.f32 %v2898, %v2674
      %v2970 = vmul.f32 %v2899, %v2675
      %v2971 = vmul.f32 %v2900, %v2676
      %v2972 = vadd.f32 %v2940, %v2941
      %v2973 = vadd.f32 %v2972, %v2942
      %v2974 = vadd.f32 %v2973, %v2943
      %v2975 = vadd.f32 %v2974, %v2944
      %v2976 = vadd.f32 %v2975, %v2945
      %v2977 = vadd.f32 %v2976, %v2946
      %v2978 = vadd.f32 %v2977, %v2947
      %v2979 = vadd.f32 %v2978, %v2948
      %v2980 = vadd.f32 %v2979, %v2949
      %v2981 = vadd.f32 %v2980, %v2950
      %v2982 = vadd.f32 %v2981, %v2951
      %v2983 = vadd.f32 %v2982, %v2952
      %v2984 = vadd.f32 %v2983, %v2953
      %v2985 = vadd.f32 %v2984, %v2954
      %v2986 = vadd.f32 %v2985, %v2955
      %v2987 = vadd.f32 %v2986, %v2956
      %v2988 = vadd.f32 %v2987, %v2957
      %v2989 = vadd.f32 %v2988, %v2958
      %v2990 = vadd.f32 %v2989, %v2959
      %v2991 = vadd.f32 %v2990, %v2960
      %v2992 = vadd.f32 %v2991, %v2961
      %v2993 = vadd.f32 %v2992, %v2962
      %v2994 = vadd.f32 %v2993, %v2963
      %v2995 = vadd.f32 %v2994, %v2964
      %v2996 = vadd.f32 %v2995, %v2965
      %v2997 = vadd.f32 %v2996, %v2966
      %v2998 = vadd.f32 %v2997, %v2967
      %v2999 = vadd.f32 %v2998, %v2968
      %v3000 = vadd.f32 %v2999, %v2969
      %v3001 = vadd.f32 %v3000, %v2970
      %v3002 = vadd.f32 %v3001, %v2971
      %v3003 = vrot.slane %v3002, 4
      %v3004 = vadd.f32 %v3002, %v3003
      %v3005 = vrot.slane %v3004, 2
      %v3006 = vadd.f32 %v3004, %v3005
      %v3007 = vrot.slane %v3006, 1
      %v3008 = vadd.f32 %v3006, %v3007
      %3009 = vst [vmem:[%s185 + $0x1] sm:$0x1] %v3008
      %s3010 = smul.u32 32, %s16
      %p3011 = scmp.lt.s32.totalorder %s3010, 95
      %s3012 = scalar_select %p3011, %s3010, 95
      %s3013 = smul.addr %s3012, 8
      %s3014 = scalar_lea.vmem %s3, %s3013
      %p3015 = scmp.lt.s32.totalorder %s16, 2
      %s3016 = scalar_select %p3015, %s16, 2
      %s3017 = smul.addr %s3016, 8
      %s3018 = scalar_lea.vmem %s4, %s3017
      // Predicated region
      $region51: #{in_conv_forward.4} parent=27 // pred_check
        %p3019 = pneg %p81
      $region52: #{in_conv_forward.4} parent=27 // pred_check_branch
        %3021 = sbr.rel (%p3019) target = $region54
      $region53: #{in_conv_forward.4} parent=27 // pred_region
        %s3022 = smul.u32 32, %s16
      $region54: #{in_conv_forward.4} parent=27 // pred_fallthru
        _
      // Predicated region
      $region55: #{in_conv_forward.4} parent=27 // pred_check
        %p3023 = pneg %p107
      $region56: #{in_conv_forward.4} parent=27 // pred_check_branch
        %3025 = sbr.rel (%p3023) target = $region58
      $region57: #{in_conv_forward.4} parent=27 // pred_region
        _
      $region58: #{in_conv_forward.4} parent=27 // pred_fallthru
        _
    $region28: #{in_conv_forward.4} parent=5 // pred_fallthru
      _
    %p3026 = scmp.le.s32.totalorder 2, %s11
    // Predicated region
    $region59: #{in_conv_forward.4} parent=5 // pred_check
      %p3027 = pneg %p3026
    $region60: #{in_conv_forward.4} parent=5 // pred_check_branch
      %3029 = sbr.rel (%p3027) target = $region62
    $region61: #{in_conv_forward.4} parent=5 // pred_region
      %s3030 = ssub.s32 %s11, 2
      // Predicated region
      $region63: #{in_conv_forward.4} parent=61 // pred_check
        %p3031 = pneg %p87
      $region64: #{in_conv_forward.4} parent=61 // pred_check_branch
        %3033 = sbr.rel (%p3031) target = $region66
      $region65: #{in_conv_forward.4} parent=61 // pred_region
        %s3034 = smul.u32 32, %s17
        %p3035 = scmp.lt.s32.totalorder %s3034, 95
        %s3036 = scalar_select %p3035, %s3034, 95
        %s3037 = smul.addr %s3036, 8
        %s3038 = scalar_lea.vmem %s3, %s3037
      $region66: #{in_conv_forward.4} parent=61 // pred_fallthru
        _
      // Predicated region
      $region67: #{in_conv_forward.4} parent=61 // pred_check
        %p3039 = pneg %p113
      $region68: #{in_conv_forward.4} parent=61 // pred_check_branch
        %3041 = sbr.rel (%p3039) target = $region70
      $region69: #{in_conv_forward.4} parent=61 // pred_region
        %p3042 = scmp.lt.s32.totalorder %s17, 2
        %s3043 = scalar_select %p3042, %s17, 2
        %s3044 = smul.addr %s3043, 8
        %s3045 = scalar_lea.vmem %s4, %s3044
      $region70: #{in_conv_forward.4} parent=61 // pred_fallthru
        _
    $region62: #{in_conv_forward.4} parent=5 // pred_fallthru
      _
  $region6: #{in_conv_forward.4} parent=0 // loop_footer
    %s15 = sadd.s32 1, %s11
  $region7: #{in_conv_forward.4} parent=0 // loop_footer_branch
    %10 = sbr.rel target = $region3
  $region8: #{in_conv_forward.4} parent=0 // loop_exit
    _
  %3046 = vsyncmov [#allocation3]
  %s3047 = vpop.sfrf %3046
  %p3048 = scmp.eq.s32.totalorder %s3047, 0
  %p3049 = pneg %p3048
  %3051 = shalt.err (%p3049)

</llo_original>
